<compile_context>
chip_gen: v5e
topology: v5e:2x2
jax: 0.10.0
libtpu: 0.0.40
codegen_flags: <defaults>
</compile_context>

<pallas_src>
import jax
import jax.numpy as jnp
from jax.experimental import pallas as pl
from jax.experimental.pallas import tpu as pltpu


def _round_up(x: int, m: int) -> int:
    return ((x + m - 1) // m) * m


def _embed_kernel(ids_ref, table_ref, out_ref):
    """Embed one tile of tokens via a one-hot MXU matmul gather.

    ids_ref   : VMEM (tile, 1) int32   -- token ids for this tile
    table_ref : VMEM (V, D)            -- full embedding table (resident)
    out_ref   : VMEM (tile, D)         -- embedded tokens for this tile
    """
    tile = out_ref.shape[0]
    vocab = table_ref.shape[0]

    ids = ids_ref[...]                                          # (tile, 1)
    # one_hot[r, v] = (ids[r] == v); out-of-range ids -> all-zero row.
    vocab_iota = jax.lax.broadcasted_iota(jnp.int32, (tile, vocab), 1)
    one_hot = (vocab_iota == ids).astype(table_ref.dtype)       # (tile, V)

    # Single MXU op replaces `tile` serialized row loads + masked stores.
    # HIGHEST precision keeps the f32 gather bit-exact (1.0 * x == x).
    out = jnp.dot(
        one_hot,
        table_ref[...],
        preferred_element_type=jnp.float32,
        precision=jax.lax.Precision.HIGHEST,
    )
    out_ref[...] = out.astype(out_ref.dtype)                    # one full-block store


def t5_text_embed(ids: jax.Array, embed_table: jax.Array, *, tile: int = 256) -> jax.Array:
    """Pallas equivalent of T5TextEmbedder.forward: embed_table[ids]."""
    B, S = ids.shape
    V, D = embed_table.shape
    N = B * S

    # Pad the flattened token count so every grid step does one full-size,
    # lane-dense block store (pad ids = 0 -> rows are discarded below).
    n_pad = _round_up(N, tile)
    flat_ids = ids.reshape(N).astype(jnp.int32)
    if n_pad != N:
        flat_ids = jnp.pad(flat_ids, (0, n_pad - N))
    ids_col = flat_ids.reshape(n_pad, 1)

    out_flat = pl.pallas_call(
        _embed_kernel,
        out_shape=jax.ShapeDtypeStruct((n_pad, D), embed_table.dtype),
        grid=(n_pad // tile,),
        in_specs=[
            # Per-step ids tile (tiny DMA); block last dim (1) == full array dim.
            pl.BlockSpec((tile, 1), lambda i: (i, 0)),
            # Whole table, constant block index -> stays resident in VMEM.
            pl.BlockSpec((V, D), lambda i: (0, 0)),
        ],
        out_specs=pl.BlockSpec((tile, D), lambda i: (i, 0)),
        compiler_params=pltpu.CompilerParams(
            # No carry across grid steps -> embarrassingly parallel; lets v7x
            # split the grid across both TensorCores (harmless on v5e/v6e).
            dimension_semantics=("parallel",),
        ),
    )(ids_col, embed_table)

    return out_flat[:N].reshape(B, S, D)


if __name__ == "__main__":
    # Small, deterministic synthetic setup (no checkpoint load).
    VOCAB = 512     # stands in for the T5 vocab
    HIDDEN = 128    # stands in for the T5 hidden size (output_dim)
    BATCH, SEQ = 2, 8

    key = jax.random.PRNGKey(0)
    k_table, k_ids = jax.random.split(key)

    # Deterministic "pretrained" embedding weight, shape (vocab, hidden).
    embed_table = jax.random.normal(k_table, (VOCAB, HIDDEN), dtype=jnp.float32)
    # Token ids, shape (batch, seq).
    ids = jax.random.randint(k_ids, (BATCH, SEQ), 0, VOCAB, dtype=jnp.int32)

    out = t5_text_embed(ids, embed_table)
    out = jax.block_until_ready(out)

    # Reference: plain JAX embedding lookup (== torch.nn.Embedding semantics).
    ref = jnp.take(embed_table, ids, axis=0)
    assert out.shape == (BATCH, SEQ, HIDDEN)
    assert out.dtype == embed_table.dtype
    assert jnp.allclose(out, ref, rtol=1e-5, atol=1e-5), "Pallas embedding mismatch vs reference"

    print("KERNEL_OK")
</pallas_src>

<mosaic_0001>
module attributes {stable_mosaic.version = 11 : i64} {
  func.func @_embed_kernel(%arg0: i32, %arg1: memref<256x1xi32, #tpu.memory_space<vmem>>, %arg2: memref<512x128xf32, #tpu.memory_space<vmem>>, %arg3: memref<256x128xf32, #tpu.memory_space<vmem>>) attributes {dimension_semantics = [#tpu.dimension_semantics<parallel>], iteration_bounds = array<i64: 1>, scalar_prefetch = 0 : i64, scratch_operands = 0 : i64, tpu.core_type = #tpu.core_type<tc>, window_params = [{transform_indices = @transform_0, window_bounds = array<i64: 256, 1>}, {pipeline_mode = #tpu.pipeline_mode<synchronous>, transform_indices = @transform_1, window_bounds = array<i64: 512, 128>}, {transform_indices = @transform_2, window_bounds = array<i64: 256, 128>}]} {
    %c0 = arith.constant 0 : index
    %c0_0 = arith.constant 0 : index
    %0 = vector.load %arg1[%c0, %c0_0] : memref<256x1xi32, #tpu.memory_space<vmem>>, vector<256x1xi32>
    %1 = tpu.iota {dimensions = array<i32: 1>} : vector<256x512xi32>
    %2 = vector.broadcast %0 : vector<256x1xi32> to vector<256x512xi32>
    %3 = arith.cmpi eq, %1, %2 : vector<256x512xi32>
    %4 = arith.extui %3 : vector<256x512xi1> to vector<256x512xi32>
    %5 = arith.sitofp %4 : vector<256x512xi32> to vector<256x512xf32>
    %c0_1 = arith.constant 0 : index
    %c0_2 = arith.constant 0 : index
    %6 = vector.load %arg2[%c0_1, %c0_2] : memref<512x128xf32, #tpu.memory_space<vmem>>, vector<512x128xf32>
    %cst = arith.constant dense<0.000000e+00> : vector<256x128xf32>
    %7 = tpu.matmul %5, %6, %cst {dimension_numbers = #tpu.dot_dimension_numbers<[1], [0], [0], [1], [0, 0, 1, 1], [], []>, precision = #tpu.contract_precision<fp32>} : vector<256x512xf32>, vector<512x128xf32>, vector<256x128xf32> -> vector<256x128xf32>
    %c0_3 = arith.constant 0 : index
    %c0_4 = arith.constant 0 : index
    %8 = vector.load %arg3[%c0_3, %c0_4] : memref<256x128xf32, #tpu.memory_space<vmem>>, vector<256x128xf32>
    tpu.vector_store %arg3[%c0_3, %c0_4], %7 {strides = array<i32>} : memref<256x128xf32, #tpu.memory_space<vmem>>, vector<256x128xf32>,
    return
  }
  func.func @transform_0(%arg0: i32) -> (i32, i32) {
    %c0_i32 = arith.constant 0 : i32
    %c0_i32_0 = arith.constant 0 : i32
    return %arg0, %c0_i32 : i32, i32
  }
  func.func @transform_1(%arg0: i32) -> (i32, i32) {
    %c0_i32 = arith.constant 0 : i32
    %c0_i32_0 = arith.constant 0 : i32
    %c0_i32_1 = arith.constant 0 : i32
    return %c0_i32, %c0_i32_0 : i32, i32
  }
  func.func @transform_2(%arg0: i32) -> (i32, i32) {
    %c0_i32 = arith.constant 0 : i32
    %c0_i32_0 = arith.constant 0 : i32
    return %arg0, %c0_i32 : i32, i32
  }
}

</mosaic_0001>

<llo_original>
// kernel: tpu_custom_call.1
$region0: #{tpu_custom_call.1}
  #allocation0 [shape = 'u32[]', space=smem, size = 0x4, offset = 0x4, fixed_abs, tag = 'smem constant byte address 0x4 - core index']
  #allocation1 [shape = 'u32[72,128]{1,0:T(1,128)}', space=vmem, size = 0x9000, scoped, tag = 'internal scratch']
  %s0 = inlined_call_operand.vmem [shape: s32[256,1], index: 0, kind: input, shape index: {}]
  %s1 = inlined_call_operand.hbm [shape: f32[512,128], index: 1, kind: input, shape index: {}]
  %s2 = inlined_call_operand.hbm [shape: f32[256,128], index: 2, kind: output, shape index: {}]
  %s3 = sld [smem:[#allocation0]]
  $region22: #{tpu_custom_call.1} parent=0
    _
  %s5 = ssub.s32 1, %s3
  %s6 = scalar_select 0, %s5, %s3
  $region1: #{tpu_custom_call.1} parent=0
    #allocation2 [shape = 'u8[262144]{0}', space=vmem, size = 0x40000, scoped, tag = 'input window, operand 1, single buffered']
    #allocation3 [shape = 's32[1]{0}', space=sflag, size = 0x4, scoped, tag = 'scoped memory for tpu_custom_call.1']
    #allocation4 [shape = 's32[1]{0}', space=sflag, size = 0x4, scoped, tag = 'scoped memory for tpu_custom_call.1']
    #allocation5 [shape = 'u8[131072]{0}', space=vmem, size = 0x20000, scoped, tag = 'output window, operand 0, single buffered']
    %7 = vsyncpa [#allocation3], 0
    %8 = vsyncpa [#allocation4], 0
    // Predicated region
    $region2: #{tpu_custom_call.1} parent=1 // pred_check
      _
    $region3: #{tpu_custom_call.1} parent=1 // pred_check_branch
      %10 = sbr.rel (0) target = $region5
    $region4: #{tpu_custom_call.1} parent=1 // pred_region
      _
    $region5: #{tpu_custom_call.1} parent=1 // pred_fallthru
      _
    // Predicated region
    $region6: #{tpu_custom_call.1} parent=1 // pred_check
      _
    $region7: #{tpu_custom_call.1} parent=1 // pred_check_branch
      %12 = sbr.rel (0) target = $region9
    $region8: #{tpu_custom_call.1} parent=1 // pred_region
      %14 = vsyncadd [#allocation3], 0
      %s15 = sshll.u32 %s1, 4
      %s16 = int_to_ptr.hbm [resolvable:$true] %s15
      %s17 = sshll.u32 [#allocation2], 4
      %s18 = int_to_ptr.vmem [resolvable:$true] %s17
      %23 = dma.hbm_to_vmem [thread:$0]  %s16, 8192, %s18, [#allocation3], 128, 128, 8
    $region9: #{tpu_custom_call.1} parent=1 // pred_fallthru
      _
    // Predicated region
    $region10: #{tpu_custom_call.1} parent=1 // pred_check
      _
    $region11: #{tpu_custom_call.1} parent=1 // pred_check_branch
      %25 = sbr.rel (0) target = $region13
    $region12: #{tpu_custom_call.1} parent=1 // pred_region
      %27 = dma.done [#allocation3], 8192
    $region13: #{tpu_custom_call.1} parent=1 // pred_fallthru
      _
    %v28 = vld [vmem:[%s0] sm:$0xff]
    %v29 = vld [vmem:[%s0 + $0x8] sm:$0xff]
    %v30 = vld [vmem:[%s0 + $0x10] sm:$0xff]
    %v31 = vld [vmem:[%s0 + $0x18] sm:$0xff]
    %v32 = vld [vmem:[%s0 + $0x20] sm:$0xff]
    %v33 = vld [vmem:[%s0 + $0x28] sm:$0xff]
    %v34 = vld [vmem:[%s0 + $0x30] sm:$0xff]
    %v35 = vld [vmem:[%s0 + $0x38] sm:$0xff]
    %v36 = vld [vmem:[%s0 + $0x40] sm:$0xff]
    %v37 = vld [vmem:[%s0 + $0x48] sm:$0xff]
    %v38 = vld [vmem:[%s0 + $0x50] sm:$0xff]
    %v39 = vld [vmem:[%s0 + $0x58] sm:$0xff]
    %v40 = vld [vmem:[%s0 + $0x60] sm:$0xff]
    %v41 = vld [vmem:[%s0 + $0x68] sm:$0xff]
    %v42 = vld [vmem:[%s0 + $0x70] sm:$0xff]
    %v43 = vld [vmem:[%s0 + $0x78] sm:$0xff]
    %v44 = vld [vmem:[%s0 + $0x80] sm:$0xff]
    %v45 = vld [vmem:[%s0 + $0x88] sm:$0xff]
    %v46 = vld [vmem:[%s0 + $0x90] sm:$0xff]
    %v47 = vld [vmem:[%s0 + $0x98] sm:$0xff]
    %v48 = vld [vmem:[%s0 + $0xa0] sm:$0xff]
    %v49 = vld [vmem:[%s0 + $0xa8] sm:$0xff]
    %v50 = vld [vmem:[%s0 + $0xb0] sm:$0xff]
    %v51 = vld [vmem:[%s0 + $0xb8] sm:$0xff]
    %v52 = vld [vmem:[%s0 + $0xc0] sm:$0xff]
    %v53 = vld [vmem:[%s0 + $0xc8] sm:$0xff]
    %v54 = vld [vmem:[%s0 + $0xd0] sm:$0xff]
    %v55 = vld [vmem:[%s0 + $0xd8] sm:$0xff]
    %v56 = vld [vmem:[%s0 + $0xe0] sm:$0xff]
    %v57 = vld [vmem:[%s0 + $0xe8] sm:$0xff]
    %v58 = vld [vmem:[%s0 + $0xf0] sm:$0xff]
    %v59 = vld [vmem:[%s0 + $0xf8] sm:$0xff]
    %v60 = vlaneseq
    %v61 = vand.u32 %v60, 127
    %v62 = vadd.s32 %v61, 128
    %v63 = vadd.s32 %v61, 256
    %v64 = vadd.s32 %v61, 384
    %65 = vset.pattern.permute.xlu0 0
    %66 = vperm.xlu0 %65, %v28
    %v67 = vpop.permute.xlu0 %66
    %68 = vset.pattern.permute.xlu0 0
    %69 = vperm.xlu0 %68, %v29
    %v70 = vpop.permute.xlu0 %69
    %71 = vset.pattern.permute.xlu0 0
    %72 = vperm.xlu0 %71, %v30
    %v73 = vpop.permute.xlu0 %72
    %74 = vset.pattern.permute.xlu0 0
    %75 = vperm.xlu0 %74, %v31
    %v76 = vpop.permute.xlu0 %75
    %77 = vset.pattern.permute.xlu0 0
    %78 = vperm.xlu0 %77, %v32
    %v79 = vpop.permute.xlu0 %78
    %80 = vset.pattern.permute.xlu0 0
    %81 = vperm.xlu0 %80, %v33
    %v82 = vpop.permute.xlu0 %81
    %83 = vset.pattern.permute.xlu0 0
    %84 = vperm.xlu0 %83, %v34
    %v85 = vpop.permute.xlu0 %84
    %86 = vset.pattern.permute.xlu0 0
    %87 = vperm.xlu0 %86, %v35
    %v88 = vpop.permute.xlu0 %87
    %89 = vset.pattern.permute.xlu0 0
    %90 = vperm.xlu0 %89, %v36
    %v91 = vpop.permute.xlu0 %90
    %92 = vset.pattern.permute.xlu0 0
    %93 = vperm.xlu0 %92, %v37
    %v94 = vpop.permute.xlu0 %93
    %95 = vset.pattern.permute.xlu0 0
    %96 = vperm.xlu0 %95, %v38
    %v97 = vpop.permute.xlu0 %96
    %98 = vset.pattern.permute.xlu0 0
    %99 = vperm.xlu0 %98, %v39
    %v100 = vpop.permute.xlu0 %99
    %101 = vset.pattern.permute.xlu0 0
    %102 = vperm.xlu0 %101, %v40
    %v103 = vpop.permute.xlu0 %102
    %104 = vset.pattern.permute.xlu0 0
    %105 = vperm.xlu0 %104, %v41
    %v106 = vpop.permute.xlu0 %105
    %107 = vset.pattern.permute.xlu0 0
    %108 = vperm.xlu0 %107, %v42
    %v109 = vpop.permute.xlu0 %108
    %110 = vset.pattern.permute.xlu0 0
    %111 = vperm.xlu0 %110, %v43
    %v112 = vpop.permute.xlu0 %111
    %113 = vset.pattern.permute.xlu0 0
    %114 = vperm.xlu0 %113, %v44
    %v115 = vpop.permute.xlu0 %114
    %116 = vset.pattern.permute.xlu0 0
    %117 = vperm.xlu0 %116, %v45
    %v118 = vpop.permute.xlu0 %117
    %119 = vset.pattern.permute.xlu0 0
    %120 = vperm.xlu0 %119, %v46
    %v121 = vpop.permute.xlu0 %120
    %122 = vset.pattern.permute.xlu0 0
    %123 = vperm.xlu0 %122, %v47
    %v124 = vpop.permute.xlu0 %123
    %125 = vset.pattern.permute.xlu0 0
    %126 = vperm.xlu0 %125, %v48
    %v127 = vpop.permute.xlu0 %126
    %128 = vset.pattern.permute.xlu0 0
    %129 = vperm.xlu0 %128, %v49
    %v130 = vpop.permute.xlu0 %129
    %131 = vset.pattern.permute.xlu0 0
    %132 = vperm.xlu0 %131, %v50
    %v133 = vpop.permute.xlu0 %132
    %134 = vset.pattern.permute.xlu0 0
    %135 = vperm.xlu0 %134, %v51
    %v136 = vpop.permute.xlu0 %135
    %137 = vset.pattern.permute.xlu0 0
    %138 = vperm.xlu0 %137, %v52
    %v139 = vpop.permute.xlu0 %138
    %140 = vset.pattern.permute.xlu0 0
    %141 = vperm.xlu0 %140, %v53
    %v142 = vpop.permute.xlu0 %141
    %143 = vset.pattern.permute.xlu0 0
    %144 = vperm.xlu0 %143, %v54
    %v145 = vpop.permute.xlu0 %144
    %146 = vset.pattern.permute.xlu0 0
    %147 = vperm.xlu0 %146, %v55
    %v148 = vpop.permute.xlu0 %147
    %149 = vset.pattern.permute.xlu0 0
    %150 = vperm.xlu0 %149, %v56
    %v151 = vpop.permute.xlu0 %150
    %152 = vset.pattern.permute.xlu0 0
    %153 = vperm.xlu0 %152, %v57
    %v154 = vpop.permute.xlu0 %153
    %155 = vset.pattern.permute.xlu0 0
    %156 = vperm.xlu0 %155, %v58
    %v157 = vpop.permute.xlu0 %156
    %158 = vset.pattern.permute.xlu0 0
    %159 = vperm.xlu0 %158, %v59
    %v160 = vpop.permute.xlu0 %159
    %vm161 = vcmp.eq.s32.totalorder %v61, %v67
    %vm162 = vcmp.eq.s32.totalorder %v62, %v67
    %vm163 = vcmp.eq.s32.totalorder %v63, %v67
    %vm164 = vcmp.eq.s32.totalorder %v64, %v67
    %vm165 = vcmp.eq.s32.totalorder %v61, %v70
    %vm166 = vcmp.eq.s32.totalorder %v62, %v70
    %vm167 = vcmp.eq.s32.totalorder %v63, %v70
    %vm168 = vcmp.eq.s32.totalorder %v64, %v70
    %vm169 = vcmp.eq.s32.totalorder %v61, %v73
    %vm170 = vcmp.eq.s32.totalorder %v62, %v73
    %vm171 = vcmp.eq.s32.totalorder %v63, %v73
    %vm172 = vcmp.eq.s32.totalorder %v64, %v73
    %vm173 = vcmp.eq.s32.totalorder %v61, %v76
    %vm174 = vcmp.eq.s32.totalorder %v62, %v76
    %vm175 = vcmp.eq.s32.totalorder %v63, %v76
    %vm176 = vcmp.eq.s32.totalorder %v64, %v76
    %vm177 = vcmp.eq.s32.totalorder %v61, %v79
    %vm178 = vcmp.eq.s32.totalorder %v62, %v79
    %vm179 = vcmp.eq.s32.totalorder %v63, %v79
    %vm180 = vcmp.eq.s32.totalorder %v64, %v79
    %vm181 = vcmp.eq.s32.totalorder %v61, %v82
    %vm182 = vcmp.eq.s32.totalorder %v62, %v82
    %vm183 = vcmp.eq.s32.totalorder %v63, %v82
    %vm184 = vcmp.eq.s32.totalorder %v64, %v82
    %vm185 = vcmp.eq.s32.totalorder %v61, %v85
    %vm186 = vcmp.eq.s32.totalorder %v62, %v85
    %vm187 = vcmp.eq.s32.totalorder %v63, %v85
    %vm188 = vcmp.eq.s32.totalorder %v64, %v85
    %vm189 = vcmp.eq.s32.totalorder %v61, %v88
    %vm190 = vcmp.eq.s32.totalorder %v62, %v88
    %vm191 = vcmp.eq.s32.totalorder %v63, %v88
    %vm192 = vcmp.eq.s32.totalorder %v64, %v88
    %vm193 = vcmp.eq.s32.totalorder %v61, %v91
    %vm194 = vcmp.eq.s32.totalorder %v62, %v91
    %vm195 = vcmp.eq.s32.totalorder %v63, %v91
    %vm196 = vcmp.eq.s32.totalorder %v64, %v91
    %vm197 = vcmp.eq.s32.totalorder %v61, %v94
    %vm198 = vcmp.eq.s32.totalorder %v62, %v94
    %vm199 = vcmp.eq.s32.totalorder %v63, %v94
    %vm200 = vcmp.eq.s32.totalorder %v64, %v94
    %vm201 = vcmp.eq.s32.totalorder %v61, %v97
    %vm202 = vcmp.eq.s32.totalorder %v62, %v97
    %vm203 = vcmp.eq.s32.totalorder %v63, %v97
    %vm204 = vcmp.eq.s32.totalorder %v64, %v97
    %vm205 = vcmp.eq.s32.totalorder %v61, %v100
    %vm206 = vcmp.eq.s32.totalorder %v62, %v100
    %vm207 = vcmp.eq.s32.totalorder %v63, %v100
    %vm208 = vcmp.eq.s32.totalorder %v64, %v100
    %vm209 = vcmp.eq.s32.totalorder %v61, %v103
    %vm210 = vcmp.eq.s32.totalorder %v62, %v103
    %vm211 = vcmp.eq.s32.totalorder %v63, %v103
    %vm212 = vcmp.eq.s32.totalorder %v64, %v103
    %vm213 = vcmp.eq.s32.totalorder %v61, %v106
    %vm214 = vcmp.eq.s32.totalorder %v62, %v106
    %vm215 = vcmp.eq.s32.totalorder %v63, %v106
    %vm216 = vcmp.eq.s32.totalorder %v64, %v106
    %vm217 = vcmp.eq.s32.totalorder %v61, %v109
    %vm218 = vcmp.eq.s32.totalorder %v62, %v109
    %vm219 = vcmp.eq.s32.totalorder %v63, %v109
    %vm220 = vcmp.eq.s32.totalorder %v64, %v109
    %vm221 = vcmp.eq.s32.totalorder %v61, %v112
    %vm222 = vcmp.eq.s32.totalorder %v62, %v112
    %vm223 = vcmp.eq.s32.totalorder %v63, %v112
    %vm224 = vcmp.eq.s32.totalorder %v64, %v112
    %vm225 = vcmp.eq.s32.totalorder %v61, %v115
    %vm226 = vcmp.eq.s32.totalorder %v62, %v115
    %vm227 = vcmp.eq.s32.totalorder %v63, %v115
    %vm228 = vcmp.eq.s32.totalorder %v64, %v115
    %vm229 = vcmp.eq.s32.totalorder %v61, %v118
    %vm230 = vcmp.eq.s32.totalorder %v62, %v118
    %vm231 = vcmp.eq.s32.totalorder %v63, %v118
    %vm232 = vcmp.eq.s32.totalorder %v64, %v118
    %vm233 = vcmp.eq.s32.totalorder %v61, %v121
    %vm234 = vcmp.eq.s32.totalorder %v62, %v121
    %vm235 = vcmp.eq.s32.totalorder %v63, %v121
    %vm236 = vcmp.eq.s32.totalorder %v64, %v121
    %vm237 = vcmp.eq.s32.totalorder %v61, %v124
    %vm238 = vcmp.eq.s32.totalorder %v62, %v124
    %vm239 = vcmp.eq.s32.totalorder %v63, %v124
    %vm240 = vcmp.eq.s32.totalorder %v64, %v124
    %vm241 = vcmp.eq.s32.totalorder %v61, %v127
    %vm242 = vcmp.eq.s32.totalorder %v62, %v127
    %vm243 = vcmp.eq.s32.totalorder %v63, %v127
    %vm244 = vcmp.eq.s32.totalorder %v64, %v127
    %vm245 = vcmp.eq.s32.totalorder %v61, %v130
    %vm246 = vcmp.eq.s32.totalorder %v62, %v130
    %vm247 = vcmp.eq.s32.totalorder %v63, %v130
    %vm248 = vcmp.eq.s32.totalorder %v64, %v130
    %vm249 = vcmp.eq.s32.totalorder %v61, %v133
    %vm250 = vcmp.eq.s32.totalorder %v62, %v133
    %vm251 = vcmp.eq.s32.totalorder %v63, %v133
    %vm252 = vcmp.eq.s32.totalorder %v64, %v133
    %vm253 = vcmp.eq.s32.totalorder %v61, %v136
    %vm254 = vcmp.eq.s32.totalorder %v62, %v136
    %vm255 = vcmp.eq.s32.totalorder %v63, %v136
    %vm256 = vcmp.eq.s32.totalorder %v64, %v136
    %vm257 = vcmp.eq.s32.totalorder %v61, %v139
    %vm258 = vcmp.eq.s32.totalorder %v62, %v139
    %vm259 = vcmp.eq.s32.totalorder %v63, %v139
    %vm260 = vcmp.eq.s32.totalorder %v64, %v139
    %vm261 = vcmp.eq.s32.totalorder %v61, %v142
    %vm262 = vcmp.eq.s32.totalorder %v62, %v142
    %vm263 = vcmp.eq.s32.totalorder %v63, %v142
    %vm264 = vcmp.eq.s32.totalorder %v64, %v142
    %vm265 = vcmp.eq.s32.totalorder %v61, %v145
    %vm266 = vcmp.eq.s32.totalorder %v62, %v145
    %vm267 = vcmp.eq.s32.totalorder %v63, %v145
    %vm268 = vcmp.eq.s32.totalorder %v64, %v145
    %vm269 = vcmp.eq.s32.totalorder %v61, %v148
    %vm270 = vcmp.eq.s32.totalorder %v62, %v148
    %vm271 = vcmp.eq.s32.totalorder %v63, %v148
    %vm272 = vcmp.eq.s32.totalorder %v64, %v148
    %vm273 = vcmp.eq.s32.totalorder %v61, %v151
    %vm274 = vcmp.eq.s32.totalorder %v62, %v151
    %vm275 = vcmp.eq.s32.totalorder %v63, %v151
    %vm276 = vcmp.eq.s32.totalorder %v64, %v151
    %vm277 = vcmp.eq.s32.totalorder %v61, %v154
    %vm278 = vcmp.eq.s32.totalorder %v62, %v154
    %vm279 = vcmp.eq.s32.totalorder %v63, %v154
    %vm280 = vcmp.eq.s32.totalorder %v64, %v154
    %vm281 = vcmp.eq.s32.totalorder %v61, %v157
    %vm282 = vcmp.eq.s32.totalorder %v62, %v157
    %vm283 = vcmp.eq.s32.totalorder %v63, %v157
    %vm284 = vcmp.eq.s32.totalorder %v64, %v157
    %vm285 = vcmp.eq.s32.totalorder %v61, %v160
    %vm286 = vcmp.eq.s32.totalorder %v62, %v160
    %vm287 = vcmp.eq.s32.totalorder %v63, %v160
    %vm288 = vcmp.eq.s32.totalorder %v64, %v160
    %v289 = vsel %vm161, 1, 0
    %v290 = vsel %vm162, 1, 0
    %v291 = vsel %vm163, 1, 0
    %v292 = vsel %vm164, 1, 0
    %v293 = vsel %vm165, 1, 0
    %v294 = vsel %vm166, 1, 0
    %v295 = vsel %vm167, 1, 0
    %v296 = vsel %vm168, 1, 0
    %v297 = vsel %vm169, 1, 0
    %v298 = vsel %vm170, 1, 0
    %v299 = vsel %vm171, 1, 0
    %v300 = vsel %vm172, 1, 0
    %v301 = vsel %vm173, 1, 0
    %v302 = vsel %vm174, 1, 0
    %v303 = vsel %vm175, 1, 0
    %v304 = vsel %vm176, 1, 0
    %v305 = vsel %vm177, 1, 0
    %v306 = vsel %vm178, 1, 0
    %v307 = vsel %vm179, 1, 0
    %v308 = vsel %vm180, 1, 0
    %v309 = vsel %vm181, 1, 0
    %v310 = vsel %vm182, 1, 0
    %v311 = vsel %vm183, 1, 0
    %v312 = vsel %vm184, 1, 0
    %v313 = vsel %vm185, 1, 0
    %v314 = vsel %vm186, 1, 0
    %v315 = vsel %vm187, 1, 0
    %v316 = vsel %vm188, 1, 0
    %v317 = vsel %vm189, 1, 0
    %v318 = vsel %vm190, 1, 0
    %v319 = vsel %vm191, 1, 0
    %v320 = vsel %vm192, 1, 0
    %v321 = vsel %vm193, 1, 0
    %v322 = vsel %vm194, 1, 0
    %v323 = vsel %vm195, 1, 0
    %v324 = vsel %vm196, 1, 0
    %v325 = vsel %vm197, 1, 0
    %v326 = vsel %vm198, 1, 0
    %v327 = vsel %vm199, 1, 0
    %v328 = vsel %vm200, 1, 0
    %v329 = vsel %vm201, 1, 0
    %v330 = vsel %vm202, 1, 0
    %v331 = vsel %vm203, 1, 0
    %v332 = vsel %vm204, 1, 0
    %v333 = vsel %vm205, 1, 0
    %v334 = vsel %vm206, 1, 0
    %v335 = vsel %vm207, 1, 0
    %v336 = vsel %vm208, 1, 0
    %v337 = vsel %vm209, 1, 0
    %v338 = vsel %vm210, 1, 0
    %v339 = vsel %vm211, 1, 0
    %v340 = vsel %vm212, 1, 0
    %v341 = vsel %vm213, 1, 0
    %v342 = vsel %vm214, 1, 0
    %v343 = vsel %vm215, 1, 0
    %v344 = vsel %vm216, 1, 0
    %v345 = vsel %vm217, 1, 0
    %v346 = vsel %vm218, 1, 0
    %v347 = vsel %vm219, 1, 0
    %v348 = vsel %vm220, 1, 0
    %v349 = vsel %vm221, 1, 0
    %v350 = vsel %vm222, 1, 0
    %v351 = vsel %vm223, 1, 0
    %v352 = vsel %vm224, 1, 0
    %v353 = vsel %vm225, 1, 0
    %v354 = vsel %vm226, 1, 0
    %v355 = vsel %vm227, 1, 0
    %v356 = vsel %vm228, 1, 0
    %v357 = vsel %vm229, 1, 0
    %v358 = vsel %vm230, 1, 0
    %v359 = vsel %vm231, 1, 0
    %v360 = vsel %vm232, 1, 0
    %v361 = vsel %vm233, 1, 0
    %v362 = vsel %vm234, 1, 0
    %v363 = vsel %vm235, 1, 0
    %v364 = vsel %vm236, 1, 0
    %v365 = vsel %vm237, 1, 0
    %v366 = vsel %vm238, 1, 0
    %v367 = vsel %vm239, 1, 0
    %v368 = vsel %vm240, 1, 0
    %v369 = vsel %vm241, 1, 0
    %v370 = vsel %vm242, 1, 0
    %v371 = vsel %vm243, 1, 0
    %v372 = vsel %vm244, 1, 0
    %v373 = vsel %vm245, 1, 0
    %v374 = vsel %vm246, 1, 0
    %v375 = vsel %vm247, 1, 0
    %v376 = vsel %vm248, 1, 0
    %v377 = vsel %vm249, 1, 0
    %v378 = vsel %vm250, 1, 0
    %v379 = vsel %vm251, 1, 0
    %v380 = vsel %vm252, 1, 0
    %v381 = vsel %vm253, 1, 0
    %v382 = vsel %vm254, 1, 0
    %v383 = vsel %vm255, 1, 0
    %v384 = vsel %vm256, 1, 0
    %v385 = vsel %vm257, 1, 0
    %v386 = vsel %vm258, 1, 0
    %v387 = vsel %vm259, 1, 0
    %v388 = vsel %vm260, 1, 0
    %v389 = vsel %vm261, 1, 0
    %v390 = vsel %vm262, 1, 0
    %v391 = vsel %vm263, 1, 0
    %v392 = vsel %vm264, 1, 0
    %v393 = vsel %vm265, 1, 0
    %v394 = vsel %vm266, 1, 0
    %v395 = vsel %vm267, 1, 0
    %v396 = vsel %vm268, 1, 0
    %v397 = vsel %vm269, 1, 0
    %v398 = vsel %vm270, 1, 0
    %v399 = vsel %vm271, 1, 0
    %v400 = vsel %vm272, 1, 0
    %v401 = vsel %vm273, 1, 0
    %v402 = vsel %vm274, 1, 0
    %v403 = vsel %vm275, 1, 0
    %v404 = vsel %vm276, 1, 0
    %v405 = vsel %vm277, 1, 0
    %v406 = vsel %vm278, 1, 0
    %v407 = vsel %vm279, 1, 0
    %v408 = vsel %vm280, 1, 0
    %v409 = vsel %vm281, 1, 0
    %v410 = vsel %vm282, 1, 0
    %v411 = vsel %vm283, 1, 0
    %v412 = vsel %vm284, 1, 0
    %v413 = vsel %vm285, 1, 0
    %v414 = vsel %vm286, 1, 0
    %v415 = vsel %vm287, 1, 0
    %v416 = vsel %vm288, 1, 0
    %v417 = vcvt.s32.f32 %v289
    %v418 = vcvt.s32.f32 %v290
    %v419 = vcvt.s32.f32 %v291
    %v420 = vcvt.s32.f32 %v292
    %v421 = vcvt.s32.f32 %v293
    %v422 = vcvt.s32.f32 %v294
    %v423 = vcvt.s32.f32 %v295
    %v424 = vcvt.s32.f32 %v296
    %v425 = vcvt.s32.f32 %v297
    %v426 = vcvt.s32.f32 %v298
    %v427 = vcvt.s32.f32 %v299
    %v428 = vcvt.s32.f32 %v300
    %v429 = vcvt.s32.f32 %v301
    %v430 = vcvt.s32.f32 %v302
    %v431 = vcvt.s32.f32 %v303
    %v432 = vcvt.s32.f32 %v304
    %v433 = vcvt.s32.f32 %v305
    %v434 = vcvt.s32.f32 %v306
    %v435 = vcvt.s32.f32 %v307
    %v436 = vcvt.s32.f32 %v308
    %v437 = vcvt.s32.f32 %v309
    %v438 = vcvt.s32.f32 %v310
    %v439 = vcvt.s32.f32 %v311
    %v440 = vcvt.s32.f32 %v312
    %v441 = vcvt.s32.f32 %v313
    %v442 = vcvt.s32.f32 %v314
    %v443 = vcvt.s32.f32 %v315
    %v444 = vcvt.s32.f32 %v316
    %v445 = vcvt.s32.f32 %v317
    %v446 = vcvt.s32.f32 %v318
    %v447 = vcvt.s32.f32 %v319
    %v448 = vcvt.s32.f32 %v320
    %v449 = vcvt.s32.f32 %v321
    %v450 = vcvt.s32.f32 %v322
    %v451 = vcvt.s32.f32 %v323
    %v452 = vcvt.s32.f32 %v324
    %v453 = vcvt.s32.f32 %v325
    %v454 = vcvt.s32.f32 %v326
    %v455 = vcvt.s32.f32 %v327
    %v456 = vcvt.s32.f32 %v328
    %v457 = vcvt.s32.f32 %v329
    %v458 = vcvt.s32.f32 %v330
    %v459 = vcvt.s32.f32 %v331
    %v460 = vcvt.s32.f32 %v332
    %v461 = vcvt.s32.f32 %v333
    %v462 = vcvt.s32.f32 %v334
    %v463 = vcvt.s32.f32 %v335
    %v464 = vcvt.s32.f32 %v336
    %v465 = vcvt.s32.f32 %v337
    %v466 = vcvt.s32.f32 %v338
    %v467 = vcvt.s32.f32 %v339
    %v468 = vcvt.s32.f32 %v340
    %v469 = vcvt.s32.f32 %v341
    %v470 = vcvt.s32.f32 %v342
    %v471 = vcvt.s32.f32 %v343
    %v472 = vcvt.s32.f32 %v344
    %v473 = vcvt.s32.f32 %v345
    %v474 = vcvt.s32.f32 %v346
    %v475 = vcvt.s32.f32 %v347
    %v476 = vcvt.s32.f32 %v348
    %v477 = vcvt.s32.f32 %v349
    %v478 = vcvt.s32.f32 %v350
    %v479 = vcvt.s32.f32 %v351
    %v480 = vcvt.s32.f32 %v352
    %v481 = vcvt.s32.f32 %v353
    %v482 = vcvt.s32.f32 %v354
    %v483 = vcvt.s32.f32 %v355
    %v484 = vcvt.s32.f32 %v356
    %v485 = vcvt.s32.f32 %v357
    %v486 = vcvt.s32.f32 %v358
    %v487 = vcvt.s32.f32 %v359
    %v488 = vcvt.s32.f32 %v360
    %v489 = vcvt.s32.f32 %v361
    %v490 = vcvt.s32.f32 %v362
    %v491 = vcvt.s32.f32 %v363
    %v492 = vcvt.s32.f32 %v364
    %v493 = vcvt.s32.f32 %v365
    %v494 = vcvt.s32.f32 %v366
    %v495 = vcvt.s32.f32 %v367
    %v496 = vcvt.s32.f32 %v368
    %v497 = vcvt.s32.f32 %v369
    %v498 = vcvt.s32.f32 %v370
    %v499 = vcvt.s32.f32 %v371
    %v500 = vcvt.s32.f32 %v372
    %v501 = vcvt.s32.f32 %v373
    %v502 = vcvt.s32.f32 %v374
    %v503 = vcvt.s32.f32 %v375
    %v504 = vcvt.s32.f32 %v376
    %v505 = vcvt.s32.f32 %v377
    %v506 = vcvt.s32.f32 %v378
    %v507 = vcvt.s32.f32 %v379
    %v508 = vcvt.s32.f32 %v380
    %v509 = vcvt.s32.f32 %v381
    %v510 = vcvt.s32.f32 %v382
    %v511 = vcvt.s32.f32 %v383
    %v512 = vcvt.s32.f32 %v384
    %v513 = vcvt.s32.f32 %v385
    %v514 = vcvt.s32.f32 %v386
    %v515 = vcvt.s32.f32 %v387
    %v516 = vcvt.s32.f32 %v388
    %v517 = vcvt.s32.f32 %v389
    %v518 = vcvt.s32.f32 %v390
    %v519 = vcvt.s32.f32 %v391
    %v520 = vcvt.s32.f32 %v392
    %v521 = vcvt.s32.f32 %v393
    %v522 = vcvt.s32.f32 %v394
    %v523 = vcvt.s32.f32 %v395
    %v524 = vcvt.s32.f32 %v396
    %v525 = vcvt.s32.f32 %v397
    %v526 = vcvt.s32.f32 %v398
    %v527 = vcvt.s32.f32 %v399
    %v528 = vcvt.s32.f32 %v400
    %v529 = vcvt.s32.f32 %v401
    %v530 = vcvt.s32.f32 %v402
    %v531 = vcvt.s32.f32 %v403
    %v532 = vcvt.s32.f32 %v404
    %v533 = vcvt.s32.f32 %v405
    %v534 = vcvt.s32.f32 %v406
    %v535 = vcvt.s32.f32 %v407
    %v536 = vcvt.s32.f32 %v408
    %v537 = vcvt.s32.f32 %v409
    %v538 = vcvt.s32.f32 %v410
    %v539 = vcvt.s32.f32 %v411
    %v540 = vcvt.s32.f32 %v412
    %v541 = vcvt.s32.f32 %v413
    %v542 = vcvt.s32.f32 %v414
    %v543 = vcvt.s32.f32 %v415
    %v544 = vcvt.s32.f32 %v416
    %v545 = vld [vmem:[#allocation2] sm:$0xff]
    %v546 = vld [vmem:[#allocation2 + $0x8] sm:$0xff]
    %v547 = vld [vmem:[#allocation2 + $0x10] sm:$0xff]
    %v548 = vld [vmem:[#allocation2 + $0x18] sm:$0xff]
    %v549 = vld [vmem:[#allocation2 + $0x20] sm:$0xff]
    %v550 = vld [vmem:[#allocation2 + $0x28] sm:$0xff]
    %v551 = vld [vmem:[#allocation2 + $0x30] sm:$0xff]
    %v552 = vld [vmem:[#allocation2 + $0x38] sm:$0xff]
    %v553 = vld [vmem:[#allocation2 + $0x40] sm:$0xff]
    %v554 = vld [vmem:[#allocation2 + $0x48] sm:$0xff]
    %v555 = vld [vmem:[#allocation2 + $0x50] sm:$0xff]
    %v556 = vld [vmem:[#allocation2 + $0x58] sm:$0xff]
    %v557 = vld [vmem:[#allocation2 + $0x60] sm:$0xff]
    %v558 = vld [vmem:[#allocation2 + $0x68] sm:$0xff]
    %v559 = vld [vmem:[#allocation2 + $0x70] sm:$0xff]
    %v560 = vld [vmem:[#allocation2 + $0x78] sm:$0xff]
    %v561 = vld [vmem:[#allocation2 + $0x80] sm:$0xff]
    %v562 = vld [vmem:[#allocation2 + $0x88] sm:$0xff]
    %v563 = vld [vmem:[#allocation2 + $0x90] sm:$0xff]
    %v564 = vld [vmem:[#allocation2 + $0x98] sm:$0xff]
    %v565 = vld [vmem:[#allocation2 + $0xa0] sm:$0xff]
    %v566 = vld [vmem:[#allocation2 + $0xa8] sm:$0xff]
    %v567 = vld [vmem:[#allocation2 + $0xb0] sm:$0xff]
    %v568 = vld [vmem:[#allocation2 + $0xb8] sm:$0xff]
    %v569 = vld [vmem:[#allocation2 + $0xc0] sm:$0xff]
    %v570 = vld [vmem:[#allocation2 + $0xc8] sm:$0xff]
    %v571 = vld [vmem:[#allocation2 + $0xd0] sm:$0xff]
    %v572 = vld [vmem:[#allocation2 + $0xd8] sm:$0xff]
    %v573 = vld [vmem:[#allocation2 + $0xe0] sm:$0xff]
    %v574 = vld [vmem:[#allocation2 + $0xe8] sm:$0xff]
    %v575 = vld [vmem:[#allocation2 + $0xf0] sm:$0xff]
    %v576 = vld [vmem:[#allocation2 + $0xf8] sm:$0xff]
    %v577 = vld [vmem:[#allocation2 + $0x100] sm:$0xff]
    %v578 = vld [vmem:[#allocation2 + $0x108] sm:$0xff]
    %v579 = vld [vmem:[#allocation2 + $0x110] sm:$0xff]
    %v580 = vld [vmem:[#allocation2 + $0x118] sm:$0xff]
    %v581 = vld [vmem:[#allocation2 + $0x120] sm:$0xff]
    %v582 = vld [vmem:[#allocation2 + $0x128] sm:$0xff]
    %v583 = vld [vmem:[#allocation2 + $0x130] sm:$0xff]
    %v584 = vld [vmem:[#allocation2 + $0x138] sm:$0xff]
    %v585 = vld [vmem:[#allocation2 + $0x140] sm:$0xff]
    %v586 = vld [vmem:[#allocation2 + $0x148] sm:$0xff]
    %v587 = vld [vmem:[#allocation2 + $0x150] sm:$0xff]
    %v588 = vld [vmem:[#allocation2 + $0x158] sm:$0xff]
    %v589 = vld [vmem:[#allocation2 + $0x160] sm:$0xff]
    %v590 = vld [vmem:[#allocation2 + $0x168] sm:$0xff]
    %v591 = vld [vmem:[#allocation2 + $0x170] sm:$0xff]
    %v592 = vld [vmem:[#allocation2 + $0x178] sm:$0xff]
    %v593 = vld [vmem:[#allocation2 + $0x180] sm:$0xff]
    %v594 = vld [vmem:[#allocation2 + $0x188] sm:$0xff]
    %v595 = vld [vmem:[#allocation2 + $0x190] sm:$0xff]
    %v596 = vld [vmem:[#allocation2 + $0x198] sm:$0xff]
    %v597 = vld [vmem:[#allocation2 + $0x1a0] sm:$0xff]
    %v598 = vld [vmem:[#allocation2 + $0x1a8] sm:$0xff]
    %v599 = vld [vmem:[#allocation2 + $0x1b0] sm:$0xff]
    %v600 = vld [vmem:[#allocation2 + $0x1b8] sm:$0xff]
    %v601 = vld [vmem:[#allocation2 + $0x1c0] sm:$0xff]
    %v602 = vld [vmem:[#allocation2 + $0x1c8] sm:$0xff]
    %v603 = vld [vmem:[#allocation2 + $0x1d0] sm:$0xff]
    %v604 = vld [vmem:[#allocation2 + $0x1d8] sm:$0xff]
    %v605 = vld [vmem:[#allocation2 + $0x1e0] sm:$0xff]
    %v606 = vld [vmem:[#allocation2 + $0x1e8] sm:$0xff]
    %v607 = vld [vmem:[#allocation2 + $0x1f0] sm:$0xff]
    %v608 = vld [vmem:[#allocation2 + $0x1f8] sm:$0xff]
    %v609 = vand.u32 %v560, 4294901760
    %610 = vmatpush.msra.mxu0 %v609
    %v611 = vand.u32 %v559, 4294901760
    %612 = vmatpush.msra.mxu0 %v611
    %v613 = vand.u32 %v558, 4294901760
    %614 = vmatpush.msra.mxu0 %v613
    %v615 = vand.u32 %v557, 4294901760
    %616 = vmatpush.msra.mxu0 %v615
    %v617 = vand.u32 %v556, 4294901760
    %618 = vmatpush.msra.mxu0 %v617
    %v619 = vand.u32 %v555, 4294901760
    %620 = vmatpush.msra.mxu0 %v619
    %v621 = vand.u32 %v554, 4294901760
    %622 = vmatpush.msra.mxu0 %v621
    %v623 = vand.u32 %v553, 4294901760
    %624 = vmatpush.msra.mxu0 %v623
    %v625 = vand.u32 %v552, 4294901760
    %626 = vmatpush.msra.mxu0 %v625
    %v627 = vand.u32 %v551, 4294901760
    %628 = vmatpush.msra.mxu0 %v627
    %v629 = vand.u32 %v550, 4294901760
    %630 = vmatpush.msra.mxu0 %v629
    %v631 = vand.u32 %v549, 4294901760
    %632 = vmatpush.msra.mxu0 %v631
    %v633 = vand.u32 %v548, 4294901760
    %634 = vmatpush.msra.mxu0 %v633
    %v635 = vand.u32 %v547, 4294901760
    %636 = vmatpush.msra.mxu0 %v635
    %v637 = vand.u32 %v546, 4294901760
    %638 = vmatpush.msra.mxu0 %v637
    %v639 = vand.u32 %v545, 4294901760
    %640 = vmatpush.msra.mxu0 %v639
    %v641 = vand.u32 %v417, 4294901760
    %v642 = vsub.f32 %v417, %v641
    %v643 = vand.u32 %v642, 4294901760
    %v644 = vsub.f32 %v642, %v643
    %v645 = vand.u32 %v644, 4294901760
    %646 = vmatmul.f32.gmra.mxu0 %v645
    %v647 = vpop.f32.mrf.mxu0
    %v648 = vadd.f32 0.0, %v647
    %v649 = vand.u32 %v421, 4294901760
    %v650 = vsub.f32 %v421, %v649
    %v651 = vand.u32 %v650, 4294901760
    %v652 = vsub.f32 %v650, %v651
    %v653 = vand.u32 %v652, 4294901760
    %654 = vmatmul.f32.gmra.mxu0 %v653
    %v655 = vpop.f32.mrf.mxu0
    %v656 = vadd.f32 0.0, %v655
    %v657 = vand.u32 %v425, 4294901760
    %v658 = vsub.f32 %v425, %v657
    %v659 = vand.u32 %v658, 4294901760
    %v660 = vsub.f32 %v658, %v659
    %v661 = vand.u32 %v660, 4294901760
    %662 = vmatmul.f32.gmra.mxu0 %v661
    %v663 = vpop.f32.mrf.mxu0
    %v664 = vadd.f32 0.0, %v663
    %v665 = vand.u32 %v429, 4294901760
    %v666 = vsub.f32 %v429, %v665
    %v667 = vand.u32 %v666, 4294901760
    %v668 = vsub.f32 %v666, %v667
    %v669 = vand.u32 %v668, 4294901760
    %670 = vmatmul.f32.gmra.mxu0 %v669
    %v671 = vpop.f32.mrf.mxu0
    %v672 = vadd.f32 0.0, %v671
    %v673 = vand.u32 %v433, 4294901760
    %v674 = vsub.f32 %v433, %v673
    %v675 = vand.u32 %v674, 4294901760
    %v676 = vsub.f32 %v674, %v675
    %v677 = vand.u32 %v676, 4294901760
    %678 = vmatmul.f32.gmra.mxu0 %v677
    %v679 = vpop.f32.mrf.mxu0
    %v680 = vadd.f32 0.0, %v679
    %v681 = vand.u32 %v437, 4294901760
    %v682 = vsub.f32 %v437, %v681
    %v683 = vand.u32 %v682, 4294901760
    %v684 = vsub.f32 %v682, %v683
    %v685 = vand.u32 %v684, 4294901760
    %686 = vmatmul.f32.gmra.mxu0 %v685
    %v687 = vpop.f32.mrf.mxu0
    %v688 = vadd.f32 0.0, %v687
    %v689 = vand.u32 %v441, 4294901760
    %v690 = vsub.f32 %v441, %v689
    %v691 = vand.u32 %v690, 4294901760
    %v692 = vsub.f32 %v690, %v691
    %v693 = vand.u32 %v692, 4294901760
    %694 = vmatmul.f32.gmra.mxu0 %v693
    %v695 = vpop.f32.mrf.mxu0
    %v696 = vadd.f32 0.0, %v695
    %v697 = vand.u32 %v445, 4294901760
    %v698 = vsub.f32 %v445, %v697
    %v699 = vand.u32 %v698, 4294901760
    %v700 = vsub.f32 %v698, %v699
    %v701 = vand.u32 %v700, 4294901760
    %702 = vmatmul.f32.gmra.mxu0 %v701
    %v703 = vpop.f32.mrf.mxu0
    %v704 = vadd.f32 0.0, %v703
    %v705 = vand.u32 %v449, 4294901760
    %v706 = vsub.f32 %v449, %v705
    %v707 = vand.u32 %v706, 4294901760
    %v708 = vsub.f32 %v706, %v707
    %v709 = vand.u32 %v708, 4294901760
    %710 = vmatmul.f32.gmra.mxu0 %v709
    %v711 = vpop.f32.mrf.mxu0
    %v712 = vadd.f32 0.0, %v711
    %v713 = vand.u32 %v453, 4294901760
    %v714 = vsub.f32 %v453, %v713
    %v715 = vand.u32 %v714, 4294901760
    %v716 = vsub.f32 %v714, %v715
    %v717 = vand.u32 %v716, 4294901760
    %718 = vmatmul.f32.gmra.mxu0 %v717
    %v719 = vpop.f32.mrf.mxu0
    %v720 = vadd.f32 0.0, %v719
    %v721 = vand.u32 %v457, 4294901760
    %v722 = vsub.f32 %v457, %v721
    %v723 = vand.u32 %v722, 4294901760
    %v724 = vsub.f32 %v722, %v723
    %v725 = vand.u32 %v724, 4294901760
    %726 = vmatmul.f32.gmra.mxu0 %v725
    %v727 = vpop.f32.mrf.mxu0
    %v728 = vadd.f32 0.0, %v727
    %v729 = vand.u32 %v461, 4294901760
    %v730 = vsub.f32 %v461, %v729
    %v731 = vand.u32 %v730, 4294901760
    %v732 = vsub.f32 %v730, %v731
    %v733 = vand.u32 %v732, 4294901760
    %734 = vmatmul.f32.gmra.mxu0 %v733
    %v735 = vpop.f32.mrf.mxu0
    %v736 = vadd.f32 0.0, %v735
    %v737 = vand.u32 %v465, 4294901760
    %v738 = vsub.f32 %v465, %v737
    %v739 = vand.u32 %v738, 4294901760
    %v740 = vsub.f32 %v738, %v739
    %v741 = vand.u32 %v740, 4294901760
    %742 = vmatmul.f32.gmra.mxu0 %v741
    %v743 = vpop.f32.mrf.mxu0
    %v744 = vadd.f32 0.0, %v743
    %v745 = vand.u32 %v469, 4294901760
    %v746 = vsub.f32 %v469, %v745
    %v747 = vand.u32 %v746, 4294901760
    %v748 = vsub.f32 %v746, %v747
    %v749 = vand.u32 %v748, 4294901760
    %750 = vmatmul.f32.gmra.mxu0 %v749
    %v751 = vpop.f32.mrf.mxu0
    %v752 = vadd.f32 0.0, %v751
    %v753 = vand.u32 %v473, 4294901760
    %v754 = vsub.f32 %v473, %v753
    %v755 = vand.u32 %v754, 4294901760
    %v756 = vsub.f32 %v754, %v755
    %v757 = vand.u32 %v756, 4294901760
    %758 = vmatmul.f32.gmra.mxu0 %v757
    %v759 = vpop.f32.mrf.mxu0
    %v760 = vadd.f32 0.0, %v759
    %v761 = vand.u32 %v477, 4294901760
    %v762 = vsub.f32 %v477, %v761
    %v763 = vand.u32 %v762, 4294901760
    %v764 = vsub.f32 %v762, %v763
    %v765 = vand.u32 %v764, 4294901760
    %766 = vmatmul.f32.gmra.mxu0 %v765
    %v767 = vpop.f32.mrf.mxu0
    %v768 = vadd.f32 0.0, %v767
    %v769 = vand.u32 %v481, 4294901760
    %v770 = vsub.f32 %v481, %v769
    %v771 = vand.u32 %v770, 4294901760
    %v772 = vsub.f32 %v770, %v771
    %v773 = vand.u32 %v772, 4294901760
    %774 = vmatmul.f32.gmra.mxu0 %v773
    %v775 = vpop.f32.mrf.mxu0
    %v776 = vadd.f32 0.0, %v775
    %v777 = vand.u32 %v485, 4294901760
    %v778 = vsub.f32 %v485, %v777
    %v779 = vand.u32 %v778, 4294901760
    %v780 = vsub.f32 %v778, %v779
    %v781 = vand.u32 %v780, 4294901760
    %782 = vmatmul.f32.gmra.mxu0 %v781
    %v783 = vpop.f32.mrf.mxu0
    %v784 = vadd.f32 0.0, %v783
    %v785 = vand.u32 %v489, 4294901760
    %v786 = vsub.f32 %v489, %v785
    %v787 = vand.u32 %v786, 4294901760
    %v788 = vsub.f32 %v786, %v787
    %v789 = vand.u32 %v788, 4294901760
    %790 = vmatmul.f32.gmra.mxu0 %v789
    %v791 = vpop.f32.mrf.mxu0
    %v792 = vadd.f32 0.0, %v791
    %v793 = vand.u32 %v493, 4294901760
    %v794 = vsub.f32 %v493, %v793
    %v795 = vand.u32 %v794, 4294901760
    %v796 = vsub.f32 %v794, %v795
    %v797 = vand.u32 %v796, 4294901760
    %798 = vmatmul.f32.gmra.mxu0 %v797
    %v799 = vpop.f32.mrf.mxu0
    %v800 = vadd.f32 0.0, %v799
    %v801 = vand.u32 %v497, 4294901760
    %v802 = vsub.f32 %v497, %v801
    %v803 = vand.u32 %v802, 4294901760
    %v804 = vsub.f32 %v802, %v803
    %v805 = vand.u32 %v804, 4294901760
    %806 = vmatmul.f32.gmra.mxu0 %v805
    %v807 = vpop.f32.mrf.mxu0
    %v808 = vadd.f32 0.0, %v807
    %v809 = vand.u32 %v501, 4294901760
    %v810 = vsub.f32 %v501, %v809
    %v811 = vand.u32 %v810, 4294901760
    %v812 = vsub.f32 %v810, %v811
    %v813 = vand.u32 %v812, 4294901760
    %814 = vmatmul.f32.gmra.mxu0 %v813
    %v815 = vpop.f32.mrf.mxu0
    %v816 = vadd.f32 0.0, %v815
    %v817 = vand.u32 %v505, 4294901760
    %v818 = vsub.f32 %v505, %v817
    %v819 = vand.u32 %v818, 4294901760
    %v820 = vsub.f32 %v818, %v819
    %v821 = vand.u32 %v820, 4294901760
    %822 = vmatmul.f32.gmra.mxu0 %v821
    %v823 = vpop.f32.mrf.mxu0
    %v824 = vadd.f32 0.0, %v823
    %v825 = vand.u32 %v509, 4294901760
    %v826 = vsub.f32 %v509, %v825
    %v827 = vand.u32 %v826, 4294901760
    %v828 = vsub.f32 %v826, %v827
    %v829 = vand.u32 %v828, 4294901760
    %830 = vmatmul.f32.gmra.mxu0 %v829
    %v831 = vpop.f32.mrf.mxu0
    %v832 = vadd.f32 0.0, %v831
    %v833 = vand.u32 %v513, 4294901760
    %v834 = vsub.f32 %v513, %v833
    %v835 = vand.u32 %v834, 4294901760
    %v836 = vsub.f32 %v834, %v835
    %v837 = vand.u32 %v836, 4294901760
    %838 = vmatmul.f32.gmra.mxu0 %v837
    %v839 = vpop.f32.mrf.mxu0
    %v840 = vadd.f32 0.0, %v839
    %v841 = vand.u32 %v517, 4294901760
    %v842 = vsub.f32 %v517, %v841
    %v843 = vand.u32 %v842, 4294901760
    %v844 = vsub.f32 %v842, %v843
    %v845 = vand.u32 %v844, 4294901760
    %846 = vmatmul.f32.gmra.mxu0 %v845
    %v847 = vpop.f32.mrf.mxu0
    %v848 = vadd.f32 0.0, %v847
    %v849 = vand.u32 %v521, 4294901760
    %v850 = vsub.f32 %v521, %v849
    %v851 = vand.u32 %v850, 4294901760
    %v852 = vsub.f32 %v850, %v851
    %v853 = vand.u32 %v852, 4294901760
    %854 = vmatmul.f32.gmra.mxu0 %v853
    %v855 = vpop.f32.mrf.mxu0
    %v856 = vadd.f32 0.0, %v855
    %v857 = vand.u32 %v525, 4294901760
    %v858 = vsub.f32 %v525, %v857
    %v859 = vand.u32 %v858, 4294901760
    %v860 = vsub.f32 %v858, %v859
    %v861 = vand.u32 %v860, 4294901760
    %862 = vmatmul.f32.gmra.mxu0 %v861
    %v863 = vpop.f32.mrf.mxu0
    %v864 = vadd.f32 0.0, %v863
    %v865 = vand.u32 %v529, 4294901760
    %v866 = vsub.f32 %v529, %v865
    %v867 = vand.u32 %v866, 4294901760
    %v868 = vsub.f32 %v866, %v867
    %v869 = vand.u32 %v868, 4294901760
    %870 = vmatmul.f32.gmra.mxu0 %v869
    %v871 = vpop.f32.mrf.mxu0
    %v872 = vadd.f32 0.0, %v871
    %v873 = vand.u32 %v533, 4294901760
    %v874 = vsub.f32 %v533, %v873
    %v875 = vand.u32 %v874, 4294901760
    %v876 = vsub.f32 %v874, %v875
    %v877 = vand.u32 %v876, 4294901760
    %878 = vmatmul.f32.gmra.mxu0 %v877
    %v879 = vpop.f32.mrf.mxu0
    %v880 = vadd.f32 0.0, %v879
    %v881 = vand.u32 %v537, 4294901760
    %v882 = vsub.f32 %v537, %v881
    %v883 = vand.u32 %v882, 4294901760
    %v884 = vsub.f32 %v882, %v883
    %v885 = vand.u32 %v884, 4294901760
    %886 = vmatmul.f32.gmra.mxu0 %v885
    %v887 = vpop.f32.mrf.mxu0
    %v888 = vadd.f32 0.0, %v887
    %v889 = vand.u32 %v541, 4294901760
    %v890 = vsub.f32 %v541, %v889
    %v891 = vand.u32 %v890, 4294901760
    %v892 = vsub.f32 %v890, %v891
    %v893 = vand.u32 %v892, 4294901760
    %894 = vmatmul.f32.gmra.mxu0 %v893
    %v895 = vpop.f32.mrf.mxu0
    %v896 = vadd.f32 0.0, %v895
    %897 = vdwg.mxu0
    %v898 = vand.u32 %v560, 4294901760
    %v899 = vsub.f32 %v560, %v898
    %v900 = vand.u32 %v899, 4294901760
    %v901 = vsub.f32 %v899, %v900
    %v902 = vand.u32 %v901, 4294901760
    %903 = vmatpush.msra.mxu0 %v902
    %v904 = vand.u32 %v559, 4294901760
    %v905 = vsub.f32 %v559, %v904
    %v906 = vand.u32 %v905, 4294901760
    %v907 = vsub.f32 %v905, %v906
    %v908 = vand.u32 %v907, 4294901760
    %909 = vmatpush.msra.mxu0 %v908
    %v910 = vand.u32 %v558, 4294901760
    %v911 = vsub.f32 %v558, %v910
    %v912 = vand.u32 %v911, 4294901760
    %v913 = vsub.f32 %v911, %v912
    %v914 = vand.u32 %v913, 4294901760
    %915 = vmatpush.msra.mxu0 %v914
    %v916 = vand.u32 %v557, 4294901760
    %v917 = vsub.f32 %v557, %v916
    %v918 = vand.u32 %v917, 4294901760
    %v919 = vsub.f32 %v917, %v918
    %v920 = vand.u32 %v919, 4294901760
    %921 = vmatpush.msra.mxu0 %v920
    %v922 = vand.u32 %v556, 4294901760
    %v923 = vsub.f32 %v556, %v922
    %v924 = vand.u32 %v923, 4294901760
    %v925 = vsub.f32 %v923, %v924
    %v926 = vand.u32 %v925, 4294901760
    %927 = vmatpush.msra.mxu0 %v926
    %v928 = vand.u32 %v555, 4294901760
    %v929 = vsub.f32 %v555, %v928
    %v930 = vand.u32 %v929, 4294901760
    %v931 = vsub.f32 %v929, %v930
    %v932 = vand.u32 %v931, 4294901760
    %933 = vmatpush.msra.mxu0 %v932
    %v934 = vand.u32 %v554, 4294901760
    %v935 = vsub.f32 %v554, %v934
    %v936 = vand.u32 %v935, 4294901760
    %v937 = vsub.f32 %v935, %v936
    %v938 = vand.u32 %v937, 4294901760
    %939 = vmatpush.msra.mxu0 %v938
    %v940 = vand.u32 %v553, 4294901760
    %v941 = vsub.f32 %v553, %v940
    %v942 = vand.u32 %v941, 4294901760
    %v943 = vsub.f32 %v941, %v942
    %v944 = vand.u32 %v943, 4294901760
    %945 = vmatpush.msra.mxu0 %v944
    %v946 = vand.u32 %v552, 4294901760
    %v947 = vsub.f32 %v552, %v946
    %v948 = vand.u32 %v947, 4294901760
    %v949 = vsub.f32 %v947, %v948
    %v950 = vand.u32 %v949, 4294901760
    %951 = vmatpush.msra.mxu0 %v950
    %v952 = vand.u32 %v551, 4294901760
    %v953 = vsub.f32 %v551, %v952
    %v954 = vand.u32 %v953, 4294901760
    %v955 = vsub.f32 %v953, %v954
    %v956 = vand.u32 %v955, 4294901760
    %957 = vmatpush.msra.mxu0 %v956
    %v958 = vand.u32 %v550, 4294901760
    %v959 = vsub.f32 %v550, %v958
    %v960 = vand.u32 %v959, 4294901760
    %v961 = vsub.f32 %v959, %v960
    %v962 = vand.u32 %v961, 4294901760
    %963 = vmatpush.msra.mxu0 %v962
    %v964 = vand.u32 %v549, 4294901760
    %v965 = vsub.f32 %v549, %v964
    %v966 = vand.u32 %v965, 4294901760
    %v967 = vsub.f32 %v965, %v966
    %v968 = vand.u32 %v967, 4294901760
    %969 = vmatpush.msra.mxu0 %v968
    %v970 = vand.u32 %v548, 4294901760
    %v971 = vsub.f32 %v548, %v970
    %v972 = vand.u32 %v971, 4294901760
    %v973 = vsub.f32 %v971, %v972
    %v974 = vand.u32 %v973, 4294901760
    %975 = vmatpush.msra.mxu0 %v974
    %v976 = vand.u32 %v547, 4294901760
    %v977 = vsub.f32 %v547, %v976
    %v978 = vand.u32 %v977, 4294901760
    %v979 = vsub.f32 %v977, %v978
    %v980 = vand.u32 %v979, 4294901760
    %981 = vmatpush.msra.mxu0 %v980
    %v982 = vand.u32 %v546, 4294901760
    %v983 = vsub.f32 %v546, %v982
    %v984 = vand.u32 %v983, 4294901760
    %v985 = vsub.f32 %v983, %v984
    %v986 = vand.u32 %v985, 4294901760
    %987 = vmatpush.msra.mxu0 %v986
    %v988 = vand.u32 %v545, 4294901760
    %v989 = vsub.f32 %v545, %v988
    %v990 = vand.u32 %v989, 4294901760
    %v991 = vsub.f32 %v989, %v990
    %v992 = vand.u32 %v991, 4294901760
    %993 = vmatpush.msra.mxu0 %v992
    %v994 = vand.u32 %v417, 4294901760
    %995 = vmatmul.f32.gmra.mxu0 %v994
    %v996 = vpop.f32.mrf.mxu0
    %v997 = vadd.f32 %v648, %v996
    %v998 = vand.u32 %v421, 4294901760
    %999 = vmatmul.f32.gmra.mxu0 %v998
    %v1000 = vpop.f32.mrf.mxu0
    %v1001 = vadd.f32 %v656, %v1000
    %v1002 = vand.u32 %v425, 4294901760
    %1003 = vmatmul.f32.gmra.mxu0 %v1002
    %v1004 = vpop.f32.mrf.mxu0
    %v1005 = vadd.f32 %v664, %v1004
    %v1006 = vand.u32 %v429, 4294901760
    %1007 = vmatmul.f32.gmra.mxu0 %v1006
    %v1008 = vpop.f32.mrf.mxu0
    %v1009 = vadd.f32 %v672, %v1008
    %v1010 = vand.u32 %v433, 4294901760
    %1011 = vmatmul.f32.gmra.mxu0 %v1010
    %v1012 = vpop.f32.mrf.mxu0
    %v1013 = vadd.f32 %v680, %v1012
    %v1014 = vand.u32 %v437, 4294901760
    %1015 = vmatmul.f32.gmra.mxu0 %v1014
    %v1016 = vpop.f32.mrf.mxu0
    %v1017 = vadd.f32 %v688, %v1016
    %v1018 = vand.u32 %v441, 4294901760
    %1019 = vmatmul.f32.gmra.mxu0 %v1018
    %v1020 = vpop.f32.mrf.mxu0
    %v1021 = vadd.f32 %v696, %v1020
    %v1022 = vand.u32 %v445, 4294901760
    %1023 = vmatmul.f32.gmra.mxu0 %v1022
    %v1024 = vpop.f32.mrf.mxu0
    %v1025 = vadd.f32 %v704, %v1024
    %v1026 = vand.u32 %v449, 4294901760
    %1027 = vmatmul.f32.gmra.mxu0 %v1026
    %v1028 = vpop.f32.mrf.mxu0
    %v1029 = vadd.f32 %v712, %v1028
    %v1030 = vand.u32 %v453, 4294901760
    %1031 = vmatmul.f32.gmra.mxu0 %v1030
    %v1032 = vpop.f32.mrf.mxu0
    %v1033 = vadd.f32 %v720, %v1032
    %v1034 = vand.u32 %v457, 4294901760
    %1035 = vmatmul.f32.gmra.mxu0 %v1034
    %v1036 = vpop.f32.mrf.mxu0
    %v1037 = vadd.f32 %v728, %v1036
    %v1038 = vand.u32 %v461, 4294901760
    %1039 = vmatmul.f32.gmra.mxu0 %v1038
    %v1040 = vpop.f32.mrf.mxu0
    %v1041 = vadd.f32 %v736, %v1040
    %v1042 = vand.u32 %v465, 4294901760
    %1043 = vmatmul.f32.gmra.mxu0 %v1042
    %v1044 = vpop.f32.mrf.mxu0
    %v1045 = vadd.f32 %v744, %v1044
    %v1046 = vand.u32 %v469, 4294901760
    %1047 = vmatmul.f32.gmra.mxu0 %v1046
    %v1048 = vpop.f32.mrf.mxu0
    %v1049 = vadd.f32 %v752, %v1048
    %v1050 = vand.u32 %v473, 4294901760
    %1051 = vmatmul.f32.gmra.mxu0 %v1050
    %v1052 = vpop.f32.mrf.mxu0
    %v1053 = vadd.f32 %v760, %v1052
    %v1054 = vand.u32 %v477, 4294901760
    %1055 = vmatmul.f32.gmra.mxu0 %v1054
    %v1056 = vpop.f32.mrf.mxu0
    %v1057 = vadd.f32 %v768, %v1056
    %v1058 = vand.u32 %v481, 4294901760
    %1059 = vmatmul.f32.gmra.mxu0 %v1058
    %v1060 = vpop.f32.mrf.mxu0
    %v1061 = vadd.f32 %v776, %v1060
    %v1062 = vand.u32 %v485, 4294901760
    %1063 = vmatmul.f32.gmra.mxu0 %v1062
    %v1064 = vpop.f32.mrf.mxu0
    %v1065 = vadd.f32 %v784, %v1064
    %v1066 = vand.u32 %v489, 4294901760
    %1067 = vmatmul.f32.gmra.mxu0 %v1066
    %v1068 = vpop.f32.mrf.mxu0
    %v1069 = vadd.f32 %v792, %v1068
    %v1070 = vand.u32 %v493, 4294901760
    %1071 = vmatmul.f32.gmra.mxu0 %v1070
    %v1072 = vpop.f32.mrf.mxu0
    %v1073 = vadd.f32 %v800, %v1072
    %v1074 = vand.u32 %v497, 4294901760
    %1075 = vmatmul.f32.gmra.mxu0 %v1074
    %v1076 = vpop.f32.mrf.mxu0
    %v1077 = vadd.f32 %v808, %v1076
    %v1078 = vand.u32 %v501, 4294901760
    %1079 = vmatmul.f32.gmra.mxu0 %v1078
    %v1080 = vpop.f32.mrf.mxu0
    %v1081 = vadd.f32 %v816, %v1080
    %v1082 = vand.u32 %v505, 4294901760
    %1083 = vmatmul.f32.gmra.mxu0 %v1082
    %v1084 = vpop.f32.mrf.mxu0
    %v1085 = vadd.f32 %v824, %v1084
    %v1086 = vand.u32 %v509, 4294901760
    %1087 = vmatmul.f32.gmra.mxu0 %v1086
    %v1088 = vpop.f32.mrf.mxu0
    %v1089 = vadd.f32 %v832, %v1088
    %v1090 = vand.u32 %v513, 4294901760
    %1091 = vmatmul.f32.gmra.mxu0 %v1090
    %v1092 = vpop.f32.mrf.mxu0
    %v1093 = vadd.f32 %v840, %v1092
    %v1094 = vand.u32 %v517, 4294901760
    %1095 = vmatmul.f32.gmra.mxu0 %v1094
    %v1096 = vpop.f32.mrf.mxu0
    %v1097 = vadd.f32 %v848, %v1096
    %v1098 = vand.u32 %v521, 4294901760
    %1099 = vmatmul.f32.gmra.mxu0 %v1098
    %v1100 = vpop.f32.mrf.mxu0
    %v1101 = vadd.f32 %v856, %v1100
    %v1102 = vand.u32 %v525, 4294901760
    %1103 = vmatmul.f32.gmra.mxu0 %v1102
    %v1104 = vpop.f32.mrf.mxu0
    %v1105 = vadd.f32 %v864, %v1104
    %v1106 = vand.u32 %v529, 4294901760
    %1107 = vmatmul.f32.gmra.mxu0 %v1106
    %v1108 = vpop.f32.mrf.mxu0
    %v1109 = vadd.f32 %v872, %v1108
    %v1110 = vand.u32 %v533, 4294901760
    %1111 = vmatmul.f32.gmra.mxu0 %v1110
    %v1112 = vpop.f32.mrf.mxu0
    %v1113 = vadd.f32 %v880, %v1112
    %v1114 = vand.u32 %v537, 4294901760
    %1115 = vmatmul.f32.gmra.mxu0 %v1114
    %v1116 = vpop.f32.mrf.mxu0
    %v1117 = vadd.f32 %v888, %v1116
    %v1118 = vand.u32 %v541, 4294901760
    %1119 = vmatmul.f32.gmra.mxu0 %v1118
    %v1120 = vpop.f32.mrf.mxu0
    %v1121 = vadd.f32 %v896, %v1120
    %1122 = vdwg.mxu0
    %v1123 = vand.u32 %v560, 4294901760
    %v1124 = vsub.f32 %v560, %v1123
    %1125 = vmatpush.msra.mxu0 %v1124
    %v1126 = vand.u32 %v559, 4294901760
    %v1127 = vsub.f32 %v559, %v1126
    %1128 = vmatpush.msra.mxu0 %v1127
    %v1129 = vand.u32 %v558, 4294901760
    %v1130 = vsub.f32 %v558, %v1129
    %1131 = vmatpush.msra.mxu0 %v1130
    %v1132 = vand.u32 %v557, 4294901760
    %v1133 = vsub.f32 %v557, %v1132
    %1134 = vmatpush.msra.mxu0 %v1133
    %v1135 = vand.u32 %v556, 4294901760
    %v1136 = vsub.f32 %v556, %v1135
    %1137 = vmatpush.msra.mxu0 %v1136
    %v1138 = vand.u32 %v555, 4294901760
    %v1139 = vsub.f32 %v555, %v1138
    %1140 = vmatpush.msra.mxu0 %v1139
    %v1141 = vand.u32 %v554, 4294901760
    %v1142 = vsub.f32 %v554, %v1141
    %1143 = vmatpush.msra.mxu0 %v1142
    %v1144 = vand.u32 %v553, 4294901760
    %v1145 = vsub.f32 %v553, %v1144
    %1146 = vmatpush.msra.mxu0 %v1145
    %v1147 = vand.u32 %v552, 4294901760
    %v1148 = vsub.f32 %v552, %v1147
    %1149 = vmatpush.msra.mxu0 %v1148
    %v1150 = vand.u32 %v551, 4294901760
    %v1151 = vsub.f32 %v551, %v1150
    %1152 = vmatpush.msra.mxu0 %v1151
    %v1153 = vand.u32 %v550, 4294901760
    %v1154 = vsub.f32 %v550, %v1153
    %1155 = vmatpush.msra.mxu0 %v1154
    %v1156 = vand.u32 %v549, 4294901760
    %v1157 = vsub.f32 %v549, %v1156
    %1158 = vmatpush.msra.mxu0 %v1157
    %v1159 = vand.u32 %v548, 4294901760
    %v1160 = vsub.f32 %v548, %v1159
    %1161 = vmatpush.msra.mxu0 %v1160
    %v1162 = vand.u32 %v547, 4294901760
    %v1163 = vsub.f32 %v547, %v1162
    %1164 = vmatpush.msra.mxu0 %v1163
    %v1165 = vand.u32 %v546, 4294901760
    %v1166 = vsub.f32 %v546, %v1165
    %1167 = vmatpush.msra.mxu0 %v1166
    %v1168 = vand.u32 %v545, 4294901760
    %v1169 = vsub.f32 %v545, %v1168
    %1170 = vmatpush.msra.mxu0 %v1169
    %v1171 = vand.u32 %v417, 4294901760
    %v1172 = vsub.f32 %v417, %v1171
    %1173 = vmatmul.f32.gmra.mxu0 %v1172
    %v1174 = vpop.f32.mrf.mxu0
    %v1175 = vadd.f32 %v997, %v1174
    %v1176 = vand.u32 %v421, 4294901760
    %v1177 = vsub.f32 %v421, %v1176
    %1178 = vmatmul.f32.gmra.mxu0 %v1177
    %v1179 = vpop.f32.mrf.mxu0
    %v1180 = vadd.f32 %v1001, %v1179
    %v1181 = vand.u32 %v425, 4294901760
    %v1182 = vsub.f32 %v425, %v1181
    %1183 = vmatmul.f32.gmra.mxu0 %v1182
    %v1184 = vpop.f32.mrf.mxu0
    %v1185 = vadd.f32 %v1005, %v1184
    %v1186 = vand.u32 %v429, 4294901760
    %v1187 = vsub.f32 %v429, %v1186
    %1188 = vmatmul.f32.gmra.mxu0 %v1187
    %v1189 = vpop.f32.mrf.mxu0
    %v1190 = vadd.f32 %v1009, %v1189
    %v1191 = vand.u32 %v433, 4294901760
    %v1192 = vsub.f32 %v433, %v1191
    %1193 = vmatmul.f32.gmra.mxu0 %v1192
    %v1194 = vpop.f32.mrf.mxu0
    %v1195 = vadd.f32 %v1013, %v1194
    %v1196 = vand.u32 %v437, 4294901760
    %v1197 = vsub.f32 %v437, %v1196
    %1198 = vmatmul.f32.gmra.mxu0 %v1197
    %v1199 = vpop.f32.mrf.mxu0
    %v1200 = vadd.f32 %v1017, %v1199
    %v1201 = vand.u32 %v441, 4294901760
    %v1202 = vsub.f32 %v441, %v1201
    %1203 = vmatmul.f32.gmra.mxu0 %v1202
    %v1204 = vpop.f32.mrf.mxu0
    %v1205 = vadd.f32 %v1021, %v1204
    %v1206 = vand.u32 %v445, 4294901760
    %v1207 = vsub.f32 %v445, %v1206
    %1208 = vmatmul.f32.gmra.mxu0 %v1207
    %v1209 = vpop.f32.mrf.mxu0
    %v1210 = vadd.f32 %v1025, %v1209
    %v1211 = vand.u32 %v449, 4294901760
    %v1212 = vsub.f32 %v449, %v1211
    %1213 = vmatmul.f32.gmra.mxu0 %v1212
    %v1214 = vpop.f32.mrf.mxu0
    %v1215 = vadd.f32 %v1029, %v1214
    %v1216 = vand.u32 %v453, 4294901760
    %v1217 = vsub.f32 %v453, %v1216
    %1218 = vmatmul.f32.gmra.mxu0 %v1217
    %v1219 = vpop.f32.mrf.mxu0
    %v1220 = vadd.f32 %v1033, %v1219
    %v1221 = vand.u32 %v457, 4294901760
    %v1222 = vsub.f32 %v457, %v1221
    %1223 = vmatmul.f32.gmra.mxu0 %v1222
    %v1224 = vpop.f32.mrf.mxu0
    %v1225 = vadd.f32 %v1037, %v1224
    %v1226 = vand.u32 %v461, 4294901760
    %v1227 = vsub.f32 %v461, %v1226
    %1228 = vmatmul.f32.gmra.mxu0 %v1227
    %v1229 = vpop.f32.mrf.mxu0
    %v1230 = vadd.f32 %v1041, %v1229
    %v1231 = vand.u32 %v465, 4294901760
    %v1232 = vsub.f32 %v465, %v1231
    %1233 = vmatmul.f32.gmra.mxu0 %v1232
    %v1234 = vpop.f32.mrf.mxu0
    %v1235 = vadd.f32 %v1045, %v1234
    %v1236 = vand.u32 %v469, 4294901760
    %v1237 = vsub.f32 %v469, %v1236
    %1238 = vmatmul.f32.gmra.mxu0 %v1237
    %v1239 = vpop.f32.mrf.mxu0
    %v1240 = vadd.f32 %v1049, %v1239
    %v1241 = vand.u32 %v473, 4294901760
    %v1242 = vsub.f32 %v473, %v1241
    %1243 = vmatmul.f32.gmra.mxu0 %v1242
    %v1244 = vpop.f32.mrf.mxu0
    %v1245 = vadd.f32 %v1053, %v1244
    %v1246 = vand.u32 %v477, 4294901760
    %v1247 = vsub.f32 %v477, %v1246
    %1248 = vmatmul.f32.gmra.mxu0 %v1247
    %v1249 = vpop.f32.mrf.mxu0
    %v1250 = vadd.f32 %v1057, %v1249
    %v1251 = vand.u32 %v481, 4294901760
    %v1252 = vsub.f32 %v481, %v1251
    %1253 = vmatmul.f32.gmra.mxu0 %v1252
    %v1254 = vpop.f32.mrf.mxu0
    %v1255 = vadd.f32 %v1061, %v1254
    %v1256 = vand.u32 %v485, 4294901760
    %v1257 = vsub.f32 %v485, %v1256
    %1258 = vmatmul.f32.gmra.mxu0 %v1257
    %v1259 = vpop.f32.mrf.mxu0
    %v1260 = vadd.f32 %v1065, %v1259
    %v1261 = vand.u32 %v489, 4294901760
    %v1262 = vsub.f32 %v489, %v1261
    %1263 = vmatmul.f32.gmra.mxu0 %v1262
    %v1264 = vpop.f32.mrf.mxu0
    %v1265 = vadd.f32 %v1069, %v1264
    %v1266 = vand.u32 %v493, 4294901760
    %v1267 = vsub.f32 %v493, %v1266
    %1268 = vmatmul.f32.gmra.mxu0 %v1267
    %v1269 = vpop.f32.mrf.mxu0
    %v1270 = vadd.f32 %v1073, %v1269
    %v1271 = vand.u32 %v497, 4294901760
    %v1272 = vsub.f32 %v497, %v1271
    %1273 = vmatmul.f32.gmra.mxu0 %v1272
    %v1274 = vpop.f32.mrf.mxu0
    %v1275 = vadd.f32 %v1077, %v1274
    %v1276 = vand.u32 %v501, 4294901760
    %v1277 = vsub.f32 %v501, %v1276
    %1278 = vmatmul.f32.gmra.mxu0 %v1277
    %v1279 = vpop.f32.mrf.mxu0
    %v1280 = vadd.f32 %v1081, %v1279
    %v1281 = vand.u32 %v505, 4294901760
    %v1282 = vsub.f32 %v505, %v1281
    %1283 = vmatmul.f32.gmra.mxu0 %v1282
    %v1284 = vpop.f32.mrf.mxu0
    %v1285 = vadd.f32 %v1085, %v1284
    %v1286 = vand.u32 %v509, 4294901760
    %v1287 = vsub.f32 %v509, %v1286
    %1288 = vmatmul.f32.gmra.mxu0 %v1287
    %v1289 = vpop.f32.mrf.mxu0
    %v1290 = vadd.f32 %v1089, %v1289
    %v1291 = vand.u32 %v513, 4294901760
    %v1292 = vsub.f32 %v513, %v1291
    %1293 = vmatmul.f32.gmra.mxu0 %v1292
    %v1294 = vpop.f32.mrf.mxu0
    %v1295 = vadd.f32 %v1093, %v1294
    %v1296 = vand.u32 %v517, 4294901760
    %v1297 = vsub.f32 %v517, %v1296
    %1298 = vmatmul.f32.gmra.mxu0 %v1297
    %v1299 = vpop.f32.mrf.mxu0
    %v1300 = vadd.f32 %v1097, %v1299
    %v1301 = vand.u32 %v521, 4294901760
    %v1302 = vsub.f32 %v521, %v1301
    %1303 = vmatmul.f32.gmra.mxu0 %v1302
    %v1304 = vpop.f32.mrf.mxu0
    %v1305 = vadd.f32 %v1101, %v1304
    %v1306 = vand.u32 %v525, 4294901760
    %v1307 = vsub.f32 %v525, %v1306
    %1308 = vmatmul.f32.gmra.mxu0 %v1307
    %v1309 = vpop.f32.mrf.mxu0
    %v1310 = vadd.f32 %v1105, %v1309
    %v1311 = vand.u32 %v529, 4294901760
    %v1312 = vsub.f32 %v529, %v1311
    %1313 = vmatmul.f32.gmra.mxu0 %v1312
    %v1314 = vpop.f32.mrf.mxu0
    %v1315 = vadd.f32 %v1109, %v1314
    %v1316 = vand.u32 %v533, 4294901760
    %v1317 = vsub.f32 %v533, %v1316
    %1318 = vmatmul.f32.gmra.mxu0 %v1317
    %v1319 = vpop.f32.mrf.mxu0
    %v1320 = vadd.f32 %v1113, %v1319
    %v1321 = vand.u32 %v537, 4294901760
    %v1322 = vsub.f32 %v537, %v1321
    %1323 = vmatmul.f32.gmra.mxu0 %v1322
    %v1324 = vpop.f32.mrf.mxu0
    %v1325 = vadd.f32 %v1117, %v1324
    %v1326 = vand.u32 %v541, 4294901760
    %v1327 = vsub.f32 %v541, %v1326
    %1328 = vmatmul.f32.gmra.mxu0 %v1327
    %v1329 = vpop.f32.mrf.mxu0
    %v1330 = vadd.f32 %v1121, %v1329
    %1331 = vdwg.mxu0
    %v1332 = vand.u32 %v560, 4294901760
    %1333 = vmatpush.msra.mxu0 %v1332
    %v1334 = vand.u32 %v559, 4294901760
    %1335 = vmatpush.msra.mxu0 %v1334
    %v1336 = vand.u32 %v558, 4294901760
    %1337 = vmatpush.msra.mxu0 %v1336
    %v1338 = vand.u32 %v557, 4294901760
    %1339 = vmatpush.msra.mxu0 %v1338
    %v1340 = vand.u32 %v556, 4294901760
    %1341 = vmatpush.msra.mxu0 %v1340
    %v1342 = vand.u32 %v555, 4294901760
    %1343 = vmatpush.msra.mxu0 %v1342
    %v1344 = vand.u32 %v554, 4294901760
    %1345 = vmatpush.msra.mxu0 %v1344
    %v1346 = vand.u32 %v553, 4294901760
    %1347 = vmatpush.msra.mxu0 %v1346
    %v1348 = vand.u32 %v552, 4294901760
    %1349 = vmatpush.msra.mxu0 %v1348
    %v1350 = vand.u32 %v551, 4294901760
    %1351 = vmatpush.msra.mxu0 %v1350
    %v1352 = vand.u32 %v550, 4294901760
    %1353 = vmatpush.msra.mxu0 %v1352
    %v1354 = vand.u32 %v549, 4294901760
    %1355 = vmatpush.msra.mxu0 %v1354
    %v1356 = vand.u32 %v548, 4294901760
    %1357 = vmatpush.msra.mxu0 %v1356
    %v1358 = vand.u32 %v547, 4294901760
    %1359 = vmatpush.msra.mxu0 %v1358
    %v1360 = vand.u32 %v546, 4294901760
    %1361 = vmatpush.msra.mxu0 %v1360
    %v1362 = vand.u32 %v545, 4294901760
    %1363 = vmatpush.msra.mxu0 %v1362
    %v1364 = vand.u32 %v417, 4294901760
    %v1365 = vsub.f32 %v417, %v1364
    %v1366 = vand.u32 %v1365, 4294901760
    %1367 = vmatmul.f32.gmra.mxu0 %v1366
    %v1368 = vpop.f32.mrf.mxu0
    %v1369 = vadd.f32 %v1175, %v1368
    %v1370 = vand.u32 %v421, 4294901760
    %v1371 = vsub.f32 %v421, %v1370
    %v1372 = vand.u32 %v1371, 4294901760
    %1373 = vmatmul.f32.gmra.mxu0 %v1372
    %v1374 = vpop.f32.mrf.mxu0
    %v1375 = vadd.f32 %v1180, %v1374
    %v1376 = vand.u32 %v425, 4294901760
    %v1377 = vsub.f32 %v425, %v1376
    %v1378 = vand.u32 %v1377, 4294901760
    %1379 = vmatmul.f32.gmra.mxu0 %v1378
    %v1380 = vpop.f32.mrf.mxu0
    %v1381 = vadd.f32 %v1185, %v1380
    %v1382 = vand.u32 %v429, 4294901760
    %v1383 = vsub.f32 %v429, %v1382
    %v1384 = vand.u32 %v1383, 4294901760
    %1385 = vmatmul.f32.gmra.mxu0 %v1384
    %v1386 = vpop.f32.mrf.mxu0
    %v1387 = vadd.f32 %v1190, %v1386
    %v1388 = vand.u32 %v433, 4294901760
    %v1389 = vsub.f32 %v433, %v1388
    %v1390 = vand.u32 %v1389, 4294901760
    %1391 = vmatmul.f32.gmra.mxu0 %v1390
    %v1392 = vpop.f32.mrf.mxu0
    %v1393 = vadd.f32 %v1195, %v1392
    %v1394 = vand.u32 %v437, 4294901760
    %v1395 = vsub.f32 %v437, %v1394
    %v1396 = vand.u32 %v1395, 4294901760
    %1397 = vmatmul.f32.gmra.mxu0 %v1396
    %v1398 = vpop.f32.mrf.mxu0
    %v1399 = vadd.f32 %v1200, %v1398
    %v1400 = vand.u32 %v441, 4294901760
    %v1401 = vsub.f32 %v441, %v1400
    %v1402 = vand.u32 %v1401, 4294901760
    %1403 = vmatmul.f32.gmra.mxu0 %v1402
    %v1404 = vpop.f32.mrf.mxu0
    %v1405 = vadd.f32 %v1205, %v1404
    %v1406 = vand.u32 %v445, 4294901760
    %v1407 = vsub.f32 %v445, %v1406
    %v1408 = vand.u32 %v1407, 4294901760
    %1409 = vmatmul.f32.gmra.mxu0 %v1408
    %v1410 = vpop.f32.mrf.mxu0
    %v1411 = vadd.f32 %v1210, %v1410
    %v1412 = vand.u32 %v449, 4294901760
    %v1413 = vsub.f32 %v449, %v1412
    %v1414 = vand.u32 %v1413, 4294901760
    %1415 = vmatmul.f32.gmra.mxu0 %v1414
    %v1416 = vpop.f32.mrf.mxu0
    %v1417 = vadd.f32 %v1215, %v1416
    %v1418 = vand.u32 %v453, 4294901760
    %v1419 = vsub.f32 %v453, %v1418
    %v1420 = vand.u32 %v1419, 4294901760
    %1421 = vmatmul.f32.gmra.mxu0 %v1420
    %v1422 = vpop.f32.mrf.mxu0
    %v1423 = vadd.f32 %v1220, %v1422
    %v1424 = vand.u32 %v457, 4294901760
    %v1425 = vsub.f32 %v457, %v1424
    %v1426 = vand.u32 %v1425, 4294901760
    %1427 = vmatmul.f32.gmra.mxu0 %v1426
    %v1428 = vpop.f32.mrf.mxu0
    %v1429 = vadd.f32 %v1225, %v1428
    %v1430 = vand.u32 %v461, 4294901760
    %v1431 = vsub.f32 %v461, %v1430
    %v1432 = vand.u32 %v1431, 4294901760
    %1433 = vmatmul.f32.gmra.mxu0 %v1432
    %v1434 = vpop.f32.mrf.mxu0
    %v1435 = vadd.f32 %v1230, %v1434
    %v1436 = vand.u32 %v465, 4294901760
    %v1437 = vsub.f32 %v465, %v1436
    %v1438 = vand.u32 %v1437, 4294901760
    %1439 = vmatmul.f32.gmra.mxu0 %v1438
    %v1440 = vpop.f32.mrf.mxu0
    %v1441 = vadd.f32 %v1235, %v1440
    %v1442 = vand.u32 %v469, 4294901760
    %v1443 = vsub.f32 %v469, %v1442
    %v1444 = vand.u32 %v1443, 4294901760
    %1445 = vmatmul.f32.gmra.mxu0 %v1444
    %v1446 = vpop.f32.mrf.mxu0
    %v1447 = vadd.f32 %v1240, %v1446
    %v1448 = vand.u32 %v473, 4294901760
    %v1449 = vsub.f32 %v473, %v1448
    %v1450 = vand.u32 %v1449, 4294901760
    %1451 = vmatmul.f32.gmra.mxu0 %v1450
    %v1452 = vpop.f32.mrf.mxu0
    %v1453 = vadd.f32 %v1245, %v1452
    %v1454 = vand.u32 %v477, 4294901760
    %v1455 = vsub.f32 %v477, %v1454
    %v1456 = vand.u32 %v1455, 4294901760
    %1457 = vmatmul.f32.gmra.mxu0 %v1456
    %v1458 = vpop.f32.mrf.mxu0
    %v1459 = vadd.f32 %v1250, %v1458
    %v1460 = vand.u32 %v481, 4294901760
    %v1461 = vsub.f32 %v481, %v1460
    %v1462 = vand.u32 %v1461, 4294901760
    %1463 = vmatmul.f32.gmra.mxu0 %v1462
    %v1464 = vpop.f32.mrf.mxu0
    %v1465 = vadd.f32 %v1255, %v1464
    %v1466 = vand.u32 %v485, 4294901760
    %v1467 = vsub.f32 %v485, %v1466
    %v1468 = vand.u32 %v1467, 4294901760
    %1469 = vmatmul.f32.gmra.mxu0 %v1468
    %v1470 = vpop.f32.mrf.mxu0
    %v1471 = vadd.f32 %v1260, %v1470
    %v1472 = vand.u32 %v489, 4294901760
    %v1473 = vsub.f32 %v489, %v1472
    %v1474 = vand.u32 %v1473, 4294901760
    %1475 = vmatmul.f32.gmra.mxu0 %v1474
    %v1476 = vpop.f32.mrf.mxu0
    %v1477 = vadd.f32 %v1265, %v1476
    %v1478 = vand.u32 %v493, 4294901760
    %v1479 = vsub.f32 %v493, %v1478
    %v1480 = vand.u32 %v1479, 4294901760
    %1481 = vmatmul.f32.gmra.mxu0 %v1480
    %v1482 = vpop.f32.mrf.mxu0
    %v1483 = vadd.f32 %v1270, %v1482
    %v1484 = vand.u32 %v497, 4294901760
    %v1485 = vsub.f32 %v497, %v1484
    %v1486 = vand.u32 %v1485, 4294901760
    %1487 = vmatmul.f32.gmra.mxu0 %v1486
    %v1488 = vpop.f32.mrf.mxu0
    %v1489 = vadd.f32 %v1275, %v1488
    %v1490 = vand.u32 %v501, 4294901760
    %v1491 = vsub.f32 %v501, %v1490
    %v1492 = vand.u32 %v1491, 4294901760
    %1493 = vmatmul.f32.gmra.mxu0 %v1492
    %v1494 = vpop.f32.mrf.mxu0
    %v1495 = vadd.f32 %v1280, %v1494
    %v1496 = vand.u32 %v505, 4294901760
    %v1497 = vsub.f32 %v505, %v1496
    %v1498 = vand.u32 %v1497, 4294901760
    %1499 = vmatmul.f32.gmra.mxu0 %v1498
    %v1500 = vpop.f32.mrf.mxu0
    %v1501 = vadd.f32 %v1285, %v1500
    %v1502 = vand.u32 %v509, 4294901760
    %v1503 = vsub.f32 %v509, %v1502
    %v1504 = vand.u32 %v1503, 4294901760
    %1505 = vmatmul.f32.gmra.mxu0 %v1504
    %v1506 = vpop.f32.mrf.mxu0
    %v1507 = vadd.f32 %v1290, %v1506
    %v1508 = vand.u32 %v513, 4294901760
    %v1509 = vsub.f32 %v513, %v1508
    %v1510 = vand.u32 %v1509, 4294901760
    %1511 = vmatmul.f32.gmra.mxu0 %v1510
    %v1512 = vpop.f32.mrf.mxu0
    %v1513 = vadd.f32 %v1295, %v1512
    %v1514 = vand.u32 %v517, 4294901760
    %v1515 = vsub.f32 %v517, %v1514
    %v1516 = vand.u32 %v1515, 4294901760
    %1517 = vmatmul.f32.gmra.mxu0 %v1516
    %v1518 = vpop.f32.mrf.mxu0
    %v1519 = vadd.f32 %v1300, %v1518
    %v1520 = vand.u32 %v521, 4294901760
    %v1521 = vsub.f32 %v521, %v1520
    %v1522 = vand.u32 %v1521, 4294901760
    %1523 = vmatmul.f32.gmra.mxu0 %v1522
    %v1524 = vpop.f32.mrf.mxu0
    %v1525 = vadd.f32 %v1305, %v1524
    %v1526 = vand.u32 %v525, 4294901760
    %v1527 = vsub.f32 %v525, %v1526
    %v1528 = vand.u32 %v1527, 4294901760
    %1529 = vmatmul.f32.gmra.mxu0 %v1528
    %v1530 = vpop.f32.mrf.mxu0
    %v1531 = vadd.f32 %v1310, %v1530
    %v1532 = vand.u32 %v529, 4294901760
    %v1533 = vsub.f32 %v529, %v1532
    %v1534 = vand.u32 %v1533, 4294901760
    %1535 = vmatmul.f32.gmra.mxu0 %v1534
    %v1536 = vpop.f32.mrf.mxu0
    %v1537 = vadd.f32 %v1315, %v1536
    %v1538 = vand.u32 %v533, 4294901760
    %v1539 = vsub.f32 %v533, %v1538
    %v1540 = vand.u32 %v1539, 4294901760
    %1541 = vmatmul.f32.gmra.mxu0 %v1540
    %v1542 = vpop.f32.mrf.mxu0
    %v1543 = vadd.f32 %v1320, %v1542
    %v1544 = vand.u32 %v537, 4294901760
    %v1545 = vsub.f32 %v537, %v1544
    %v1546 = vand.u32 %v1545, 4294901760
    %1547 = vmatmul.f32.gmra.mxu0 %v1546
    %v1548 = vpop.f32.mrf.mxu0
    %v1549 = vadd.f32 %v1325, %v1548
    %v1550 = vand.u32 %v541, 4294901760
    %v1551 = vsub.f32 %v541, %v1550
    %v1552 = vand.u32 %v1551, 4294901760
    %1553 = vmatmul.f32.gmra.mxu0 %v1552
    %v1554 = vpop.f32.mrf.mxu0
    %v1555 = vadd.f32 %v1330, %v1554
    %1556 = vdwg.mxu0
    %v1557 = vand.u32 %v560, 4294901760
    %v1558 = vsub.f32 %v560, %v1557
    %v1559 = vand.u32 %v1558, 4294901760
    %1560 = vmatpush.msra.mxu0 %v1559
    %v1561 = vand.u32 %v559, 4294901760
    %v1562 = vsub.f32 %v559, %v1561
    %v1563 = vand.u32 %v1562, 4294901760
    %1564 = vmatpush.msra.mxu0 %v1563
    %v1565 = vand.u32 %v558, 4294901760
    %v1566 = vsub.f32 %v558, %v1565
    %v1567 = vand.u32 %v1566, 4294901760
    %1568 = vmatpush.msra.mxu0 %v1567
    %v1569 = vand.u32 %v557, 4294901760
    %v1570 = vsub.f32 %v557, %v1569
    %v1571 = vand.u32 %v1570, 4294901760
    %1572 = vmatpush.msra.mxu0 %v1571
    %v1573 = vand.u32 %v556, 4294901760
    %v1574 = vsub.f32 %v556, %v1573
    %v1575 = vand.u32 %v1574, 4294901760
    %1576 = vmatpush.msra.mxu0 %v1575
    %v1577 = vand.u32 %v555, 4294901760
    %v1578 = vsub.f32 %v555, %v1577
    %v1579 = vand.u32 %v1578, 4294901760
    %1580 = vmatpush.msra.mxu0 %v1579
    %v1581 = vand.u32 %v554, 4294901760
    %v1582 = vsub.f32 %v554, %v1581
    %v1583 = vand.u32 %v1582, 4294901760
    %1584 = vmatpush.msra.mxu0 %v1583
    %v1585 = vand.u32 %v553, 4294901760
    %v1586 = vsub.f32 %v553, %v1585
    %v1587 = vand.u32 %v1586, 4294901760
    %1588 = vmatpush.msra.mxu0 %v1587
    %v1589 = vand.u32 %v552, 4294901760
    %v1590 = vsub.f32 %v552, %v1589
    %v1591 = vand.u32 %v1590, 4294901760
    %1592 = vmatpush.msra.mxu0 %v1591
    %v1593 = vand.u32 %v551, 4294901760
    %v1594 = vsub.f32 %v551, %v1593
    %v1595 = vand.u32 %v1594, 4294901760
    %1596 = vmatpush.msra.mxu0 %v1595
    %v1597 = vand.u32 %v550, 4294901760
    %v1598 = vsub.f32 %v550, %v1597
    %v1599 = vand.u32 %v1598, 4294901760
    %1600 = vmatpush.msra.mxu0 %v1599
    %v1601 = vand.u32 %v549, 4294901760
    %v1602 = vsub.f32 %v549, %v1601
    %v1603 = vand.u32 %v1602, 4294901760
    %1604 = vmatpush.msra.mxu0 %v1603
    %v1605 = vand.u32 %v548, 4294901760
    %v1606 = vsub.f32 %v548, %v1605
    %v1607 = vand.u32 %v1606, 4294901760
    %1608 = vmatpush.msra.mxu0 %v1607
    %v1609 = vand.u32 %v547, 4294901760
    %v1610 = vsub.f32 %v547, %v1609
    %v1611 = vand.u32 %v1610, 4294901760
    %1612 = vmatpush.msra.mxu0 %v1611
    %v1613 = vand.u32 %v546, 4294901760
    %v1614 = vsub.f32 %v546, %v1613
    %v1615 = vand.u32 %v1614, 4294901760
    %1616 = vmatpush.msra.mxu0 %v1615
    %v1617 = vand.u32 %v545, 4294901760
    %v1618 = vsub.f32 %v545, %v1617
    %v1619 = vand.u32 %v1618, 4294901760
    %1620 = vmatpush.msra.mxu0 %v1619
    %v1621 = vand.u32 %v417, 4294901760
    %1622 = vmatmul.f32.gmra.mxu0 %v1621
    %v1623 = vpop.f32.mrf.mxu0
    %v1624 = vadd.f32 %v1369, %v1623
    %v1625 = vand.u32 %v421, 4294901760
    %1626 = vmatmul.f32.gmra.mxu0 %v1625
    %v1627 = vpop.f32.mrf.mxu0
    %v1628 = vadd.f32 %v1375, %v1627
    %v1629 = vand.u32 %v425, 4294901760
    %1630 = vmatmul.f32.gmra.mxu0 %v1629
    %v1631 = vpop.f32.mrf.mxu0
    %v1632 = vadd.f32 %v1381, %v1631
    %v1633 = vand.u32 %v429, 4294901760
    %1634 = vmatmul.f32.gmra.mxu0 %v1633
    %v1635 = vpop.f32.mrf.mxu0
    %v1636 = vadd.f32 %v1387, %v1635
    %v1637 = vand.u32 %v433, 4294901760
    %1638 = vmatmul.f32.gmra.mxu0 %v1637
    %v1639 = vpop.f32.mrf.mxu0
    %v1640 = vadd.f32 %v1393, %v1639
    %v1641 = vand.u32 %v437, 4294901760
    %1642 = vmatmul.f32.gmra.mxu0 %v1641
    %v1643 = vpop.f32.mrf.mxu0
    %v1644 = vadd.f32 %v1399, %v1643
    %v1645 = vand.u32 %v441, 4294901760
    %1646 = vmatmul.f32.gmra.mxu0 %v1645
    %v1647 = vpop.f32.mrf.mxu0
    %v1648 = vadd.f32 %v1405, %v1647
    %v1649 = vand.u32 %v445, 4294901760
    %1650 = vmatmul.f32.gmra.mxu0 %v1649
    %v1651 = vpop.f32.mrf.mxu0
    %v1652 = vadd.f32 %v1411, %v1651
    %v1653 = vand.u32 %v449, 4294901760
    %1654 = vmatmul.f32.gmra.mxu0 %v1653
    %v1655 = vpop.f32.mrf.mxu0
    %v1656 = vadd.f32 %v1417, %v1655
    %v1657 = vand.u32 %v453, 4294901760
    %1658 = vmatmul.f32.gmra.mxu0 %v1657
    %v1659 = vpop.f32.mrf.mxu0
    %v1660 = vadd.f32 %v1423, %v1659
    %v1661 = vand.u32 %v457, 4294901760
    %1662 = vmatmul.f32.gmra.mxu0 %v1661
    %v1663 = vpop.f32.mrf.mxu0
    %v1664 = vadd.f32 %v1429, %v1663
    %v1665 = vand.u32 %v461, 4294901760
    %1666 = vmatmul.f32.gmra.mxu0 %v1665
    %v1667 = vpop.f32.mrf.mxu0
    %v1668 = vadd.f32 %v1435, %v1667
    %v1669 = vand.u32 %v465, 4294901760
    %1670 = vmatmul.f32.gmra.mxu0 %v1669
    %v1671 = vpop.f32.mrf.mxu0
    %v1672 = vadd.f32 %v1441, %v1671
    %v1673 = vand.u32 %v469, 4294901760
    %1674 = vmatmul.f32.gmra.mxu0 %v1673
    %v1675 = vpop.f32.mrf.mxu0
    %v1676 = vadd.f32 %v1447, %v1675
    %v1677 = vand.u32 %v473, 4294901760
    %1678 = vmatmul.f32.gmra.mxu0 %v1677
    %v1679 = vpop.f32.mrf.mxu0
    %v1680 = vadd.f32 %v1453, %v1679
    %v1681 = vand.u32 %v477, 4294901760
    %1682 = vmatmul.f32.gmra.mxu0 %v1681
    %v1683 = vpop.f32.mrf.mxu0
    %v1684 = vadd.f32 %v1459, %v1683
    %v1685 = vand.u32 %v481, 4294901760
    %1686 = vmatmul.f32.gmra.mxu0 %v1685
    %v1687 = vpop.f32.mrf.mxu0
    %v1688 = vadd.f32 %v1465, %v1687
    %v1689 = vand.u32 %v485, 4294901760
    %1690 = vmatmul.f32.gmra.mxu0 %v1689
    %v1691 = vpop.f32.mrf.mxu0
    %v1692 = vadd.f32 %v1471, %v1691
    %v1693 = vand.u32 %v489, 4294901760
    %1694 = vmatmul.f32.gmra.mxu0 %v1693
    %v1695 = vpop.f32.mrf.mxu0
    %v1696 = vadd.f32 %v1477, %v1695
    %v1697 = vand.u32 %v493, 4294901760
    %1698 = vmatmul.f32.gmra.mxu0 %v1697
    %v1699 = vpop.f32.mrf.mxu0
    %v1700 = vadd.f32 %v1483, %v1699
    %v1701 = vand.u32 %v497, 4294901760
    %1702 = vmatmul.f32.gmra.mxu0 %v1701
    %v1703 = vpop.f32.mrf.mxu0
    %v1704 = vadd.f32 %v1489, %v1703
    %v1705 = vand.u32 %v501, 4294901760
    %1706 = vmatmul.f32.gmra.mxu0 %v1705
    %v1707 = vpop.f32.mrf.mxu0
    %v1708 = vadd.f32 %v1495, %v1707
    %v1709 = vand.u32 %v505, 4294901760
    %1710 = vmatmul.f32.gmra.mxu0 %v1709
    %v1711 = vpop.f32.mrf.mxu0
    %v1712 = vadd.f32 %v1501, %v1711
    %v1713 = vand.u32 %v509, 4294901760
    %1714 = vmatmul.f32.gmra.mxu0 %v1713
    %v1715 = vpop.f32.mrf.mxu0
    %v1716 = vadd.f32 %v1507, %v1715
    %v1717 = vand.u32 %v513, 4294901760
    %1718 = vmatmul.f32.gmra.mxu0 %v1717
    %v1719 = vpop.f32.mrf.mxu0
    %v1720 = vadd.f32 %v1513, %v1719
    %v1721 = vand.u32 %v517, 4294901760
    %1722 = vmatmul.f32.gmra.mxu0 %v1721
    %v1723 = vpop.f32.mrf.mxu0
    %v1724 = vadd.f32 %v1519, %v1723
    %v1725 = vand.u32 %v521, 4294901760
    %1726 = vmatmul.f32.gmra.mxu0 %v1725
    %v1727 = vpop.f32.mrf.mxu0
    %v1728 = vadd.f32 %v1525, %v1727
    %v1729 = vand.u32 %v525, 4294901760
    %1730 = vmatmul.f32.gmra.mxu0 %v1729
    %v1731 = vpop.f32.mrf.mxu0
    %v1732 = vadd.f32 %v1531, %v1731
    %v1733 = vand.u32 %v529, 4294901760
    %1734 = vmatmul.f32.gmra.mxu0 %v1733
    %v1735 = vpop.f32.mrf.mxu0
    %v1736 = vadd.f32 %v1537, %v1735
    %v1737 = vand.u32 %v533, 4294901760
    %1738 = vmatmul.f32.gmra.mxu0 %v1737
    %v1739 = vpop.f32.mrf.mxu0
    %v1740 = vadd.f32 %v1543, %v1739
    %v1741 = vand.u32 %v537, 4294901760
    %1742 = vmatmul.f32.gmra.mxu0 %v1741
    %v1743 = vpop.f32.mrf.mxu0
    %v1744 = vadd.f32 %v1549, %v1743
    %v1745 = vand.u32 %v541, 4294901760
    %1746 = vmatmul.f32.gmra.mxu0 %v1745
    %v1747 = vpop.f32.mrf.mxu0
    %v1748 = vadd.f32 %v1555, %v1747
    %1749 = vdwg.mxu0
    %v1750 = vand.u32 %v560, 4294901760
    %1751 = vmatpush.msra.mxu0 %v1750
    %v1752 = vand.u32 %v559, 4294901760
    %1753 = vmatpush.msra.mxu0 %v1752
    %v1754 = vand.u32 %v558, 4294901760
    %1755 = vmatpush.msra.mxu0 %v1754
    %v1756 = vand.u32 %v557, 4294901760
    %1757 = vmatpush.msra.mxu0 %v1756
    %v1758 = vand.u32 %v556, 4294901760
    %1759 = vmatpush.msra.mxu0 %v1758
    %v1760 = vand.u32 %v555, 4294901760
    %1761 = vmatpush.msra.mxu0 %v1760
    %v1762 = vand.u32 %v554, 4294901760
    %1763 = vmatpush.msra.mxu0 %v1762
    %v1764 = vand.u32 %v553, 4294901760
    %1765 = vmatpush.msra.mxu0 %v1764
    %v1766 = vand.u32 %v552, 4294901760
    %1767 = vmatpush.msra.mxu0 %v1766
    %v1768 = vand.u32 %v551, 4294901760
    %1769 = vmatpush.msra.mxu0 %v1768
    %v1770 = vand.u32 %v550, 4294901760
    %1771 = vmatpush.msra.mxu0 %v1770
    %v1772 = vand.u32 %v549, 4294901760
    %1773 = vmatpush.msra.mxu0 %v1772
    %v1774 = vand.u32 %v548, 4294901760
    %1775 = vmatpush.msra.mxu0 %v1774
    %v1776 = vand.u32 %v547, 4294901760
    %1777 = vmatpush.msra.mxu0 %v1776
    %v1778 = vand.u32 %v546, 4294901760
    %1779 = vmatpush.msra.mxu0 %v1778
    %v1780 = vand.u32 %v545, 4294901760
    %1781 = vmatpush.msra.mxu0 %v1780
    %v1782 = vand.u32 %v417, 4294901760
    %1783 = vmatmul.f32.gmra.mxu0 %v1782
    %v1784 = vpop.f32.mrf.mxu0
    %v1785 = vadd.f32 %v1624, %v1784
    %v1786 = vand.u32 %v421, 4294901760
    %1787 = vmatmul.f32.gmra.mxu0 %v1786
    %v1788 = vpop.f32.mrf.mxu0
    %v1789 = vadd.f32 %v1628, %v1788
    %v1790 = vand.u32 %v425, 4294901760
    %1791 = vmatmul.f32.gmra.mxu0 %v1790
    %v1792 = vpop.f32.mrf.mxu0
    %v1793 = vadd.f32 %v1632, %v1792
    %v1794 = vand.u32 %v429, 4294901760
    %1795 = vmatmul.f32.gmra.mxu0 %v1794
    %v1796 = vpop.f32.mrf.mxu0
    %v1797 = vadd.f32 %v1636, %v1796
    %v1798 = vand.u32 %v433, 4294901760
    %1799 = vmatmul.f32.gmra.mxu0 %v1798
    %v1800 = vpop.f32.mrf.mxu0
    %v1801 = vadd.f32 %v1640, %v1800
    %v1802 = vand.u32 %v437, 4294901760
    %1803 = vmatmul.f32.gmra.mxu0 %v1802
    %v1804 = vpop.f32.mrf.mxu0
    %v1805 = vadd.f32 %v1644, %v1804
    %v1806 = vand.u32 %v441, 4294901760
    %1807 = vmatmul.f32.gmra.mxu0 %v1806
    %v1808 = vpop.f32.mrf.mxu0
    %v1809 = vadd.f32 %v1648, %v1808
    %v1810 = vand.u32 %v445, 4294901760
    %1811 = vmatmul.f32.gmra.mxu0 %v1810
    %v1812 = vpop.f32.mrf.mxu0
    %v1813 = vadd.f32 %v1652, %v1812
    %v1814 = vand.u32 %v449, 4294901760
    %1815 = vmatmul.f32.gmra.mxu0 %v1814
    %v1816 = vpop.f32.mrf.mxu0
    %v1817 = vadd.f32 %v1656, %v1816
    %v1818 = vand.u32 %v453, 4294901760
    %1819 = vmatmul.f32.gmra.mxu0 %v1818
    %v1820 = vpop.f32.mrf.mxu0
    %v1821 = vadd.f32 %v1660, %v1820
    %v1822 = vand.u32 %v457, 4294901760
    %1823 = vmatmul.f32.gmra.mxu0 %v1822
    %v1824 = vpop.f32.mrf.mxu0
    %v1825 = vadd.f32 %v1664, %v1824
    %v1826 = vand.u32 %v461, 4294901760
    %1827 = vmatmul.f32.gmra.mxu0 %v1826
    %v1828 = vpop.f32.mrf.mxu0
    %v1829 = vadd.f32 %v1668, %v1828
    %v1830 = vand.u32 %v465, 4294901760
    %1831 = vmatmul.f32.gmra.mxu0 %v1830
    %v1832 = vpop.f32.mrf.mxu0
    %v1833 = vadd.f32 %v1672, %v1832
    %v1834 = vand.u32 %v469, 4294901760
    %1835 = vmatmul.f32.gmra.mxu0 %v1834
    %v1836 = vpop.f32.mrf.mxu0
    %v1837 = vadd.f32 %v1676, %v1836
    %v1838 = vand.u32 %v473, 4294901760
    %1839 = vmatmul.f32.gmra.mxu0 %v1838
    %v1840 = vpop.f32.mrf.mxu0
    %v1841 = vadd.f32 %v1680, %v1840
    %v1842 = vand.u32 %v477, 4294901760
    %1843 = vmatmul.f32.gmra.mxu0 %v1842
    %v1844 = vpop.f32.mrf.mxu0
    %v1845 = vadd.f32 %v1684, %v1844
    %v1846 = vand.u32 %v481, 4294901760
    %1847 = vmatmul.f32.gmra.mxu0 %v1846
    %v1848 = vpop.f32.mrf.mxu0
    %v1849 = vadd.f32 %v1688, %v1848
    %v1850 = vand.u32 %v485, 4294901760
    %1851 = vmatmul.f32.gmra.mxu0 %v1850
    %v1852 = vpop.f32.mrf.mxu0
    %v1853 = vadd.f32 %v1692, %v1852
    %v1854 = vand.u32 %v489, 4294901760
    %1855 = vmatmul.f32.gmra.mxu0 %v1854
    %v1856 = vpop.f32.mrf.mxu0
    %v1857 = vadd.f32 %v1696, %v1856
    %v1858 = vand.u32 %v493, 4294901760
    %1859 = vmatmul.f32.gmra.mxu0 %v1858
    %v1860 = vpop.f32.mrf.mxu0
    %v1861 = vadd.f32 %v1700, %v1860
    %v1862 = vand.u32 %v497, 4294901760
    %1863 = vmatmul.f32.gmra.mxu0 %v1862
    %v1864 = vpop.f32.mrf.mxu0
    %v1865 = vadd.f32 %v1704, %v1864
    %v1866 = vand.u32 %v501, 4294901760
    %1867 = vmatmul.f32.gmra.mxu0 %v1866
    %v1868 = vpop.f32.mrf.mxu0
    %v1869 = vadd.f32 %v1708, %v1868
    %v1870 = vand.u32 %v505, 4294901760
    %1871 = vmatmul.f32.gmra.mxu0 %v1870
    %v1872 = vpop.f32.mrf.mxu0
    %v1873 = vadd.f32 %v1712, %v1872
    %v1874 = vand.u32 %v509, 4294901760
    %1875 = vmatmul.f32.gmra.mxu0 %v1874
    %v1876 = vpop.f32.mrf.mxu0
    %v1877 = vadd.f32 %v1716, %v1876
    %v1878 = vand.u32 %v513, 4294901760
    %1879 = vmatmul.f32.gmra.mxu0 %v1878
    %v1880 = vpop.f32.mrf.mxu0
    %v1881 = vadd.f32 %v1720, %v1880
    %v1882 = vand.u32 %v517, 4294901760
    %1883 = vmatmul.f32.gmra.mxu0 %v1882
    %v1884 = vpop.f32.mrf.mxu0
    %v1885 = vadd.f32 %v1724, %v1884
    %v1886 = vand.u32 %v521, 4294901760
    %1887 = vmatmul.f32.gmra.mxu0 %v1886
    %v1888 = vpop.f32.mrf.mxu0
    %v1889 = vadd.f32 %v1728, %v1888
    %v1890 = vand.u32 %v525, 4294901760
    %1891 = vmatmul.f32.gmra.mxu0 %v1890
    %v1892 = vpop.f32.mrf.mxu0
    %v1893 = vadd.f32 %v1732, %v1892
    %v1894 = vand.u32 %v529, 4294901760
    %1895 = vmatmul.f32.gmra.mxu0 %v1894
    %v1896 = vpop.f32.mrf.mxu0
    %v1897 = vadd.f32 %v1736, %v1896
    %v1898 = vand.u32 %v533, 4294901760
    %1899 = vmatmul.f32.gmra.mxu0 %v1898
    %v1900 = vpop.f32.mrf.mxu0
    %v1901 = vadd.f32 %v1740, %v1900
    %v1902 = vand.u32 %v537, 4294901760
    %1903 = vmatmul.f32.gmra.mxu0 %v1902
    %v1904 = vpop.f32.mrf.mxu0
    %v1905 = vadd.f32 %v1744, %v1904
    %v1906 = vand.u32 %v541, 4294901760
    %1907 = vmatmul.f32.gmra.mxu0 %v1906
    %v1908 = vpop.f32.mrf.mxu0
    %v1909 = vadd.f32 %v1748, %v1908
    %1910 = vdwg.mxu0
    %v1911 = vand.u32 %v576, 4294901760
    %1912 = vmatpush.msra.mxu0 %v1911
    %v1913 = vand.u32 %v575, 4294901760
    %1914 = vmatpush.msra.mxu0 %v1913
    %v1915 = vand.u32 %v574, 4294901760
    %1916 = vmatpush.msra.mxu0 %v1915
    %v1917 = vand.u32 %v573, 4294901760
    %1918 = vmatpush.msra.mxu0 %v1917
    %v1919 = vand.u32 %v572, 4294901760
    %1920 = vmatpush.msra.mxu0 %v1919
    %v1921 = vand.u32 %v571, 4294901760
    %1922 = vmatpush.msra.mxu0 %v1921
    %v1923 = vand.u32 %v570, 4294901760
    %1924 = vmatpush.msra.mxu0 %v1923
    %v1925 = vand.u32 %v569, 4294901760
    %1926 = vmatpush.msra.mxu0 %v1925
    %v1927 = vand.u32 %v568, 4294901760
    %1928 = vmatpush.msra.mxu0 %v1927
    %v1929 = vand.u32 %v567, 4294901760
    %1930 = vmatpush.msra.mxu0 %v1929
    %v1931 = vand.u32 %v566, 4294901760
    %1932 = vmatpush.msra.mxu0 %v1931
    %v1933 = vand.u32 %v565, 4294901760
    %1934 = vmatpush.msra.mxu0 %v1933
    %v1935 = vand.u32 %v564, 4294901760
    %1936 = vmatpush.msra.mxu0 %v1935
    %v1937 = vand.u32 %v563, 4294901760
    %1938 = vmatpush.msra.mxu0 %v1937
    %v1939 = vand.u32 %v562, 4294901760
    %1940 = vmatpush.msra.mxu0 %v1939
    %v1941 = vand.u32 %v561, 4294901760
    %1942 = vmatpush.msra.mxu0 %v1941
    %v1943 = vand.u32 %v418, 4294901760
    %v1944 = vsub.f32 %v418, %v1943
    %v1945 = vand.u32 %v1944, 4294901760
    %v1946 = vsub.f32 %v1944, %v1945
    %v1947 = vand.u32 %v1946, 4294901760
    %1948 = vmatmul.f32.gmra.mxu0 %v1947
    %v1949 = vpop.f32.mrf.mxu0
    %v1950 = vadd.f32 %v1785, %v1949
    %v1951 = vand.u32 %v422, 4294901760
    %v1952 = vsub.f32 %v422, %v1951
    %v1953 = vand.u32 %v1952, 4294901760
    %v1954 = vsub.f32 %v1952, %v1953
    %v1955 = vand.u32 %v1954, 4294901760
    %1956 = vmatmul.f32.gmra.mxu0 %v1955
    %v1957 = vpop.f32.mrf.mxu0
    %v1958 = vadd.f32 %v1789, %v1957
    %v1959 = vand.u32 %v426, 4294901760
    %v1960 = vsub.f32 %v426, %v1959
    %v1961 = vand.u32 %v1960, 4294901760
    %v1962 = vsub.f32 %v1960, %v1961
    %v1963 = vand.u32 %v1962, 4294901760
    %1964 = vmatmul.f32.gmra.mxu0 %v1963
    %v1965 = vpop.f32.mrf.mxu0
    %v1966 = vadd.f32 %v1793, %v1965
    %v1967 = vand.u32 %v430, 4294901760
    %v1968 = vsub.f32 %v430, %v1967
    %v1969 = vand.u32 %v1968, 4294901760
    %v1970 = vsub.f32 %v1968, %v1969
    %v1971 = vand.u32 %v1970, 4294901760
    %1972 = vmatmul.f32.gmra.mxu0 %v1971
    %v1973 = vpop.f32.mrf.mxu0
    %v1974 = vadd.f32 %v1797, %v1973
    %v1975 = vand.u32 %v434, 4294901760
    %v1976 = vsub.f32 %v434, %v1975
    %v1977 = vand.u32 %v1976, 4294901760
    %v1978 = vsub.f32 %v1976, %v1977
    %v1979 = vand.u32 %v1978, 4294901760
    %1980 = vmatmul.f32.gmra.mxu0 %v1979
    %v1981 = vpop.f32.mrf.mxu0
    %v1982 = vadd.f32 %v1801, %v1981
    %v1983 = vand.u32 %v438, 4294901760
    %v1984 = vsub.f32 %v438, %v1983
    %v1985 = vand.u32 %v1984, 4294901760
    %v1986 = vsub.f32 %v1984, %v1985
    %v1987 = vand.u32 %v1986, 4294901760
    %1988 = vmatmul.f32.gmra.mxu0 %v1987
    %v1989 = vpop.f32.mrf.mxu0
    %v1990 = vadd.f32 %v1805, %v1989
    %v1991 = vand.u32 %v442, 4294901760
    %v1992 = vsub.f32 %v442, %v1991
    %v1993 = vand.u32 %v1992, 4294901760
    %v1994 = vsub.f32 %v1992, %v1993
    %v1995 = vand.u32 %v1994, 4294901760
    %1996 = vmatmul.f32.gmra.mxu0 %v1995
    %v1997 = vpop.f32.mrf.mxu0
    %v1998 = vadd.f32 %v1809, %v1997
    %v1999 = vand.u32 %v446, 4294901760
    %v2000 = vsub.f32 %v446, %v1999
    %v2001 = vand.u32 %v2000, 4294901760
    %v2002 = vsub.f32 %v2000, %v2001
    %v2003 = vand.u32 %v2002, 4294901760
    %2004 = vmatmul.f32.gmra.mxu0 %v2003
    %v2005 = vpop.f32.mrf.mxu0
    %v2006 = vadd.f32 %v1813, %v2005
    %v2007 = vand.u32 %v450, 4294901760
    %v2008 = vsub.f32 %v450, %v2007
    %v2009 = vand.u32 %v2008, 4294901760
    %v2010 = vsub.f32 %v2008, %v2009
    %v2011 = vand.u32 %v2010, 4294901760
    %2012 = vmatmul.f32.gmra.mxu0 %v2011
    %v2013 = vpop.f32.mrf.mxu0
    %v2014 = vadd.f32 %v1817, %v2013
    %v2015 = vand.u32 %v454, 4294901760
    %v2016 = vsub.f32 %v454, %v2015
    %v2017 = vand.u32 %v2016, 4294901760
    %v2018 = vsub.f32 %v2016, %v2017
    %v2019 = vand.u32 %v2018, 4294901760
    %2020 = vmatmul.f32.gmra.mxu0 %v2019
    %v2021 = vpop.f32.mrf.mxu0
    %v2022 = vadd.f32 %v1821, %v2021
    %v2023 = vand.u32 %v458, 4294901760
    %v2024 = vsub.f32 %v458, %v2023
    %v2025 = vand.u32 %v2024, 4294901760
    %v2026 = vsub.f32 %v2024, %v2025
    %v2027 = vand.u32 %v2026, 4294901760
    %2028 = vmatmul.f32.gmra.mxu0 %v2027
    %v2029 = vpop.f32.mrf.mxu0
    %v2030 = vadd.f32 %v1825, %v2029
    %v2031 = vand.u32 %v462, 4294901760
    %v2032 = vsub.f32 %v462, %v2031
    %v2033 = vand.u32 %v2032, 4294901760
    %v2034 = vsub.f32 %v2032, %v2033
    %v2035 = vand.u32 %v2034, 4294901760
    %2036 = vmatmul.f32.gmra.mxu0 %v2035
    %v2037 = vpop.f32.mrf.mxu0
    %v2038 = vadd.f32 %v1829, %v2037
    %v2039 = vand.u32 %v466, 4294901760
    %v2040 = vsub.f32 %v466, %v2039
    %v2041 = vand.u32 %v2040, 4294901760
    %v2042 = vsub.f32 %v2040, %v2041
    %v2043 = vand.u32 %v2042, 4294901760
    %2044 = vmatmul.f32.gmra.mxu0 %v2043
    %v2045 = vpop.f32.mrf.mxu0
    %v2046 = vadd.f32 %v1833, %v2045
    %v2047 = vand.u32 %v470, 4294901760
    %v2048 = vsub.f32 %v470, %v2047
    %v2049 = vand.u32 %v2048, 4294901760
    %v2050 = vsub.f32 %v2048, %v2049
    %v2051 = vand.u32 %v2050, 4294901760
    %2052 = vmatmul.f32.gmra.mxu0 %v2051
    %v2053 = vpop.f32.mrf.mxu0
    %v2054 = vadd.f32 %v1837, %v2053
    %v2055 = vand.u32 %v474, 4294901760
    %v2056 = vsub.f32 %v474, %v2055
    %v2057 = vand.u32 %v2056, 4294901760
    %v2058 = vsub.f32 %v2056, %v2057
    %v2059 = vand.u32 %v2058, 4294901760
    %2060 = vmatmul.f32.gmra.mxu0 %v2059
    %v2061 = vpop.f32.mrf.mxu0
    %v2062 = vadd.f32 %v1841, %v2061
    %v2063 = vand.u32 %v478, 4294901760
    %v2064 = vsub.f32 %v478, %v2063
    %v2065 = vand.u32 %v2064, 4294901760
    %v2066 = vsub.f32 %v2064, %v2065
    %v2067 = vand.u32 %v2066, 4294901760
    %2068 = vmatmul.f32.gmra.mxu0 %v2067
    %v2069 = vpop.f32.mrf.mxu0
    %v2070 = vadd.f32 %v1845, %v2069
    %v2071 = vand.u32 %v482, 4294901760
    %v2072 = vsub.f32 %v482, %v2071
    %v2073 = vand.u32 %v2072, 4294901760
    %v2074 = vsub.f32 %v2072, %v2073
    %v2075 = vand.u32 %v2074, 4294901760
    %2076 = vmatmul.f32.gmra.mxu0 %v2075
    %v2077 = vpop.f32.mrf.mxu0
    %v2078 = vadd.f32 %v1849, %v2077
    %v2079 = vand.u32 %v486, 4294901760
    %v2080 = vsub.f32 %v486, %v2079
    %v2081 = vand.u32 %v2080, 4294901760
    %v2082 = vsub.f32 %v2080, %v2081
    %v2083 = vand.u32 %v2082, 4294901760
    %2084 = vmatmul.f32.gmra.mxu0 %v2083
    %v2085 = vpop.f32.mrf.mxu0
    %v2086 = vadd.f32 %v1853, %v2085
    %v2087 = vand.u32 %v490, 4294901760
    %v2088 = vsub.f32 %v490, %v2087
    %v2089 = vand.u32 %v2088, 4294901760
    %v2090 = vsub.f32 %v2088, %v2089
    %v2091 = vand.u32 %v2090, 4294901760
    %2092 = vmatmul.f32.gmra.mxu0 %v2091
    %v2093 = vpop.f32.mrf.mxu0
    %v2094 = vadd.f32 %v1857, %v2093
    %v2095 = vand.u32 %v494, 4294901760
    %v2096 = vsub.f32 %v494, %v2095
    %v2097 = vand.u32 %v2096, 4294901760
    %v2098 = vsub.f32 %v2096, %v2097
    %v2099 = vand.u32 %v2098, 4294901760
    %2100 = vmatmul.f32.gmra.mxu0 %v2099
    %v2101 = vpop.f32.mrf.mxu0
    %v2102 = vadd.f32 %v1861, %v2101
    %v2103 = vand.u32 %v498, 4294901760
    %v2104 = vsub.f32 %v498, %v2103
    %v2105 = vand.u32 %v2104, 4294901760
    %v2106 = vsub.f32 %v2104, %v2105
    %v2107 = vand.u32 %v2106, 4294901760
    %2108 = vmatmul.f32.gmra.mxu0 %v2107
    %v2109 = vpop.f32.mrf.mxu0
    %v2110 = vadd.f32 %v1865, %v2109
    %v2111 = vand.u32 %v502, 4294901760
    %v2112 = vsub.f32 %v502, %v2111
    %v2113 = vand.u32 %v2112, 4294901760
    %v2114 = vsub.f32 %v2112, %v2113
    %v2115 = vand.u32 %v2114, 4294901760
    %2116 = vmatmul.f32.gmra.mxu0 %v2115
    %v2117 = vpop.f32.mrf.mxu0
    %v2118 = vadd.f32 %v1869, %v2117
    %v2119 = vand.u32 %v506, 4294901760
    %v2120 = vsub.f32 %v506, %v2119
    %v2121 = vand.u32 %v2120, 4294901760
    %v2122 = vsub.f32 %v2120, %v2121
    %v2123 = vand.u32 %v2122, 4294901760
    %2124 = vmatmul.f32.gmra.mxu0 %v2123
    %v2125 = vpop.f32.mrf.mxu0
    %v2126 = vadd.f32 %v1873, %v2125
    %v2127 = vand.u32 %v510, 4294901760
    %v2128 = vsub.f32 %v510, %v2127
    %v2129 = vand.u32 %v2128, 4294901760
    %v2130 = vsub.f32 %v2128, %v2129
    %v2131 = vand.u32 %v2130, 4294901760
    %2132 = vmatmul.f32.gmra.mxu0 %v2131
    %v2133 = vpop.f32.mrf.mxu0
    %v2134 = vadd.f32 %v1877, %v2133
    %v2135 = vand.u32 %v514, 4294901760
    %v2136 = vsub.f32 %v514, %v2135
    %v2137 = vand.u32 %v2136, 4294901760
    %v2138 = vsub.f32 %v2136, %v2137
    %v2139 = vand.u32 %v2138, 4294901760
    %2140 = vmatmul.f32.gmra.mxu0 %v2139
    %v2141 = vpop.f32.mrf.mxu0
    %v2142 = vadd.f32 %v1881, %v2141
    %v2143 = vand.u32 %v518, 4294901760
    %v2144 = vsub.f32 %v518, %v2143
    %v2145 = vand.u32 %v2144, 4294901760
    %v2146 = vsub.f32 %v2144, %v2145
    %v2147 = vand.u32 %v2146, 4294901760
    %2148 = vmatmul.f32.gmra.mxu0 %v2147
    %v2149 = vpop.f32.mrf.mxu0
    %v2150 = vadd.f32 %v1885, %v2149
    %v2151 = vand.u32 %v522, 4294901760
    %v2152 = vsub.f32 %v522, %v2151
    %v2153 = vand.u32 %v2152, 4294901760
    %v2154 = vsub.f32 %v2152, %v2153
    %v2155 = vand.u32 %v2154, 4294901760
    %2156 = vmatmul.f32.gmra.mxu0 %v2155
    %v2157 = vpop.f32.mrf.mxu0
    %v2158 = vadd.f32 %v1889, %v2157
    %v2159 = vand.u32 %v526, 4294901760
    %v2160 = vsub.f32 %v526, %v2159
    %v2161 = vand.u32 %v2160, 4294901760
    %v2162 = vsub.f32 %v2160, %v2161
    %v2163 = vand.u32 %v2162, 4294901760
    %2164 = vmatmul.f32.gmra.mxu0 %v2163
    %v2165 = vpop.f32.mrf.mxu0
    %v2166 = vadd.f32 %v1893, %v2165
    %v2167 = vand.u32 %v530, 4294901760
    %v2168 = vsub.f32 %v530, %v2167
    %v2169 = vand.u32 %v2168, 4294901760
    %v2170 = vsub.f32 %v2168, %v2169
    %v2171 = vand.u32 %v2170, 4294901760
    %2172 = vmatmul.f32.gmra.mxu0 %v2171
    %v2173 = vpop.f32.mrf.mxu0
    %v2174 = vadd.f32 %v1897, %v2173
    %v2175 = vand.u32 %v534, 4294901760
    %v2176 = vsub.f32 %v534, %v2175
    %v2177 = vand.u32 %v2176, 4294901760
    %v2178 = vsub.f32 %v2176, %v2177
    %v2179 = vand.u32 %v2178, 4294901760
    %2180 = vmatmul.f32.gmra.mxu0 %v2179
    %v2181 = vpop.f32.mrf.mxu0
    %v2182 = vadd.f32 %v1901, %v2181
    %v2183 = vand.u32 %v538, 4294901760
    %v2184 = vsub.f32 %v538, %v2183
    %v2185 = vand.u32 %v2184, 4294901760
    %v2186 = vsub.f32 %v2184, %v2185
    %v2187 = vand.u32 %v2186, 4294901760
    %2188 = vmatmul.f32.gmra.mxu0 %v2187
    %v2189 = vpop.f32.mrf.mxu0
    %v2190 = vadd.f32 %v1905, %v2189
    %v2191 = vand.u32 %v542, 4294901760
    %v2192 = vsub.f32 %v542, %v2191
    %v2193 = vand.u32 %v2192, 4294901760
    %v2194 = vsub.f32 %v2192, %v2193
    %v2195 = vand.u32 %v2194, 4294901760
    %2196 = vmatmul.f32.gmra.mxu0 %v2195
    %v2197 = vpop.f32.mrf.mxu0
    %v2198 = vadd.f32 %v1909, %v2197
    %2199 = vdwg.mxu0
    %v2200 = vand.u32 %v576, 4294901760
    %v2201 = vsub.f32 %v576, %v2200
    %v2202 = vand.u32 %v2201, 4294901760
    %v2203 = vsub.f32 %v2201, %v2202
    %v2204 = vand.u32 %v2203, 4294901760
    %2205 = vmatpush.msra.mxu0 %v2204
    %v2206 = vand.u32 %v575, 4294901760
    %v2207 = vsub.f32 %v575, %v2206
    %v2208 = vand.u32 %v2207, 4294901760
    %v2209 = vsub.f32 %v2207, %v2208
    %v2210 = vand.u32 %v2209, 4294901760
    %2211 = vmatpush.msra.mxu0 %v2210
    %v2212 = vand.u32 %v574, 4294901760
    %v2213 = vsub.f32 %v574, %v2212
    %v2214 = vand.u32 %v2213, 4294901760
    %v2215 = vsub.f32 %v2213, %v2214
    %v2216 = vand.u32 %v2215, 4294901760
    %2217 = vmatpush.msra.mxu0 %v2216
    %v2218 = vand.u32 %v573, 4294901760
    %v2219 = vsub.f32 %v573, %v2218
    %v2220 = vand.u32 %v2219, 4294901760
    %v2221 = vsub.f32 %v2219, %v2220
    %v2222 = vand.u32 %v2221, 4294901760
    %2223 = vmatpush.msra.mxu0 %v2222
    %v2224 = vand.u32 %v572, 4294901760
    %v2225 = vsub.f32 %v572, %v2224
    %v2226 = vand.u32 %v2225, 4294901760
    %v2227 = vsub.f32 %v2225, %v2226
    %v2228 = vand.u32 %v2227, 4294901760
    %2229 = vmatpush.msra.mxu0 %v2228
    %v2230 = vand.u32 %v571, 4294901760
    %v2231 = vsub.f32 %v571, %v2230
    %v2232 = vand.u32 %v2231, 4294901760
    %v2233 = vsub.f32 %v2231, %v2232
    %v2234 = vand.u32 %v2233, 4294901760
    %2235 = vmatpush.msra.mxu0 %v2234
    %v2236 = vand.u32 %v570, 4294901760
    %v2237 = vsub.f32 %v570, %v2236
    %v2238 = vand.u32 %v2237, 4294901760
    %v2239 = vsub.f32 %v2237, %v2238
    %v2240 = vand.u32 %v2239, 4294901760
    %2241 = vmatpush.msra.mxu0 %v2240
    %v2242 = vand.u32 %v569, 4294901760
    %v2243 = vsub.f32 %v569, %v2242
    %v2244 = vand.u32 %v2243, 4294901760
    %v2245 = vsub.f32 %v2243, %v2244
    %v2246 = vand.u32 %v2245, 4294901760
    %2247 = vmatpush.msra.mxu0 %v2246
    %v2248 = vand.u32 %v568, 4294901760
    %v2249 = vsub.f32 %v568, %v2248
    %v2250 = vand.u32 %v2249, 4294901760
    %v2251 = vsub.f32 %v2249, %v2250
    %v2252 = vand.u32 %v2251, 4294901760
    %2253 = vmatpush.msra.mxu0 %v2252
    %v2254 = vand.u32 %v567, 4294901760
    %v2255 = vsub.f32 %v567, %v2254
    %v2256 = vand.u32 %v2255, 4294901760
    %v2257 = vsub.f32 %v2255, %v2256
    %v2258 = vand.u32 %v2257, 4294901760
    %2259 = vmatpush.msra.mxu0 %v2258
    %v2260 = vand.u32 %v566, 4294901760
    %v2261 = vsub.f32 %v566, %v2260
    %v2262 = vand.u32 %v2261, 4294901760
    %v2263 = vsub.f32 %v2261, %v2262
    %v2264 = vand.u32 %v2263, 4294901760
    %2265 = vmatpush.msra.mxu0 %v2264
    %v2266 = vand.u32 %v565, 4294901760
    %v2267 = vsub.f32 %v565, %v2266
    %v2268 = vand.u32 %v2267, 4294901760
    %v2269 = vsub.f32 %v2267, %v2268
    %v2270 = vand.u32 %v2269, 4294901760
    %2271 = vmatpush.msra.mxu0 %v2270
    %v2272 = vand.u32 %v564, 4294901760
    %v2273 = vsub.f32 %v564, %v2272
    %v2274 = vand.u32 %v2273, 4294901760
    %v2275 = vsub.f32 %v2273, %v2274
    %v2276 = vand.u32 %v2275, 4294901760
    %2277 = vmatpush.msra.mxu0 %v2276
    %v2278 = vand.u32 %v563, 4294901760
    %v2279 = vsub.f32 %v563, %v2278
    %v2280 = vand.u32 %v2279, 4294901760
    %v2281 = vsub.f32 %v2279, %v2280
    %v2282 = vand.u32 %v2281, 4294901760
    %2283 = vmatpush.msra.mxu0 %v2282
    %v2284 = vand.u32 %v562, 4294901760
    %v2285 = vsub.f32 %v562, %v2284
    %v2286 = vand.u32 %v2285, 4294901760
    %v2287 = vsub.f32 %v2285, %v2286
    %v2288 = vand.u32 %v2287, 4294901760
    %2289 = vmatpush.msra.mxu0 %v2288
    %v2290 = vand.u32 %v561, 4294901760
    %v2291 = vsub.f32 %v561, %v2290
    %v2292 = vand.u32 %v2291, 4294901760
    %v2293 = vsub.f32 %v2291, %v2292
    %v2294 = vand.u32 %v2293, 4294901760
    %2295 = vmatpush.msra.mxu0 %v2294
    %v2296 = vand.u32 %v418, 4294901760
    %2297 = vmatmul.f32.gmra.mxu0 %v2296
    %v2298 = vpop.f32.mrf.mxu0
    %v2299 = vadd.f32 %v1950, %v2298
    %v2300 = vand.u32 %v422, 4294901760
    %2301 = vmatmul.f32.gmra.mxu0 %v2300
    %v2302 = vpop.f32.mrf.mxu0
    %v2303 = vadd.f32 %v1958, %v2302
    %v2304 = vand.u32 %v426, 4294901760
    %2305 = vmatmul.f32.gmra.mxu0 %v2304
    %v2306 = vpop.f32.mrf.mxu0
    %v2307 = vadd.f32 %v1966, %v2306
    %v2308 = vand.u32 %v430, 4294901760
    %2309 = vmatmul.f32.gmra.mxu0 %v2308
    %v2310 = vpop.f32.mrf.mxu0
    %v2311 = vadd.f32 %v1974, %v2310
    %v2312 = vand.u32 %v434, 4294901760
    %2313 = vmatmul.f32.gmra.mxu0 %v2312
    %v2314 = vpop.f32.mrf.mxu0
    %v2315 = vadd.f32 %v1982, %v2314
    %v2316 = vand.u32 %v438, 4294901760
    %2317 = vmatmul.f32.gmra.mxu0 %v2316
    %v2318 = vpop.f32.mrf.mxu0
    %v2319 = vadd.f32 %v1990, %v2318
    %v2320 = vand.u32 %v442, 4294901760
    %2321 = vmatmul.f32.gmra.mxu0 %v2320
    %v2322 = vpop.f32.mrf.mxu0
    %v2323 = vadd.f32 %v1998, %v2322
    %v2324 = vand.u32 %v446, 4294901760
    %2325 = vmatmul.f32.gmra.mxu0 %v2324
    %v2326 = vpop.f32.mrf.mxu0
    %v2327 = vadd.f32 %v2006, %v2326
    %v2328 = vand.u32 %v450, 4294901760
    %2329 = vmatmul.f32.gmra.mxu0 %v2328
    %v2330 = vpop.f32.mrf.mxu0
    %v2331 = vadd.f32 %v2014, %v2330
    %v2332 = vand.u32 %v454, 4294901760
    %2333 = vmatmul.f32.gmra.mxu0 %v2332
    %v2334 = vpop.f32.mrf.mxu0
    %v2335 = vadd.f32 %v2022, %v2334
    %v2336 = vand.u32 %v458, 4294901760
    %2337 = vmatmul.f32.gmra.mxu0 %v2336
    %v2338 = vpop.f32.mrf.mxu0
    %v2339 = vadd.f32 %v2030, %v2338
    %v2340 = vand.u32 %v462, 4294901760
    %2341 = vmatmul.f32.gmra.mxu0 %v2340
    %v2342 = vpop.f32.mrf.mxu0
    %v2343 = vadd.f32 %v2038, %v2342
    %v2344 = vand.u32 %v466, 4294901760
    %2345 = vmatmul.f32.gmra.mxu0 %v2344
    %v2346 = vpop.f32.mrf.mxu0
    %v2347 = vadd.f32 %v2046, %v2346
    %v2348 = vand.u32 %v470, 4294901760
    %2349 = vmatmul.f32.gmra.mxu0 %v2348
    %v2350 = vpop.f32.mrf.mxu0
    %v2351 = vadd.f32 %v2054, %v2350
    %v2352 = vand.u32 %v474, 4294901760
    %2353 = vmatmul.f32.gmra.mxu0 %v2352
    %v2354 = vpop.f32.mrf.mxu0
    %v2355 = vadd.f32 %v2062, %v2354
    %v2356 = vand.u32 %v478, 4294901760
    %2357 = vmatmul.f32.gmra.mxu0 %v2356
    %v2358 = vpop.f32.mrf.mxu0
    %v2359 = vadd.f32 %v2070, %v2358
    %v2360 = vand.u32 %v482, 4294901760
    %2361 = vmatmul.f32.gmra.mxu0 %v2360
    %v2362 = vpop.f32.mrf.mxu0
    %v2363 = vadd.f32 %v2078, %v2362
    %v2364 = vand.u32 %v486, 4294901760
    %2365 = vmatmul.f32.gmra.mxu0 %v2364
    %v2366 = vpop.f32.mrf.mxu0
    %v2367 = vadd.f32 %v2086, %v2366
    %v2368 = vand.u32 %v490, 4294901760
    %2369 = vmatmul.f32.gmra.mxu0 %v2368
    %v2370 = vpop.f32.mrf.mxu0
    %v2371 = vadd.f32 %v2094, %v2370
    %v2372 = vand.u32 %v494, 4294901760
    %2373 = vmatmul.f32.gmra.mxu0 %v2372
    %v2374 = vpop.f32.mrf.mxu0
    %v2375 = vadd.f32 %v2102, %v2374
    %v2376 = vand.u32 %v498, 4294901760
    %2377 = vmatmul.f32.gmra.mxu0 %v2376
    %v2378 = vpop.f32.mrf.mxu0
    %v2379 = vadd.f32 %v2110, %v2378
    %v2380 = vand.u32 %v502, 4294901760
    %2381 = vmatmul.f32.gmra.mxu0 %v2380
    %v2382 = vpop.f32.mrf.mxu0
    %v2383 = vadd.f32 %v2118, %v2382
    %v2384 = vand.u32 %v506, 4294901760
    %2385 = vmatmul.f32.gmra.mxu0 %v2384
    %v2386 = vpop.f32.mrf.mxu0
    %v2387 = vadd.f32 %v2126, %v2386
    %v2388 = vand.u32 %v510, 4294901760
    %2389 = vmatmul.f32.gmra.mxu0 %v2388
    %v2390 = vpop.f32.mrf.mxu0
    %v2391 = vadd.f32 %v2134, %v2390
    %v2392 = vand.u32 %v514, 4294901760
    %2393 = vmatmul.f32.gmra.mxu0 %v2392
    %v2394 = vpop.f32.mrf.mxu0
    %v2395 = vadd.f32 %v2142, %v2394
    %v2396 = vand.u32 %v518, 4294901760
    %2397 = vmatmul.f32.gmra.mxu0 %v2396
    %v2398 = vpop.f32.mrf.mxu0
    %v2399 = vadd.f32 %v2150, %v2398
    %v2400 = vand.u32 %v522, 4294901760
    %2401 = vmatmul.f32.gmra.mxu0 %v2400
    %v2402 = vpop.f32.mrf.mxu0
    %v2403 = vadd.f32 %v2158, %v2402
    %v2404 = vand.u32 %v526, 4294901760
    %2405 = vmatmul.f32.gmra.mxu0 %v2404
    %v2406 = vpop.f32.mrf.mxu0
    %v2407 = vadd.f32 %v2166, %v2406
    %v2408 = vand.u32 %v530, 4294901760
    %2409 = vmatmul.f32.gmra.mxu0 %v2408
    %v2410 = vpop.f32.mrf.mxu0
    %v2411 = vadd.f32 %v2174, %v2410
    %v2412 = vand.u32 %v534, 4294901760
    %2413 = vmatmul.f32.gmra.mxu0 %v2412
    %v2414 = vpop.f32.mrf.mxu0
    %v2415 = vadd.f32 %v2182, %v2414
    %v2416 = vand.u32 %v538, 4294901760
    %2417 = vmatmul.f32.gmra.mxu0 %v2416
    %v2418 = vpop.f32.mrf.mxu0
    %v2419 = vadd.f32 %v2190, %v2418
    %v2420 = vand.u32 %v542, 4294901760
    %2421 = vmatmul.f32.gmra.mxu0 %v2420
    %v2422 = vpop.f32.mrf.mxu0
    %v2423 = vadd.f32 %v2198, %v2422
    %2424 = vdwg.mxu0
    %v2425 = vand.u32 %v576, 4294901760
    %v2426 = vsub.f32 %v576, %v2425
    %2427 = vmatpush.msra.mxu0 %v2426
    %v2428 = vand.u32 %v575, 4294901760
    %v2429 = vsub.f32 %v575, %v2428
    %2430 = vmatpush.msra.mxu0 %v2429
    %v2431 = vand.u32 %v574, 4294901760
    %v2432 = vsub.f32 %v574, %v2431
    %2433 = vmatpush.msra.mxu0 %v2432
    %v2434 = vand.u32 %v573, 4294901760
    %v2435 = vsub.f32 %v573, %v2434
    %2436 = vmatpush.msra.mxu0 %v2435
    %v2437 = vand.u32 %v572, 4294901760
    %v2438 = vsub.f32 %v572, %v2437
    %2439 = vmatpush.msra.mxu0 %v2438
    %v2440 = vand.u32 %v571, 4294901760
    %v2441 = vsub.f32 %v571, %v2440
    %2442 = vmatpush.msra.mxu0 %v2441
    %v2443 = vand.u32 %v570, 4294901760
    %v2444 = vsub.f32 %v570, %v2443
    %2445 = vmatpush.msra.mxu0 %v2444
    %v2446 = vand.u32 %v569, 4294901760
    %v2447 = vsub.f32 %v569, %v2446
    %2448 = vmatpush.msra.mxu0 %v2447
    %v2449 = vand.u32 %v568, 4294901760
    %v2450 = vsub.f32 %v568, %v2449
    %2451 = vmatpush.msra.mxu0 %v2450
    %v2452 = vand.u32 %v567, 4294901760
    %v2453 = vsub.f32 %v567, %v2452
    %2454 = vmatpush.msra.mxu0 %v2453
    %v2455 = vand.u32 %v566, 4294901760
    %v2456 = vsub.f32 %v566, %v2455
    %2457 = vmatpush.msra.mxu0 %v2456
    %v2458 = vand.u32 %v565, 4294901760
    %v2459 = vsub.f32 %v565, %v2458
    %2460 = vmatpush.msra.mxu0 %v2459
    %v2461 = vand.u32 %v564, 4294901760
    %v2462 = vsub.f32 %v564, %v2461
    %2463 = vmatpush.msra.mxu0 %v2462
    %v2464 = vand.u32 %v563, 4294901760
    %v2465 = vsub.f32 %v563, %v2464
    %2466 = vmatpush.msra.mxu0 %v2465
    %v2467 = vand.u32 %v562, 4294901760
    %v2468 = vsub.f32 %v562, %v2467
    %2469 = vmatpush.msra.mxu0 %v2468
    %v2470 = vand.u32 %v561, 4294901760
    %v2471 = vsub.f32 %v561, %v2470
    %2472 = vmatpush.msra.mxu0 %v2471
    %v2473 = vand.u32 %v418, 4294901760
    %v2474 = vsub.f32 %v418, %v2473
    %2475 = vmatmul.f32.gmra.mxu0 %v2474
    %v2476 = vpop.f32.mrf.mxu0
    %v2477 = vadd.f32 %v2299, %v2476
    %v2478 = vand.u32 %v422, 4294901760
    %v2479 = vsub.f32 %v422, %v2478
    %2480 = vmatmul.f32.gmra.mxu0 %v2479
    %v2481 = vpop.f32.mrf.mxu0
    %v2482 = vadd.f32 %v2303, %v2481
    %v2483 = vand.u32 %v426, 4294901760
    %v2484 = vsub.f32 %v426, %v2483
    %2485 = vmatmul.f32.gmra.mxu0 %v2484
    %v2486 = vpop.f32.mrf.mxu0
    %v2487 = vadd.f32 %v2307, %v2486
    %v2488 = vand.u32 %v430, 4294901760
    %v2489 = vsub.f32 %v430, %v2488
    %2490 = vmatmul.f32.gmra.mxu0 %v2489
    %v2491 = vpop.f32.mrf.mxu0
    %v2492 = vadd.f32 %v2311, %v2491
    %v2493 = vand.u32 %v434, 4294901760
    %v2494 = vsub.f32 %v434, %v2493
    %2495 = vmatmul.f32.gmra.mxu0 %v2494
    %v2496 = vpop.f32.mrf.mxu0
    %v2497 = vadd.f32 %v2315, %v2496
    %v2498 = vand.u32 %v438, 4294901760
    %v2499 = vsub.f32 %v438, %v2498
    %2500 = vmatmul.f32.gmra.mxu0 %v2499
    %v2501 = vpop.f32.mrf.mxu0
    %v2502 = vadd.f32 %v2319, %v2501
    %v2503 = vand.u32 %v442, 4294901760
    %v2504 = vsub.f32 %v442, %v2503
    %2505 = vmatmul.f32.gmra.mxu0 %v2504
    %v2506 = vpop.f32.mrf.mxu0
    %v2507 = vadd.f32 %v2323, %v2506
    %v2508 = vand.u32 %v446, 4294901760
    %v2509 = vsub.f32 %v446, %v2508
    %2510 = vmatmul.f32.gmra.mxu0 %v2509
    %v2511 = vpop.f32.mrf.mxu0
    %v2512 = vadd.f32 %v2327, %v2511
    %v2513 = vand.u32 %v450, 4294901760
    %v2514 = vsub.f32 %v450, %v2513
    %2515 = vmatmul.f32.gmra.mxu0 %v2514
    %v2516 = vpop.f32.mrf.mxu0
    %v2517 = vadd.f32 %v2331, %v2516
    %v2518 = vand.u32 %v454, 4294901760
    %v2519 = vsub.f32 %v454, %v2518
    %2520 = vmatmul.f32.gmra.mxu0 %v2519
    %v2521 = vpop.f32.mrf.mxu0
    %v2522 = vadd.f32 %v2335, %v2521
    %v2523 = vand.u32 %v458, 4294901760
    %v2524 = vsub.f32 %v458, %v2523
    %2525 = vmatmul.f32.gmra.mxu0 %v2524
    %v2526 = vpop.f32.mrf.mxu0
    %v2527 = vadd.f32 %v2339, %v2526
    %v2528 = vand.u32 %v462, 4294901760
    %v2529 = vsub.f32 %v462, %v2528
    %2530 = vmatmul.f32.gmra.mxu0 %v2529
    %v2531 = vpop.f32.mrf.mxu0
    %v2532 = vadd.f32 %v2343, %v2531
    %v2533 = vand.u32 %v466, 4294901760
    %v2534 = vsub.f32 %v466, %v2533
    %2535 = vmatmul.f32.gmra.mxu0 %v2534
    %v2536 = vpop.f32.mrf.mxu0
    %v2537 = vadd.f32 %v2347, %v2536
    %v2538 = vand.u32 %v470, 4294901760
    %v2539 = vsub.f32 %v470, %v2538
    %2540 = vmatmul.f32.gmra.mxu0 %v2539
    %v2541 = vpop.f32.mrf.mxu0
    %v2542 = vadd.f32 %v2351, %v2541
    %v2543 = vand.u32 %v474, 4294901760
    %v2544 = vsub.f32 %v474, %v2543
    %2545 = vmatmul.f32.gmra.mxu0 %v2544
    %v2546 = vpop.f32.mrf.mxu0
    %v2547 = vadd.f32 %v2355, %v2546
    %v2548 = vand.u32 %v478, 4294901760
    %v2549 = vsub.f32 %v478, %v2548
    %2550 = vmatmul.f32.gmra.mxu0 %v2549
    %v2551 = vpop.f32.mrf.mxu0
    %v2552 = vadd.f32 %v2359, %v2551
    %v2553 = vand.u32 %v482, 4294901760
    %v2554 = vsub.f32 %v482, %v2553
    %2555 = vmatmul.f32.gmra.mxu0 %v2554
    %v2556 = vpop.f32.mrf.mxu0
    %v2557 = vadd.f32 %v2363, %v2556
    %v2558 = vand.u32 %v486, 4294901760
    %v2559 = vsub.f32 %v486, %v2558
    %2560 = vmatmul.f32.gmra.mxu0 %v2559
    %v2561 = vpop.f32.mrf.mxu0
    %v2562 = vadd.f32 %v2367, %v2561
    %v2563 = vand.u32 %v490, 4294901760
    %v2564 = vsub.f32 %v490, %v2563
    %2565 = vmatmul.f32.gmra.mxu0 %v2564
    %v2566 = vpop.f32.mrf.mxu0
    %v2567 = vadd.f32 %v2371, %v2566
    %v2568 = vand.u32 %v494, 4294901760
    %v2569 = vsub.f32 %v494, %v2568
    %2570 = vmatmul.f32.gmra.mxu0 %v2569
    %v2571 = vpop.f32.mrf.mxu0
    %v2572 = vadd.f32 %v2375, %v2571
    %v2573 = vand.u32 %v498, 4294901760
    %v2574 = vsub.f32 %v498, %v2573
    %2575 = vmatmul.f32.gmra.mxu0 %v2574
    %v2576 = vpop.f32.mrf.mxu0
    %v2577 = vadd.f32 %v2379, %v2576
    %v2578 = vand.u32 %v502, 4294901760
    %v2579 = vsub.f32 %v502, %v2578
    %2580 = vmatmul.f32.gmra.mxu0 %v2579
    %v2581 = vpop.f32.mrf.mxu0
    %v2582 = vadd.f32 %v2383, %v2581
    %v2583 = vand.u32 %v506, 4294901760
    %v2584 = vsub.f32 %v506, %v2583
    %2585 = vmatmul.f32.gmra.mxu0 %v2584
    %v2586 = vpop.f32.mrf.mxu0
    %v2587 = vadd.f32 %v2387, %v2586
    %v2588 = vand.u32 %v510, 4294901760
    %v2589 = vsub.f32 %v510, %v2588
    %2590 = vmatmul.f32.gmra.mxu0 %v2589
    %v2591 = vpop.f32.mrf.mxu0
    %v2592 = vadd.f32 %v2391, %v2591
    %v2593 = vand.u32 %v514, 4294901760
    %v2594 = vsub.f32 %v514, %v2593
    %2595 = vmatmul.f32.gmra.mxu0 %v2594
    %v2596 = vpop.f32.mrf.mxu0
    %v2597 = vadd.f32 %v2395, %v2596
    %v2598 = vand.u32 %v518, 4294901760
    %v2599 = vsub.f32 %v518, %v2598
    %2600 = vmatmul.f32.gmra.mxu0 %v2599
    %v2601 = vpop.f32.mrf.mxu0
    %v2602 = vadd.f32 %v2399, %v2601
    %v2603 = vand.u32 %v522, 4294901760
    %v2604 = vsub.f32 %v522, %v2603
    %2605 = vmatmul.f32.gmra.mxu0 %v2604
    %v2606 = vpop.f32.mrf.mxu0
    %v2607 = vadd.f32 %v2403, %v2606
    %v2608 = vand.u32 %v526, 4294901760
    %v2609 = vsub.f32 %v526, %v2608
    %2610 = vmatmul.f32.gmra.mxu0 %v2609
    %v2611 = vpop.f32.mrf.mxu0
    %v2612 = vadd.f32 %v2407, %v2611
    %v2613 = vand.u32 %v530, 4294901760
    %v2614 = vsub.f32 %v530, %v2613
    %2615 = vmatmul.f32.gmra.mxu0 %v2614
    %v2616 = vpop.f32.mrf.mxu0
    %v2617 = vadd.f32 %v2411, %v2616
    %v2618 = vand.u32 %v534, 4294901760
    %v2619 = vsub.f32 %v534, %v2618
    %2620 = vmatmul.f32.gmra.mxu0 %v2619
    %v2621 = vpop.f32.mrf.mxu0
    %v2622 = vadd.f32 %v2415, %v2621
    %v2623 = vand.u32 %v538, 4294901760
    %v2624 = vsub.f32 %v538, %v2623
    %2625 = vmatmul.f32.gmra.mxu0 %v2624
    %v2626 = vpop.f32.mrf.mxu0
    %v2627 = vadd.f32 %v2419, %v2626
    %v2628 = vand.u32 %v542, 4294901760
    %v2629 = vsub.f32 %v542, %v2628
    %2630 = vmatmul.f32.gmra.mxu0 %v2629
    %v2631 = vpop.f32.mrf.mxu0
    %v2632 = vadd.f32 %v2423, %v2631
    %2633 = vdwg.mxu0
    %v2634 = vand.u32 %v576, 4294901760
    %2635 = vmatpush.msra.mxu0 %v2634
    %v2636 = vand.u32 %v575, 4294901760
    %2637 = vmatpush.msra.mxu0 %v2636
    %v2638 = vand.u32 %v574, 4294901760
    %2639 = vmatpush.msra.mxu0 %v2638
    %v2640 = vand.u32 %v573, 4294901760
    %2641 = vmatpush.msra.mxu0 %v2640
    %v2642 = vand.u32 %v572, 4294901760
    %2643 = vmatpush.msra.mxu0 %v2642
    %v2644 = vand.u32 %v571, 4294901760
    %2645 = vmatpush.msra.mxu0 %v2644
    %v2646 = vand.u32 %v570, 4294901760
    %2647 = vmatpush.msra.mxu0 %v2646
    %v2648 = vand.u32 %v569, 4294901760
    %2649 = vmatpush.msra.mxu0 %v2648
    %v2650 = vand.u32 %v568, 4294901760
    %2651 = vmatpush.msra.mxu0 %v2650
    %v2652 = vand.u32 %v567, 4294901760
    %2653 = vmatpush.msra.mxu0 %v2652
    %v2654 = vand.u32 %v566, 4294901760
    %2655 = vmatpush.msra.mxu0 %v2654
    %v2656 = vand.u32 %v565, 4294901760
    %2657 = vmatpush.msra.mxu0 %v2656
    %v2658 = vand.u32 %v564, 4294901760
    %2659 = vmatpush.msra.mxu0 %v2658
    %v2660 = vand.u32 %v563, 4294901760
    %2661 = vmatpush.msra.mxu0 %v2660
    %v2662 = vand.u32 %v562, 4294901760
    %2663 = vmatpush.msra.mxu0 %v2662
    %v2664 = vand.u32 %v561, 4294901760
    %2665 = vmatpush.msra.mxu0 %v2664
    %v2666 = vand.u32 %v418, 4294901760
    %v2667 = vsub.f32 %v418, %v2666
    %v2668 = vand.u32 %v2667, 4294901760
    %2669 = vmatmul.f32.gmra.mxu0 %v2668
    %v2670 = vpop.f32.mrf.mxu0
    %v2671 = vadd.f32 %v2477, %v2670
    %v2672 = vand.u32 %v422, 4294901760
    %v2673 = vsub.f32 %v422, %v2672
    %v2674 = vand.u32 %v2673, 4294901760
    %2675 = vmatmul.f32.gmra.mxu0 %v2674
    %v2676 = vpop.f32.mrf.mxu0
    %v2677 = vadd.f32 %v2482, %v2676
    %v2678 = vand.u32 %v426, 4294901760
    %v2679 = vsub.f32 %v426, %v2678
    %v2680 = vand.u32 %v2679, 4294901760
    %2681 = vmatmul.f32.gmra.mxu0 %v2680
    %v2682 = vpop.f32.mrf.mxu0
    %v2683 = vadd.f32 %v2487, %v2682
    %v2684 = vand.u32 %v430, 4294901760
    %v2685 = vsub.f32 %v430, %v2684
    %v2686 = vand.u32 %v2685, 4294901760
    %2687 = vmatmul.f32.gmra.mxu0 %v2686
    %v2688 = vpop.f32.mrf.mxu0
    %v2689 = vadd.f32 %v2492, %v2688
    %v2690 = vand.u32 %v434, 4294901760
    %v2691 = vsub.f32 %v434, %v2690
    %v2692 = vand.u32 %v2691, 4294901760
    %2693 = vmatmul.f32.gmra.mxu0 %v2692
    %v2694 = vpop.f32.mrf.mxu0
    %v2695 = vadd.f32 %v2497, %v2694
    %v2696 = vand.u32 %v438, 4294901760
    %v2697 = vsub.f32 %v438, %v2696
    %v2698 = vand.u32 %v2697, 4294901760
    %2699 = vmatmul.f32.gmra.mxu0 %v2698
    %v2700 = vpop.f32.mrf.mxu0
    %v2701 = vadd.f32 %v2502, %v2700
    %v2702 = vand.u32 %v442, 4294901760
    %v2703 = vsub.f32 %v442, %v2702
    %v2704 = vand.u32 %v2703, 4294901760
    %2705 = vmatmul.f32.gmra.mxu0 %v2704
    %v2706 = vpop.f32.mrf.mxu0
    %v2707 = vadd.f32 %v2507, %v2706
    %v2708 = vand.u32 %v446, 4294901760
    %v2709 = vsub.f32 %v446, %v2708
    %v2710 = vand.u32 %v2709, 4294901760
    %2711 = vmatmul.f32.gmra.mxu0 %v2710
    %v2712 = vpop.f32.mrf.mxu0
    %v2713 = vadd.f32 %v2512, %v2712
    %v2714 = vand.u32 %v450, 4294901760
    %v2715 = vsub.f32 %v450, %v2714
    %v2716 = vand.u32 %v2715, 4294901760
    %2717 = vmatmul.f32.gmra.mxu0 %v2716
    %v2718 = vpop.f32.mrf.mxu0
    %v2719 = vadd.f32 %v2517, %v2718
    %v2720 = vand.u32 %v454, 4294901760
    %v2721 = vsub.f32 %v454, %v2720
    %v2722 = vand.u32 %v2721, 4294901760
    %2723 = vmatmul.f32.gmra.mxu0 %v2722
    %v2724 = vpop.f32.mrf.mxu0
    %v2725 = vadd.f32 %v2522, %v2724
    %v2726 = vand.u32 %v458, 4294901760
    %v2727 = vsub.f32 %v458, %v2726
    %v2728 = vand.u32 %v2727, 4294901760
    %2729 = vmatmul.f32.gmra.mxu0 %v2728
    %v2730 = vpop.f32.mrf.mxu0
    %v2731 = vadd.f32 %v2527, %v2730
    %v2732 = vand.u32 %v462, 4294901760
    %v2733 = vsub.f32 %v462, %v2732
    %v2734 = vand.u32 %v2733, 4294901760
    %2735 = vmatmul.f32.gmra.mxu0 %v2734
    %v2736 = vpop.f32.mrf.mxu0
    %v2737 = vadd.f32 %v2532, %v2736
    %v2738 = vand.u32 %v466, 4294901760
    %v2739 = vsub.f32 %v466, %v2738
    %v2740 = vand.u32 %v2739, 4294901760
    %2741 = vmatmul.f32.gmra.mxu0 %v2740
    %v2742 = vpop.f32.mrf.mxu0
    %v2743 = vadd.f32 %v2537, %v2742
    %v2744 = vand.u32 %v470, 4294901760
    %v2745 = vsub.f32 %v470, %v2744
    %v2746 = vand.u32 %v2745, 4294901760
    %2747 = vmatmul.f32.gmra.mxu0 %v2746
    %v2748 = vpop.f32.mrf.mxu0
    %v2749 = vadd.f32 %v2542, %v2748
    %v2750 = vand.u32 %v474, 4294901760
    %v2751 = vsub.f32 %v474, %v2750
    %v2752 = vand.u32 %v2751, 4294901760
    %2753 = vmatmul.f32.gmra.mxu0 %v2752
    %v2754 = vpop.f32.mrf.mxu0
    %v2755 = vadd.f32 %v2547, %v2754
    %v2756 = vand.u32 %v478, 4294901760
    %v2757 = vsub.f32 %v478, %v2756
    %v2758 = vand.u32 %v2757, 4294901760
    %2759 = vmatmul.f32.gmra.mxu0 %v2758
    %v2760 = vpop.f32.mrf.mxu0
    %v2761 = vadd.f32 %v2552, %v2760
    %v2762 = vand.u32 %v482, 4294901760
    %v2763 = vsub.f32 %v482, %v2762
    %v2764 = vand.u32 %v2763, 4294901760
    %2765 = vmatmul.f32.gmra.mxu0 %v2764
    %v2766 = vpop.f32.mrf.mxu0
    %v2767 = vadd.f32 %v2557, %v2766
    %v2768 = vand.u32 %v486, 4294901760
    %v2769 = vsub.f32 %v486, %v2768
    %v2770 = vand.u32 %v2769, 4294901760
    %2771 = vmatmul.f32.gmra.mxu0 %v2770
    %v2772 = vpop.f32.mrf.mxu0
    %v2773 = vadd.f32 %v2562, %v2772
    %v2774 = vand.u32 %v490, 4294901760
    %v2775 = vsub.f32 %v490, %v2774
    %v2776 = vand.u32 %v2775, 4294901760
    %2777 = vmatmul.f32.gmra.mxu0 %v2776
    %v2778 = vpop.f32.mrf.mxu0
    %v2779 = vadd.f32 %v2567, %v2778
    %v2780 = vand.u32 %v494, 4294901760
    %v2781 = vsub.f32 %v494, %v2780
    %v2782 = vand.u32 %v2781, 4294901760
    %2783 = vmatmul.f32.gmra.mxu0 %v2782
    %v2784 = vpop.f32.mrf.mxu0
    %v2785 = vadd.f32 %v2572, %v2784
    %v2786 = vand.u32 %v498, 4294901760
    %v2787 = vsub.f32 %v498, %v2786
    %v2788 = vand.u32 %v2787, 4294901760
    %2789 = vmatmul.f32.gmra.mxu0 %v2788
    %v2790 = vpop.f32.mrf.mxu0
    %v2791 = vadd.f32 %v2577, %v2790
    %v2792 = vand.u32 %v502, 4294901760
    %v2793 = vsub.f32 %v502, %v2792
    %v2794 = vand.u32 %v2793, 4294901760
    %2795 = vmatmul.f32.gmra.mxu0 %v2794
    %v2796 = vpop.f32.mrf.mxu0
    %v2797 = vadd.f32 %v2582, %v2796
    %v2798 = vand.u32 %v506, 4294901760
    %v2799 = vsub.f32 %v506, %v2798
    %v2800 = vand.u32 %v2799, 4294901760
    %2801 = vmatmul.f32.gmra.mxu0 %v2800
    %v2802 = vpop.f32.mrf.mxu0
    %v2803 = vadd.f32 %v2587, %v2802
    %v2804 = vand.u32 %v510, 4294901760
    %v2805 = vsub.f32 %v510, %v2804
    %v2806 = vand.u32 %v2805, 4294901760
    %2807 = vmatmul.f32.gmra.mxu0 %v2806
    %v2808 = vpop.f32.mrf.mxu0
    %v2809 = vadd.f32 %v2592, %v2808
    %v2810 = vand.u32 %v514, 4294901760
    %v2811 = vsub.f32 %v514, %v2810
    %v2812 = vand.u32 %v2811, 4294901760
    %2813 = vmatmul.f32.gmra.mxu0 %v2812
    %v2814 = vpop.f32.mrf.mxu0
    %v2815 = vadd.f32 %v2597, %v2814
    %v2816 = vand.u32 %v518, 4294901760
    %v2817 = vsub.f32 %v518, %v2816
    %v2818 = vand.u32 %v2817, 4294901760
    %2819 = vmatmul.f32.gmra.mxu0 %v2818
    %v2820 = vpop.f32.mrf.mxu0
    %v2821 = vadd.f32 %v2602, %v2820
    %v2822 = vand.u32 %v522, 4294901760
    %v2823 = vsub.f32 %v522, %v2822
    %v2824 = vand.u32 %v2823, 4294901760
    %2825 = vmatmul.f32.gmra.mxu0 %v2824
    %v2826 = vpop.f32.mrf.mxu0
    %v2827 = vadd.f32 %v2607, %v2826
    %v2828 = vand.u32 %v526, 4294901760
    %v2829 = vsub.f32 %v526, %v2828
    %v2830 = vand.u32 %v2829, 4294901760
    %2831 = vmatmul.f32.gmra.mxu0 %v2830
    %v2832 = vpop.f32.mrf.mxu0
    %v2833 = vadd.f32 %v2612, %v2832
    %v2834 = vand.u32 %v530, 4294901760
    %v2835 = vsub.f32 %v530, %v2834
    %v2836 = vand.u32 %v2835, 4294901760
    %2837 = vmatmul.f32.gmra.mxu0 %v2836
    %v2838 = vpop.f32.mrf.mxu0
    %v2839 = vadd.f32 %v2617, %v2838
    %v2840 = vand.u32 %v534, 4294901760
    %v2841 = vsub.f32 %v534, %v2840
    %v2842 = vand.u32 %v2841, 4294901760
    %2843 = vmatmul.f32.gmra.mxu0 %v2842
    %v2844 = vpop.f32.mrf.mxu0
    %v2845 = vadd.f32 %v2622, %v2844
    %v2846 = vand.u32 %v538, 4294901760
    %v2847 = vsub.f32 %v538, %v2846
    %v2848 = vand.u32 %v2847, 4294901760
    %2849 = vmatmul.f32.gmra.mxu0 %v2848
    %v2850 = vpop.f32.mrf.mxu0
    %v2851 = vadd.f32 %v2627, %v2850
    %v2852 = vand.u32 %v542, 4294901760
    %v2853 = vsub.f32 %v542, %v2852
    %v2854 = vand.u32 %v2853, 4294901760
    %2855 = vmatmul.f32.gmra.mxu0 %v2854
    %v2856 = vpop.f32.mrf.mxu0
    %v2857 = vadd.f32 %v2632, %v2856
    %2858 = vdwg.mxu0
    %v2859 = vand.u32 %v576, 4294901760
    %v2860 = vsub.f32 %v576, %v2859
    %v2861 = vand.u32 %v2860, 4294901760
    %2862 = vmatpush.msra.mxu0 %v2861
    %v2863 = vand.u32 %v575, 4294901760
    %v2864 = vsub.f32 %v575, %v2863
    %v2865 = vand.u32 %v2864, 4294901760
    %2866 = vmatpush.msra.mxu0 %v2865
    %v2867 = vand.u32 %v574, 4294901760
    %v2868 = vsub.f32 %v574, %v2867
    %v2869 = vand.u32 %v2868, 4294901760
    %2870 = vmatpush.msra.mxu0 %v2869
    %v2871 = vand.u32 %v573, 4294901760
    %v2872 = vsub.f32 %v573, %v2871
    %v2873 = vand.u32 %v2872, 4294901760
    %2874 = vmatpush.msra.mxu0 %v2873
    %v2875 = vand.u32 %v572, 4294901760
    %v2876 = vsub.f32 %v572, %v2875
    %v2877 = vand.u32 %v2876, 4294901760
    %2878 = vmatpush.msra.mxu0 %v2877
    %v2879 = vand.u32 %v571, 4294901760
    %v2880 = vsub.f32 %v571, %v2879
    %v2881 = vand.u32 %v2880, 4294901760
    %2882 = vmatpush.msra.mxu0 %v2881
    %v2883 = vand.u32 %v570, 4294901760
    %v2884 = vsub.f32 %v570, %v2883
    %v2885 = vand.u32 %v2884, 4294901760
    %2886 = vmatpush.msra.mxu0 %v2885
    %v2887 = vand.u32 %v569, 4294901760
    %v2888 = vsub.f32 %v569, %v2887
    %v2889 = vand.u32 %v2888, 4294901760
    %2890 = vmatpush.msra.mxu0 %v2889
    %v2891 = vand.u32 %v568, 4294901760
    %v2892 = vsub.f32 %v568, %v2891
    %v2893 = vand.u32 %v2892, 4294901760
    %2894 = vmatpush.msra.mxu0 %v2893
    %v2895 = vand.u32 %v567, 4294901760
    %v2896 = vsub.f32 %v567, %v2895
    %v2897 = vand.u32 %v2896, 4294901760
    %2898 = vmatpush.msra.mxu0 %v2897
    %v2899 = vand.u32 %v566, 4294901760
    %v2900 = vsub.f32 %v566, %v2899
    %v2901 = vand.u32 %v2900, 4294901760
    %2902 = vmatpush.msra.mxu0 %v2901
    %v2903 = vand.u32 %v565, 4294901760
    %v2904 = vsub.f32 %v565, %v2903
    %v2905 = vand.u32 %v2904, 4294901760
    %2906 = vmatpush.msra.mxu0 %v2905
    %v2907 = vand.u32 %v564, 4294901760
    %v2908 = vsub.f32 %v564, %v2907
    %v2909 = vand.u32 %v2908, 4294901760
    %2910 = vmatpush.msra.mxu0 %v2909
    %v2911 = vand.u32 %v563, 4294901760
    %v2912 = vsub.f32 %v563, %v2911
    %v2913 = vand.u32 %v2912, 4294901760
    %2914 = vmatpush.msra.mxu0 %v2913
    %v2915 = vand.u32 %v562, 4294901760
    %v2916 = vsub.f32 %v562, %v2915
    %v2917 = vand.u32 %v2916, 4294901760
    %2918 = vmatpush.msra.mxu0 %v2917
    %v2919 = vand.u32 %v561, 4294901760
    %v2920 = vsub.f32 %v561, %v2919
    %v2921 = vand.u32 %v2920, 4294901760
    %2922 = vmatpush.msra.mxu0 %v2921
    %v2923 = vand.u32 %v418, 4294901760
    %2924 = vmatmul.f32.gmra.mxu0 %v2923
    %v2925 = vpop.f32.mrf.mxu0
    %v2926 = vadd.f32 %v2671, %v2925
    %v2927 = vand.u32 %v422, 4294901760
    %2928 = vmatmul.f32.gmra.mxu0 %v2927
    %v2929 = vpop.f32.mrf.mxu0
    %v2930 = vadd.f32 %v2677, %v2929
    %v2931 = vand.u32 %v426, 4294901760
    %2932 = vmatmul.f32.gmra.mxu0 %v2931
    %v2933 = vpop.f32.mrf.mxu0
    %v2934 = vadd.f32 %v2683, %v2933
    %v2935 = vand.u32 %v430, 4294901760
    %2936 = vmatmul.f32.gmra.mxu0 %v2935
    %v2937 = vpop.f32.mrf.mxu0
    %v2938 = vadd.f32 %v2689, %v2937
    %v2939 = vand.u32 %v434, 4294901760
    %2940 = vmatmul.f32.gmra.mxu0 %v2939
    %v2941 = vpop.f32.mrf.mxu0
    %v2942 = vadd.f32 %v2695, %v2941
    %v2943 = vand.u32 %v438, 4294901760
    %2944 = vmatmul.f32.gmra.mxu0 %v2943
    %v2945 = vpop.f32.mrf.mxu0
    %v2946 = vadd.f32 %v2701, %v2945
    %v2947 = vand.u32 %v442, 4294901760
    %2948 = vmatmul.f32.gmra.mxu0 %v2947
    %v2949 = vpop.f32.mrf.mxu0
    %v2950 = vadd.f32 %v2707, %v2949
    %v2951 = vand.u32 %v446, 4294901760
    %2952 = vmatmul.f32.gmra.mxu0 %v2951
    %v2953 = vpop.f32.mrf.mxu0
    %v2954 = vadd.f32 %v2713, %v2953
    %v2955 = vand.u32 %v450, 4294901760
    %2956 = vmatmul.f32.gmra.mxu0 %v2955
    %v2957 = vpop.f32.mrf.mxu0
    %v2958 = vadd.f32 %v2719, %v2957
    %v2959 = vand.u32 %v454, 4294901760
    %2960 = vmatmul.f32.gmra.mxu0 %v2959
    %v2961 = vpop.f32.mrf.mxu0
    %v2962 = vadd.f32 %v2725, %v2961
    %v2963 = vand.u32 %v458, 4294901760
    %2964 = vmatmul.f32.gmra.mxu0 %v2963
    %v2965 = vpop.f32.mrf.mxu0
    %v2966 = vadd.f32 %v2731, %v2965
    %v2967 = vand.u32 %v462, 4294901760
    %2968 = vmatmul.f32.gmra.mxu0 %v2967
    %v2969 = vpop.f32.mrf.mxu0
    %v2970 = vadd.f32 %v2737, %v2969
    %v2971 = vand.u32 %v466, 4294901760
    %2972 = vmatmul.f32.gmra.mxu0 %v2971
    %v2973 = vpop.f32.mrf.mxu0
    %v2974 = vadd.f32 %v2743, %v2973
    %v2975 = vand.u32 %v470, 4294901760
    %2976 = vmatmul.f32.gmra.mxu0 %v2975
    %v2977 = vpop.f32.mrf.mxu0
    %v2978 = vadd.f32 %v2749, %v2977
    %v2979 = vand.u32 %v474, 4294901760
    %2980 = vmatmul.f32.gmra.mxu0 %v2979
    %v2981 = vpop.f32.mrf.mxu0
    %v2982 = vadd.f32 %v2755, %v2981
    %v2983 = vand.u32 %v478, 4294901760
    %2984 = vmatmul.f32.gmra.mxu0 %v2983
    %v2985 = vpop.f32.mrf.mxu0
    %v2986 = vadd.f32 %v2761, %v2985
    %v2987 = vand.u32 %v482, 4294901760
    %2988 = vmatmul.f32.gmra.mxu0 %v2987
    %v2989 = vpop.f32.mrf.mxu0
    %v2990 = vadd.f32 %v2767, %v2989
    %v2991 = vand.u32 %v486, 4294901760
    %2992 = vmatmul.f32.gmra.mxu0 %v2991
    %v2993 = vpop.f32.mrf.mxu0
    %v2994 = vadd.f32 %v2773, %v2993
    %v2995 = vand.u32 %v490, 4294901760
    %2996 = vmatmul.f32.gmra.mxu0 %v2995
    %v2997 = vpop.f32.mrf.mxu0
    %v2998 = vadd.f32 %v2779, %v2997
    %v2999 = vand.u32 %v494, 4294901760
    %3000 = vmatmul.f32.gmra.mxu0 %v2999
    %v3001 = vpop.f32.mrf.mxu0
    %v3002 = vadd.f32 %v2785, %v3001
    %v3003 = vand.u32 %v498, 4294901760
    %3004 = vmatmul.f32.gmra.mxu0 %v3003
    %v3005 = vpop.f32.mrf.mxu0
    %v3006 = vadd.f32 %v2791, %v3005
    %v3007 = vand.u32 %v502, 4294901760
    %3008 = vmatmul.f32.gmra.mxu0 %v3007
    %v3009 = vpop.f32.mrf.mxu0
    %v3010 = vadd.f32 %v2797, %v3009
    %v3011 = vand.u32 %v506, 4294901760
    %3012 = vmatmul.f32.gmra.mxu0 %v3011
    %v3013 = vpop.f32.mrf.mxu0
    %v3014 = vadd.f32 %v2803, %v3013
    %v3015 = vand.u32 %v510, 4294901760
    %3016 = vmatmul.f32.gmra.mxu0 %v3015
    %v3017 = vpop.f32.mrf.mxu0
    %v3018 = vadd.f32 %v2809, %v3017
    %v3019 = vand.u32 %v514, 4294901760
    %3020 = vmatmul.f32.gmra.mxu0 %v3019
    %v3021 = vpop.f32.mrf.mxu0
    %v3022 = vadd.f32 %v2815, %v3021
    %v3023 = vand.u32 %v518, 4294901760
    %3024 = vmatmul.f32.gmra.mxu0 %v3023
    %v3025 = vpop.f32.mrf.mxu0
    %v3026 = vadd.f32 %v2821, %v3025
    %v3027 = vand.u32 %v522, 4294901760
    %3028 = vmatmul.f32.gmra.mxu0 %v3027
    %v3029 = vpop.f32.mrf.mxu0
    %v3030 = vadd.f32 %v2827, %v3029
    %v3031 = vand.u32 %v526, 4294901760
    %3032 = vmatmul.f32.gmra.mxu0 %v3031
    %v3033 = vpop.f32.mrf.mxu0
    %v3034 = vadd.f32 %v2833, %v3033
    %v3035 = vand.u32 %v530, 4294901760
    %3036 = vmatmul.f32.gmra.mxu0 %v3035
    %v3037 = vpop.f32.mrf.mxu0
    %v3038 = vadd.f32 %v2839, %v3037
    %v3039 = vand.u32 %v534, 4294901760
    %3040 = vmatmul.f32.gmra.mxu0 %v3039
    %v3041 = vpop.f32.mrf.mxu0
    %v3042 = vadd.f32 %v2845, %v3041
    %v3043 = vand.u32 %v538, 4294901760
    %3044 = vmatmul.f32.gmra.mxu0 %v3043
    %v3045 = vpop.f32.mrf.mxu0
    %v3046 = vadd.f32 %v2851, %v3045
    %v3047 = vand.u32 %v542, 4294901760
    %3048 = vmatmul.f32.gmra.mxu0 %v3047
    %v3049 = vpop.f32.mrf.mxu0
    %v3050 = vadd.f32 %v2857, %v3049
    %3051 = vdwg.mxu0
    %v3052 = vand.u32 %v576, 4294901760
    %3053 = vmatpush.msra.mxu0 %v3052
    %v3054 = vand.u32 %v575, 4294901760
    %3055 = vmatpush.msra.mxu0 %v3054
    %v3056 = vand.u32 %v574, 4294901760
    %3057 = vmatpush.msra.mxu0 %v3056
    %v3058 = vand.u32 %v573, 4294901760
    %3059 = vmatpush.msra.mxu0 %v3058
    %v3060 = vand.u32 %v572, 4294901760
    %3061 = vmatpush.msra.mxu0 %v3060
    %v3062 = vand.u32 %v571, 4294901760
    %3063 = vmatpush.msra.mxu0 %v3062
    %v3064 = vand.u32 %v570, 4294901760
    %3065 = vmatpush.msra.mxu0 %v3064
    %v3066 = vand.u32 %v569, 4294901760
    %3067 = vmatpush.msra.mxu0 %v3066
    %v3068 = vand.u32 %v568, 4294901760
    %3069 = vmatpush.msra.mxu0 %v3068
    %v3070 = vand.u32 %v567, 4294901760
    %3071 = vmatpush.msra.mxu0 %v3070
    %v3072 = vand.u32 %v566, 4294901760
    %3073 = vmatpush.msra.mxu0 %v3072
    %v3074 = vand.u32 %v565, 4294901760
    %3075 = vmatpush.msra.mxu0 %v3074
    %v3076 = vand.u32 %v564, 4294901760
    %3077 = vmatpush.msra.mxu0 %v3076
    %v3078 = vand.u32 %v563, 4294901760
    %3079 = vmatpush.msra.mxu0 %v3078
    %v3080 = vand.u32 %v562, 4294901760
    %3081 = vmatpush.msra.mxu0 %v3080
    %v3082 = vand.u32 %v561, 4294901760
    %3083 = vmatpush.msra.mxu0 %v3082
    %v3084 = vand.u32 %v418, 4294901760
    %3085 = vmatmul.f32.gmra.mxu0 %v3084
    %v3086 = vpop.f32.mrf.mxu0
    %v3087 = vadd.f32 %v2926, %v3086
    %v3088 = vand.u32 %v422, 4294901760
    %3089 = vmatmul.f32.gmra.mxu0 %v3088
    %v3090 = vpop.f32.mrf.mxu0
    %v3091 = vadd.f32 %v2930, %v3090
    %v3092 = vand.u32 %v426, 4294901760
    %3093 = vmatmul.f32.gmra.mxu0 %v3092
    %v3094 = vpop.f32.mrf.mxu0
    %v3095 = vadd.f32 %v2934, %v3094
    %v3096 = vand.u32 %v430, 4294901760
    %3097 = vmatmul.f32.gmra.mxu0 %v3096
    %v3098 = vpop.f32.mrf.mxu0
    %v3099 = vadd.f32 %v2938, %v3098
    %v3100 = vand.u32 %v434, 4294901760
    %3101 = vmatmul.f32.gmra.mxu0 %v3100
    %v3102 = vpop.f32.mrf.mxu0
    %v3103 = vadd.f32 %v2942, %v3102
    %v3104 = vand.u32 %v438, 4294901760
    %3105 = vmatmul.f32.gmra.mxu0 %v3104
    %v3106 = vpop.f32.mrf.mxu0
    %v3107 = vadd.f32 %v2946, %v3106
    %v3108 = vand.u32 %v442, 4294901760
    %3109 = vmatmul.f32.gmra.mxu0 %v3108
    %v3110 = vpop.f32.mrf.mxu0
    %v3111 = vadd.f32 %v2950, %v3110
    %v3112 = vand.u32 %v446, 4294901760
    %3113 = vmatmul.f32.gmra.mxu0 %v3112
    %v3114 = vpop.f32.mrf.mxu0
    %v3115 = vadd.f32 %v2954, %v3114
    %v3116 = vand.u32 %v450, 4294901760
    %3117 = vmatmul.f32.gmra.mxu0 %v3116
    %v3118 = vpop.f32.mrf.mxu0
    %v3119 = vadd.f32 %v2958, %v3118
    %v3120 = vand.u32 %v454, 4294901760
    %3121 = vmatmul.f32.gmra.mxu0 %v3120
    %v3122 = vpop.f32.mrf.mxu0
    %v3123 = vadd.f32 %v2962, %v3122
    %v3124 = vand.u32 %v458, 4294901760
    %3125 = vmatmul.f32.gmra.mxu0 %v3124
    %v3126 = vpop.f32.mrf.mxu0
    %v3127 = vadd.f32 %v2966, %v3126
    %v3128 = vand.u32 %v462, 4294901760
    %3129 = vmatmul.f32.gmra.mxu0 %v3128
    %v3130 = vpop.f32.mrf.mxu0
    %v3131 = vadd.f32 %v2970, %v3130
    %v3132 = vand.u32 %v466, 4294901760
    %3133 = vmatmul.f32.gmra.mxu0 %v3132
    %v3134 = vpop.f32.mrf.mxu0
    %v3135 = vadd.f32 %v2974, %v3134
    %v3136 = vand.u32 %v470, 4294901760
    %3137 = vmatmul.f32.gmra.mxu0 %v3136
    %v3138 = vpop.f32.mrf.mxu0
    %v3139 = vadd.f32 %v2978, %v3138
    %v3140 = vand.u32 %v474, 4294901760
    %3141 = vmatmul.f32.gmra.mxu0 %v3140
    %v3142 = vpop.f32.mrf.mxu0
    %v3143 = vadd.f32 %v2982, %v3142
    %v3144 = vand.u32 %v478, 4294901760
    %3145 = vmatmul.f32.gmra.mxu0 %v3144
    %v3146 = vpop.f32.mrf.mxu0
    %v3147 = vadd.f32 %v2986, %v3146
    %v3148 = vand.u32 %v482, 4294901760
    %3149 = vmatmul.f32.gmra.mxu0 %v3148
    %v3150 = vpop.f32.mrf.mxu0
    %v3151 = vadd.f32 %v2990, %v3150
    %v3152 = vand.u32 %v486, 4294901760
    %3153 = vmatmul.f32.gmra.mxu0 %v3152
    %v3154 = vpop.f32.mrf.mxu0
    %v3155 = vadd.f32 %v2994, %v3154
    %v3156 = vand.u32 %v490, 4294901760
    %3157 = vmatmul.f32.gmra.mxu0 %v3156
    %v3158 = vpop.f32.mrf.mxu0
    %v3159 = vadd.f32 %v2998, %v3158
    %v3160 = vand.u32 %v494, 4294901760
    %3161 = vmatmul.f32.gmra.mxu0 %v3160
    %v3162 = vpop.f32.mrf.mxu0
    %v3163 = vadd.f32 %v3002, %v3162
    %v3164 = vand.u32 %v498, 4294901760
    %3165 = vmatmul.f32.gmra.mxu0 %v3164
    %v3166 = vpop.f32.mrf.mxu0
    %v3167 = vadd.f32 %v3006, %v3166
    %v3168 = vand.u32 %v502, 4294901760
    %3169 = vmatmul.f32.gmra.mxu0 %v3168
    %v3170 = vpop.f32.mrf.mxu0
    %v3171 = vadd.f32 %v3010, %v3170
    %v3172 = vand.u32 %v506, 4294901760
    %3173 = vmatmul.f32.gmra.mxu0 %v3172
    %v3174 = vpop.f32.mrf.mxu0
    %v3175 = vadd.f32 %v3014, %v3174
    %v3176 = vand.u32 %v510, 4294901760
    %3177 = vmatmul.f32.gmra.mxu0 %v3176
    %v3178 = vpop.f32.mrf.mxu0
    %v3179 = vadd.f32 %v3018, %v3178
    %v3180 = vand.u32 %v514, 4294901760
    %3181 = vmatmul.f32.gmra.mxu0 %v3180
    %v3182 = vpop.f32.mrf.mxu0
    %v3183 = vadd.f32 %v3022, %v3182
    %v3184 = vand.u32 %v518, 4294901760
    %3185 = vmatmul.f32.gmra.mxu0 %v3184
    %v3186 = vpop.f32.mrf.mxu0
    %v3187 = vadd.f32 %v3026, %v3186
    %v3188 = vand.u32 %v522, 4294901760
    %3189 = vmatmul.f32.gmra.mxu0 %v3188
    %v3190 = vpop.f32.mrf.mxu0
    %v3191 = vadd.f32 %v3030, %v3190
    %v3192 = vand.u32 %v526, 4294901760
    %3193 = vmatmul.f32.gmra.mxu0 %v3192
    %v3194 = vpop.f32.mrf.mxu0
    %v3195 = vadd.f32 %v3034, %v3194
    %v3196 = vand.u32 %v530, 4294901760
    %3197 = vmatmul.f32.gmra.mxu0 %v3196
    %v3198 = vpop.f32.mrf.mxu0
    %v3199 = vadd.f32 %v3038, %v3198
    %v3200 = vand.u32 %v534, 4294901760
    %3201 = vmatmul.f32.gmra.mxu0 %v3200
    %v3202 = vpop.f32.mrf.mxu0
    %v3203 = vadd.f32 %v3042, %v3202
    %v3204 = vand.u32 %v538, 4294901760
    %3205 = vmatmul.f32.gmra.mxu0 %v3204
    %v3206 = vpop.f32.mrf.mxu0
    %v3207 = vadd.f32 %v3046, %v3206
    %v3208 = vand.u32 %v542, 4294901760
    %3209 = vmatmul.f32.gmra.mxu0 %v3208
    %v3210 = vpop.f32.mrf.mxu0
    %v3211 = vadd.f32 %v3050, %v3210
    %3212 = vdwg.mxu0
    %v3213 = vand.u32 %v592, 4294901760
    %3214 = vmatpush.msra.mxu0 %v3213
    %v3215 = vand.u32 %v591, 4294901760
    %3216 = vmatpush.msra.mxu0 %v3215
    %v3217 = vand.u32 %v590, 4294901760
    %3218 = vmatpush.msra.mxu0 %v3217
    %v3219 = vand.u32 %v589, 4294901760
    %3220 = vmatpush.msra.mxu0 %v3219
    %v3221 = vand.u32 %v588, 4294901760
    %3222 = vmatpush.msra.mxu0 %v3221
    %v3223 = vand.u32 %v587, 4294901760
    %3224 = vmatpush.msra.mxu0 %v3223
    %v3225 = vand.u32 %v586, 4294901760
    %3226 = vmatpush.msra.mxu0 %v3225
    %v3227 = vand.u32 %v585, 4294901760
    %3228 = vmatpush.msra.mxu0 %v3227
    %v3229 = vand.u32 %v584, 4294901760
    %3230 = vmatpush.msra.mxu0 %v3229
    %v3231 = vand.u32 %v583, 4294901760
    %3232 = vmatpush.msra.mxu0 %v3231
    %v3233 = vand.u32 %v582, 4294901760
    %3234 = vmatpush.msra.mxu0 %v3233
    %v3235 = vand.u32 %v581, 4294901760
    %3236 = vmatpush.msra.mxu0 %v3235
    %v3237 = vand.u32 %v580, 4294901760
    %3238 = vmatpush.msra.mxu0 %v3237
    %v3239 = vand.u32 %v579, 4294901760
    %3240 = vmatpush.msra.mxu0 %v3239
    %v3241 = vand.u32 %v578, 4294901760
    %3242 = vmatpush.msra.mxu0 %v3241
    %v3243 = vand.u32 %v577, 4294901760
    %3244 = vmatpush.msra.mxu0 %v3243
    %v3245 = vand.u32 %v419, 4294901760
    %v3246 = vsub.f32 %v419, %v3245
    %v3247 = vand.u32 %v3246, 4294901760
    %v3248 = vsub.f32 %v3246, %v3247
    %v3249 = vand.u32 %v3248, 4294901760
    %3250 = vmatmul.f32.gmra.mxu0 %v3249
    %v3251 = vpop.f32.mrf.mxu0
    %v3252 = vadd.f32 %v3087, %v3251
    %v3253 = vand.u32 %v423, 4294901760
    %v3254 = vsub.f32 %v423, %v3253
    %v3255 = vand.u32 %v3254, 4294901760
    %v3256 = vsub.f32 %v3254, %v3255
    %v3257 = vand.u32 %v3256, 4294901760
    %3258 = vmatmul.f32.gmra.mxu0 %v3257
    %v3259 = vpop.f32.mrf.mxu0
    %v3260 = vadd.f32 %v3091, %v3259
    %v3261 = vand.u32 %v427, 4294901760
    %v3262 = vsub.f32 %v427, %v3261
    %v3263 = vand.u32 %v3262, 4294901760
    %v3264 = vsub.f32 %v3262, %v3263
    %v3265 = vand.u32 %v3264, 4294901760
    %3266 = vmatmul.f32.gmra.mxu0 %v3265
    %v3267 = vpop.f32.mrf.mxu0
    %v3268 = vadd.f32 %v3095, %v3267
    %v3269 = vand.u32 %v431, 4294901760
    %v3270 = vsub.f32 %v431, %v3269
    %v3271 = vand.u32 %v3270, 4294901760
    %v3272 = vsub.f32 %v3270, %v3271
    %v3273 = vand.u32 %v3272, 4294901760
    %3274 = vmatmul.f32.gmra.mxu0 %v3273
    %v3275 = vpop.f32.mrf.mxu0
    %v3276 = vadd.f32 %v3099, %v3275
    %v3277 = vand.u32 %v435, 4294901760
    %v3278 = vsub.f32 %v435, %v3277
    %v3279 = vand.u32 %v3278, 4294901760
    %v3280 = vsub.f32 %v3278, %v3279
    %v3281 = vand.u32 %v3280, 4294901760
    %3282 = vmatmul.f32.gmra.mxu0 %v3281
    %v3283 = vpop.f32.mrf.mxu0
    %v3284 = vadd.f32 %v3103, %v3283
    %v3285 = vand.u32 %v439, 4294901760
    %v3286 = vsub.f32 %v439, %v3285
    %v3287 = vand.u32 %v3286, 4294901760
    %v3288 = vsub.f32 %v3286, %v3287
    %v3289 = vand.u32 %v3288, 4294901760
    %3290 = vmatmul.f32.gmra.mxu0 %v3289
    %v3291 = vpop.f32.mrf.mxu0
    %v3292 = vadd.f32 %v3107, %v3291
    %v3293 = vand.u32 %v443, 4294901760
    %v3294 = vsub.f32 %v443, %v3293
    %v3295 = vand.u32 %v3294, 4294901760
    %v3296 = vsub.f32 %v3294, %v3295
    %v3297 = vand.u32 %v3296, 4294901760
    %3298 = vmatmul.f32.gmra.mxu0 %v3297
    %v3299 = vpop.f32.mrf.mxu0
    %v3300 = vadd.f32 %v3111, %v3299
    %v3301 = vand.u32 %v447, 4294901760
    %v3302 = vsub.f32 %v447, %v3301
    %v3303 = vand.u32 %v3302, 4294901760
    %v3304 = vsub.f32 %v3302, %v3303
    %v3305 = vand.u32 %v3304, 4294901760
    %3306 = vmatmul.f32.gmra.mxu0 %v3305
    %v3307 = vpop.f32.mrf.mxu0
    %v3308 = vadd.f32 %v3115, %v3307
    %v3309 = vand.u32 %v451, 4294901760
    %v3310 = vsub.f32 %v451, %v3309
    %v3311 = vand.u32 %v3310, 4294901760
    %v3312 = vsub.f32 %v3310, %v3311
    %v3313 = vand.u32 %v3312, 4294901760
    %3314 = vmatmul.f32.gmra.mxu0 %v3313
    %v3315 = vpop.f32.mrf.mxu0
    %v3316 = vadd.f32 %v3119, %v3315
    %v3317 = vand.u32 %v455, 4294901760
    %v3318 = vsub.f32 %v455, %v3317
    %v3319 = vand.u32 %v3318, 4294901760
    %v3320 = vsub.f32 %v3318, %v3319
    %v3321 = vand.u32 %v3320, 4294901760
    %3322 = vmatmul.f32.gmra.mxu0 %v3321
    %v3323 = vpop.f32.mrf.mxu0
    %v3324 = vadd.f32 %v3123, %v3323
    %v3325 = vand.u32 %v459, 4294901760
    %v3326 = vsub.f32 %v459, %v3325
    %v3327 = vand.u32 %v3326, 4294901760
    %v3328 = vsub.f32 %v3326, %v3327
    %v3329 = vand.u32 %v3328, 4294901760
    %3330 = vmatmul.f32.gmra.mxu0 %v3329
    %v3331 = vpop.f32.mrf.mxu0
    %v3332 = vadd.f32 %v3127, %v3331
    %v3333 = vand.u32 %v463, 4294901760
    %v3334 = vsub.f32 %v463, %v3333
    %v3335 = vand.u32 %v3334, 4294901760
    %v3336 = vsub.f32 %v3334, %v3335
    %v3337 = vand.u32 %v3336, 4294901760
    %3338 = vmatmul.f32.gmra.mxu0 %v3337
    %v3339 = vpop.f32.mrf.mxu0
    %v3340 = vadd.f32 %v3131, %v3339
    %v3341 = vand.u32 %v467, 4294901760
    %v3342 = vsub.f32 %v467, %v3341
    %v3343 = vand.u32 %v3342, 4294901760
    %v3344 = vsub.f32 %v3342, %v3343
    %v3345 = vand.u32 %v3344, 4294901760
    %3346 = vmatmul.f32.gmra.mxu0 %v3345
    %v3347 = vpop.f32.mrf.mxu0
    %v3348 = vadd.f32 %v3135, %v3347
    %v3349 = vand.u32 %v471, 4294901760
    %v3350 = vsub.f32 %v471, %v3349
    %v3351 = vand.u32 %v3350, 4294901760
    %v3352 = vsub.f32 %v3350, %v3351
    %v3353 = vand.u32 %v3352, 4294901760
    %3354 = vmatmul.f32.gmra.mxu0 %v3353
    %v3355 = vpop.f32.mrf.mxu0
    %v3356 = vadd.f32 %v3139, %v3355
    %v3357 = vand.u32 %v475, 4294901760
    %v3358 = vsub.f32 %v475, %v3357
    %v3359 = vand.u32 %v3358, 4294901760
    %v3360 = vsub.f32 %v3358, %v3359
    %v3361 = vand.u32 %v3360, 4294901760
    %3362 = vmatmul.f32.gmra.mxu0 %v3361
    %v3363 = vpop.f32.mrf.mxu0
    %v3364 = vadd.f32 %v3143, %v3363
    %v3365 = vand.u32 %v479, 4294901760
    %v3366 = vsub.f32 %v479, %v3365
    %v3367 = vand.u32 %v3366, 4294901760
    %v3368 = vsub.f32 %v3366, %v3367
    %v3369 = vand.u32 %v3368, 4294901760
    %3370 = vmatmul.f32.gmra.mxu0 %v3369
    %v3371 = vpop.f32.mrf.mxu0
    %v3372 = vadd.f32 %v3147, %v3371
    %v3373 = vand.u32 %v483, 4294901760
    %v3374 = vsub.f32 %v483, %v3373
    %v3375 = vand.u32 %v3374, 4294901760
    %v3376 = vsub.f32 %v3374, %v3375
    %v3377 = vand.u32 %v3376, 4294901760
    %3378 = vmatmul.f32.gmra.mxu0 %v3377
    %v3379 = vpop.f32.mrf.mxu0
    %v3380 = vadd.f32 %v3151, %v3379
    %v3381 = vand.u32 %v487, 4294901760
    %v3382 = vsub.f32 %v487, %v3381
    %v3383 = vand.u32 %v3382, 4294901760
    %v3384 = vsub.f32 %v3382, %v3383
    %v3385 = vand.u32 %v3384, 4294901760
    %3386 = vmatmul.f32.gmra.mxu0 %v3385
    %v3387 = vpop.f32.mrf.mxu0
    %v3388 = vadd.f32 %v3155, %v3387
    %v3389 = vand.u32 %v491, 4294901760
    %v3390 = vsub.f32 %v491, %v3389
    %v3391 = vand.u32 %v3390, 4294901760
    %v3392 = vsub.f32 %v3390, %v3391
    %v3393 = vand.u32 %v3392, 4294901760
    %3394 = vmatmul.f32.gmra.mxu0 %v3393
    %v3395 = vpop.f32.mrf.mxu0
    %v3396 = vadd.f32 %v3159, %v3395
    %v3397 = vand.u32 %v495, 4294901760
    %v3398 = vsub.f32 %v495, %v3397
    %v3399 = vand.u32 %v3398, 4294901760
    %v3400 = vsub.f32 %v3398, %v3399
    %v3401 = vand.u32 %v3400, 4294901760
    %3402 = vmatmul.f32.gmra.mxu0 %v3401
    %v3403 = vpop.f32.mrf.mxu0
    %v3404 = vadd.f32 %v3163, %v3403
    %v3405 = vand.u32 %v499, 4294901760
    %v3406 = vsub.f32 %v499, %v3405
    %v3407 = vand.u32 %v3406, 4294901760
    %v3408 = vsub.f32 %v3406, %v3407
    %v3409 = vand.u32 %v3408, 4294901760
    %3410 = vmatmul.f32.gmra.mxu0 %v3409
    %v3411 = vpop.f32.mrf.mxu0
    %v3412 = vadd.f32 %v3167, %v3411
    %v3413 = vand.u32 %v503, 4294901760
    %v3414 = vsub.f32 %v503, %v3413
    %v3415 = vand.u32 %v3414, 4294901760
    %v3416 = vsub.f32 %v3414, %v3415
    %v3417 = vand.u32 %v3416, 4294901760
    %3418 = vmatmul.f32.gmra.mxu0 %v3417
    %v3419 = vpop.f32.mrf.mxu0
    %v3420 = vadd.f32 %v3171, %v3419
    %v3421 = vand.u32 %v507, 4294901760
    %v3422 = vsub.f32 %v507, %v3421
    %v3423 = vand.u32 %v3422, 4294901760
    %v3424 = vsub.f32 %v3422, %v3423
    %v3425 = vand.u32 %v3424, 4294901760
    %3426 = vmatmul.f32.gmra.mxu0 %v3425
    %v3427 = vpop.f32.mrf.mxu0
    %v3428 = vadd.f32 %v3175, %v3427
    %v3429 = vand.u32 %v511, 4294901760
    %v3430 = vsub.f32 %v511, %v3429
    %v3431 = vand.u32 %v3430, 4294901760
    %v3432 = vsub.f32 %v3430, %v3431
    %v3433 = vand.u32 %v3432, 4294901760
    %3434 = vmatmul.f32.gmra.mxu0 %v3433
    %v3435 = vpop.f32.mrf.mxu0
    %v3436 = vadd.f32 %v3179, %v3435
    %v3437 = vand.u32 %v515, 4294901760
    %v3438 = vsub.f32 %v515, %v3437
    %v3439 = vand.u32 %v3438, 4294901760
    %v3440 = vsub.f32 %v3438, %v3439
    %v3441 = vand.u32 %v3440, 4294901760
    %3442 = vmatmul.f32.gmra.mxu0 %v3441
    %v3443 = vpop.f32.mrf.mxu0
    %v3444 = vadd.f32 %v3183, %v3443
    %v3445 = vand.u32 %v519, 4294901760
    %v3446 = vsub.f32 %v519, %v3445
    %v3447 = vand.u32 %v3446, 4294901760
    %v3448 = vsub.f32 %v3446, %v3447
    %v3449 = vand.u32 %v3448, 4294901760
    %3450 = vmatmul.f32.gmra.mxu0 %v3449
    %v3451 = vpop.f32.mrf.mxu0
    %v3452 = vadd.f32 %v3187, %v3451
    %v3453 = vand.u32 %v523, 4294901760
    %v3454 = vsub.f32 %v523, %v3453
    %v3455 = vand.u32 %v3454, 4294901760
    %v3456 = vsub.f32 %v3454, %v3455
    %v3457 = vand.u32 %v3456, 4294901760
    %3458 = vmatmul.f32.gmra.mxu0 %v3457
    %v3459 = vpop.f32.mrf.mxu0
    %v3460 = vadd.f32 %v3191, %v3459
    %v3461 = vand.u32 %v527, 4294901760
    %v3462 = vsub.f32 %v527, %v3461
    %v3463 = vand.u32 %v3462, 4294901760
    %v3464 = vsub.f32 %v3462, %v3463
    %v3465 = vand.u32 %v3464, 4294901760
    %3466 = vmatmul.f32.gmra.mxu0 %v3465
    %v3467 = vpop.f32.mrf.mxu0
    %v3468 = vadd.f32 %v3195, %v3467
    %v3469 = vand.u32 %v531, 4294901760
    %v3470 = vsub.f32 %v531, %v3469
    %v3471 = vand.u32 %v3470, 4294901760
    %v3472 = vsub.f32 %v3470, %v3471
    %v3473 = vand.u32 %v3472, 4294901760
    %3474 = vmatmul.f32.gmra.mxu0 %v3473
    %v3475 = vpop.f32.mrf.mxu0
    %v3476 = vadd.f32 %v3199, %v3475
    %v3477 = vand.u32 %v535, 4294901760
    %v3478 = vsub.f32 %v535, %v3477
    %v3479 = vand.u32 %v3478, 4294901760
    %v3480 = vsub.f32 %v3478, %v3479
    %v3481 = vand.u32 %v3480, 4294901760
    %3482 = vmatmul.f32.gmra.mxu0 %v3481
    %v3483 = vpop.f32.mrf.mxu0
    %v3484 = vadd.f32 %v3203, %v3483
    %v3485 = vand.u32 %v539, 4294901760
    %v3486 = vsub.f32 %v539, %v3485
    %v3487 = vand.u32 %v3486, 4294901760
    %v3488 = vsub.f32 %v3486, %v3487
    %v3489 = vand.u32 %v3488, 4294901760
    %3490 = vmatmul.f32.gmra.mxu0 %v3489
    %v3491 = vpop.f32.mrf.mxu0
    %v3492 = vadd.f32 %v3207, %v3491
    %v3493 = vand.u32 %v543, 4294901760
    %v3494 = vsub.f32 %v543, %v3493
    %v3495 = vand.u32 %v3494, 4294901760
    %v3496 = vsub.f32 %v3494, %v3495
    %v3497 = vand.u32 %v3496, 4294901760
    %3498 = vmatmul.f32.gmra.mxu0 %v3497
    %v3499 = vpop.f32.mrf.mxu0
    %v3500 = vadd.f32 %v3211, %v3499
    %3501 = vdwg.mxu0
    %v3502 = vand.u32 %v592, 4294901760
    %v3503 = vsub.f32 %v592, %v3502
    %v3504 = vand.u32 %v3503, 4294901760
    %v3505 = vsub.f32 %v3503, %v3504
    %v3506 = vand.u32 %v3505, 4294901760
    %3507 = vmatpush.msra.mxu0 %v3506
    %v3508 = vand.u32 %v591, 4294901760
    %v3509 = vsub.f32 %v591, %v3508
    %v3510 = vand.u32 %v3509, 4294901760
    %v3511 = vsub.f32 %v3509, %v3510
    %v3512 = vand.u32 %v3511, 4294901760
    %3513 = vmatpush.msra.mxu0 %v3512
    %v3514 = vand.u32 %v590, 4294901760
    %v3515 = vsub.f32 %v590, %v3514
    %v3516 = vand.u32 %v3515, 4294901760
    %v3517 = vsub.f32 %v3515, %v3516
    %v3518 = vand.u32 %v3517, 4294901760
    %3519 = vmatpush.msra.mxu0 %v3518
    %v3520 = vand.u32 %v589, 4294901760
    %v3521 = vsub.f32 %v589, %v3520
    %v3522 = vand.u32 %v3521, 4294901760
    %v3523 = vsub.f32 %v3521, %v3522
    %v3524 = vand.u32 %v3523, 4294901760
    %3525 = vmatpush.msra.mxu0 %v3524
    %v3526 = vand.u32 %v588, 4294901760
    %v3527 = vsub.f32 %v588, %v3526
    %v3528 = vand.u32 %v3527, 4294901760
    %v3529 = vsub.f32 %v3527, %v3528
    %v3530 = vand.u32 %v3529, 4294901760
    %3531 = vmatpush.msra.mxu0 %v3530
    %v3532 = vand.u32 %v587, 4294901760
    %v3533 = vsub.f32 %v587, %v3532
    %v3534 = vand.u32 %v3533, 4294901760
    %v3535 = vsub.f32 %v3533, %v3534
    %v3536 = vand.u32 %v3535, 4294901760
    %3537 = vmatpush.msra.mxu0 %v3536
    %v3538 = vand.u32 %v586, 4294901760
    %v3539 = vsub.f32 %v586, %v3538
    %v3540 = vand.u32 %v3539, 4294901760
    %v3541 = vsub.f32 %v3539, %v3540
    %v3542 = vand.u32 %v3541, 4294901760
    %3543 = vmatpush.msra.mxu0 %v3542
    %v3544 = vand.u32 %v585, 4294901760
    %v3545 = vsub.f32 %v585, %v3544
    %v3546 = vand.u32 %v3545, 4294901760
    %v3547 = vsub.f32 %v3545, %v3546
    %v3548 = vand.u32 %v3547, 4294901760
    %3549 = vmatpush.msra.mxu0 %v3548
    %v3550 = vand.u32 %v584, 4294901760
    %v3551 = vsub.f32 %v584, %v3550
    %v3552 = vand.u32 %v3551, 4294901760
    %v3553 = vsub.f32 %v3551, %v3552
    %v3554 = vand.u32 %v3553, 4294901760
    %3555 = vmatpush.msra.mxu0 %v3554
    %v3556 = vand.u32 %v583, 4294901760
    %v3557 = vsub.f32 %v583, %v3556
    %v3558 = vand.u32 %v3557, 4294901760
    %v3559 = vsub.f32 %v3557, %v3558
    %v3560 = vand.u32 %v3559, 4294901760
    %3561 = vmatpush.msra.mxu0 %v3560
    %v3562 = vand.u32 %v582, 4294901760
    %v3563 = vsub.f32 %v582, %v3562
    %v3564 = vand.u32 %v3563, 4294901760
    %v3565 = vsub.f32 %v3563, %v3564
    %v3566 = vand.u32 %v3565, 4294901760
    %3567 = vmatpush.msra.mxu0 %v3566
    %v3568 = vand.u32 %v581, 4294901760
    %v3569 = vsub.f32 %v581, %v3568
    %v3570 = vand.u32 %v3569, 4294901760
    %v3571 = vsub.f32 %v3569, %v3570
    %v3572 = vand.u32 %v3571, 4294901760
    %3573 = vmatpush.msra.mxu0 %v3572
    %v3574 = vand.u32 %v580, 4294901760
    %v3575 = vsub.f32 %v580, %v3574
    %v3576 = vand.u32 %v3575, 4294901760
    %v3577 = vsub.f32 %v3575, %v3576
    %v3578 = vand.u32 %v3577, 4294901760
    %3579 = vmatpush.msra.mxu0 %v3578
    %v3580 = vand.u32 %v579, 4294901760
    %v3581 = vsub.f32 %v579, %v3580
    %v3582 = vand.u32 %v3581, 4294901760
    %v3583 = vsub.f32 %v3581, %v3582
    %v3584 = vand.u32 %v3583, 4294901760
    %3585 = vmatpush.msra.mxu0 %v3584
    %v3586 = vand.u32 %v578, 4294901760
    %v3587 = vsub.f32 %v578, %v3586
    %v3588 = vand.u32 %v3587, 4294901760
    %v3589 = vsub.f32 %v3587, %v3588
    %v3590 = vand.u32 %v3589, 4294901760
    %3591 = vmatpush.msra.mxu0 %v3590
    %v3592 = vand.u32 %v577, 4294901760
    %v3593 = vsub.f32 %v577, %v3592
    %v3594 = vand.u32 %v3593, 4294901760
    %v3595 = vsub.f32 %v3593, %v3594
    %v3596 = vand.u32 %v3595, 4294901760
    %3597 = vmatpush.msra.mxu0 %v3596
    %v3598 = vand.u32 %v419, 4294901760
    %3599 = vmatmul.f32.gmra.mxu0 %v3598
    %v3600 = vpop.f32.mrf.mxu0
    %v3601 = vadd.f32 %v3252, %v3600
    %v3602 = vand.u32 %v423, 4294901760
    %3603 = vmatmul.f32.gmra.mxu0 %v3602
    %v3604 = vpop.f32.mrf.mxu0
    %v3605 = vadd.f32 %v3260, %v3604
    %v3606 = vand.u32 %v427, 4294901760
    %3607 = vmatmul.f32.gmra.mxu0 %v3606
    %v3608 = vpop.f32.mrf.mxu0
    %v3609 = vadd.f32 %v3268, %v3608
    %v3610 = vand.u32 %v431, 4294901760
    %3611 = vmatmul.f32.gmra.mxu0 %v3610
    %v3612 = vpop.f32.mrf.mxu0
    %v3613 = vadd.f32 %v3276, %v3612
    %v3614 = vand.u32 %v435, 4294901760
    %3615 = vmatmul.f32.gmra.mxu0 %v3614
    %v3616 = vpop.f32.mrf.mxu0
    %v3617 = vadd.f32 %v3284, %v3616
    %v3618 = vand.u32 %v439, 4294901760
    %3619 = vmatmul.f32.gmra.mxu0 %v3618
    %v3620 = vpop.f32.mrf.mxu0
    %v3621 = vadd.f32 %v3292, %v3620
    %v3622 = vand.u32 %v443, 4294901760
    %3623 = vmatmul.f32.gmra.mxu0 %v3622
    %v3624 = vpop.f32.mrf.mxu0
    %v3625 = vadd.f32 %v3300, %v3624
    %v3626 = vand.u32 %v447, 4294901760
    %3627 = vmatmul.f32.gmra.mxu0 %v3626
    %v3628 = vpop.f32.mrf.mxu0
    %v3629 = vadd.f32 %v3308, %v3628
    %v3630 = vand.u32 %v451, 4294901760
    %3631 = vmatmul.f32.gmra.mxu0 %v3630
    %v3632 = vpop.f32.mrf.mxu0
    %v3633 = vadd.f32 %v3316, %v3632
    %v3634 = vand.u32 %v455, 4294901760
    %3635 = vmatmul.f32.gmra.mxu0 %v3634
    %v3636 = vpop.f32.mrf.mxu0
    %v3637 = vadd.f32 %v3324, %v3636
    %v3638 = vand.u32 %v459, 4294901760
    %3639 = vmatmul.f32.gmra.mxu0 %v3638
    %v3640 = vpop.f32.mrf.mxu0
    %v3641 = vadd.f32 %v3332, %v3640
    %v3642 = vand.u32 %v463, 4294901760
    %3643 = vmatmul.f32.gmra.mxu0 %v3642
    %v3644 = vpop.f32.mrf.mxu0
    %v3645 = vadd.f32 %v3340, %v3644
    %v3646 = vand.u32 %v467, 4294901760
    %3647 = vmatmul.f32.gmra.mxu0 %v3646
    %v3648 = vpop.f32.mrf.mxu0
    %v3649 = vadd.f32 %v3348, %v3648
    %v3650 = vand.u32 %v471, 4294901760
    %3651 = vmatmul.f32.gmra.mxu0 %v3650
    %v3652 = vpop.f32.mrf.mxu0
    %v3653 = vadd.f32 %v3356, %v3652
    %v3654 = vand.u32 %v475, 4294901760
    %3655 = vmatmul.f32.gmra.mxu0 %v3654
    %v3656 = vpop.f32.mrf.mxu0
    %v3657 = vadd.f32 %v3364, %v3656
    %v3658 = vand.u32 %v479, 4294901760
    %3659 = vmatmul.f32.gmra.mxu0 %v3658
    %v3660 = vpop.f32.mrf.mxu0
    %v3661 = vadd.f32 %v3372, %v3660
    %v3662 = vand.u32 %v483, 4294901760
    %3663 = vmatmul.f32.gmra.mxu0 %v3662
    %v3664 = vpop.f32.mrf.mxu0
    %v3665 = vadd.f32 %v3380, %v3664
    %v3666 = vand.u32 %v487, 4294901760
    %3667 = vmatmul.f32.gmra.mxu0 %v3666
    %v3668 = vpop.f32.mrf.mxu0
    %v3669 = vadd.f32 %v3388, %v3668
    %v3670 = vand.u32 %v491, 4294901760
    %3671 = vmatmul.f32.gmra.mxu0 %v3670
    %v3672 = vpop.f32.mrf.mxu0
    %v3673 = vadd.f32 %v3396, %v3672
    %v3674 = vand.u32 %v495, 4294901760
    %3675 = vmatmul.f32.gmra.mxu0 %v3674
    %v3676 = vpop.f32.mrf.mxu0
    %v3677 = vadd.f32 %v3404, %v3676
    %v3678 = vand.u32 %v499, 4294901760
    %3679 = vmatmul.f32.gmra.mxu0 %v3678
    %v3680 = vpop.f32.mrf.mxu0
    %v3681 = vadd.f32 %v3412, %v3680
    %v3682 = vand.u32 %v503, 4294901760
    %3683 = vmatmul.f32.gmra.mxu0 %v3682
    %v3684 = vpop.f32.mrf.mxu0
    %v3685 = vadd.f32 %v3420, %v3684
    %v3686 = vand.u32 %v507, 4294901760
    %3687 = vmatmul.f32.gmra.mxu0 %v3686
    %v3688 = vpop.f32.mrf.mxu0
    %v3689 = vadd.f32 %v3428, %v3688
    %v3690 = vand.u32 %v511, 4294901760
    %3691 = vmatmul.f32.gmra.mxu0 %v3690
    %v3692 = vpop.f32.mrf.mxu0
    %v3693 = vadd.f32 %v3436, %v3692
    %v3694 = vand.u32 %v515, 4294901760
    %3695 = vmatmul.f32.gmra.mxu0 %v3694
    %v3696 = vpop.f32.mrf.mxu0
    %v3697 = vadd.f32 %v3444, %v3696
    %v3698 = vand.u32 %v519, 4294901760
    %3699 = vmatmul.f32.gmra.mxu0 %v3698
    %v3700 = vpop.f32.mrf.mxu0
    %v3701 = vadd.f32 %v3452, %v3700
    %v3702 = vand.u32 %v523, 4294901760
    %3703 = vmatmul.f32.gmra.mxu0 %v3702
    %v3704 = vpop.f32.mrf.mxu0
    %v3705 = vadd.f32 %v3460, %v3704
    %v3706 = vand.u32 %v527, 4294901760
    %3707 = vmatmul.f32.gmra.mxu0 %v3706
    %v3708 = vpop.f32.mrf.mxu0
    %v3709 = vadd.f32 %v3468, %v3708
    %v3710 = vand.u32 %v531, 4294901760
    %3711 = vmatmul.f32.gmra.mxu0 %v3710
    %v3712 = vpop.f32.mrf.mxu0
    %v3713 = vadd.f32 %v3476, %v3712
    %v3714 = vand.u32 %v535, 4294901760
    %3715 = vmatmul.f32.gmra.mxu0 %v3714
    %v3716 = vpop.f32.mrf.mxu0
    %v3717 = vadd.f32 %v3484, %v3716
    %v3718 = vand.u32 %v539, 4294901760
    %3719 = vmatmul.f32.gmra.mxu0 %v3718
    %v3720 = vpop.f32.mrf.mxu0
    %v3721 = vadd.f32 %v3492, %v3720
    %v3722 = vand.u32 %v543, 4294901760
    %3723 = vmatmul.f32.gmra.mxu0 %v3722
    %v3724 = vpop.f32.mrf.mxu0
    %v3725 = vadd.f32 %v3500, %v3724
    %3726 = vdwg.mxu0
    %v3727 = vand.u32 %v592, 4294901760
    %v3728 = vsub.f32 %v592, %v3727
    %3729 = vmatpush.msra.mxu0 %v3728
    %v3730 = vand.u32 %v591, 4294901760
    %v3731 = vsub.f32 %v591, %v3730
    %3732 = vmatpush.msra.mxu0 %v3731
    %v3733 = vand.u32 %v590, 4294901760
    %v3734 = vsub.f32 %v590, %v3733
    %3735 = vmatpush.msra.mxu0 %v3734
    %v3736 = vand.u32 %v589, 4294901760
    %v3737 = vsub.f32 %v589, %v3736
    %3738 = vmatpush.msra.mxu0 %v3737
    %v3739 = vand.u32 %v588, 4294901760
    %v3740 = vsub.f32 %v588, %v3739
    %3741 = vmatpush.msra.mxu0 %v3740
    %v3742 = vand.u32 %v587, 4294901760
    %v3743 = vsub.f32 %v587, %v3742
    %3744 = vmatpush.msra.mxu0 %v3743
    %v3745 = vand.u32 %v586, 4294901760
    %v3746 = vsub.f32 %v586, %v3745
    %3747 = vmatpush.msra.mxu0 %v3746
    %v3748 = vand.u32 %v585, 4294901760
    %v3749 = vsub.f32 %v585, %v3748
    %3750 = vmatpush.msra.mxu0 %v3749
    %v3751 = vand.u32 %v584, 4294901760
    %v3752 = vsub.f32 %v584, %v3751
    %3753 = vmatpush.msra.mxu0 %v3752
    %v3754 = vand.u32 %v583, 4294901760
    %v3755 = vsub.f32 %v583, %v3754
    %3756 = vmatpush.msra.mxu0 %v3755
    %v3757 = vand.u32 %v582, 4294901760
    %v3758 = vsub.f32 %v582, %v3757
    %3759 = vmatpush.msra.mxu0 %v3758
    %v3760 = vand.u32 %v581, 4294901760
    %v3761 = vsub.f32 %v581, %v3760
    %3762 = vmatpush.msra.mxu0 %v3761
    %v3763 = vand.u32 %v580, 4294901760
    %v3764 = vsub.f32 %v580, %v3763
    %3765 = vmatpush.msra.mxu0 %v3764
    %v3766 = vand.u32 %v579, 4294901760
    %v3767 = vsub.f32 %v579, %v3766
    %3768 = vmatpush.msra.mxu0 %v3767
    %v3769 = vand.u32 %v578, 4294901760
    %v3770 = vsub.f32 %v578, %v3769
    %3771 = vmatpush.msra.mxu0 %v3770
    %v3772 = vand.u32 %v577, 4294901760
    %v3773 = vsub.f32 %v577, %v3772
    %3774 = vmatpush.msra.mxu0 %v3773
    %v3775 = vand.u32 %v419, 4294901760
    %v3776 = vsub.f32 %v419, %v3775
    %3777 = vmatmul.f32.gmra.mxu0 %v3776
    %v3778 = vpop.f32.mrf.mxu0
    %v3779 = vadd.f32 %v3601, %v3778
    %v3780 = vand.u32 %v423, 4294901760
    %v3781 = vsub.f32 %v423, %v3780
    %3782 = vmatmul.f32.gmra.mxu0 %v3781
    %v3783 = vpop.f32.mrf.mxu0
    %v3784 = vadd.f32 %v3605, %v3783
    %v3785 = vand.u32 %v427, 4294901760
    %v3786 = vsub.f32 %v427, %v3785
    %3787 = vmatmul.f32.gmra.mxu0 %v3786
    %v3788 = vpop.f32.mrf.mxu0
    %v3789 = vadd.f32 %v3609, %v3788
    %v3790 = vand.u32 %v431, 4294901760
    %v3791 = vsub.f32 %v431, %v3790
    %3792 = vmatmul.f32.gmra.mxu0 %v3791
    %v3793 = vpop.f32.mrf.mxu0
    %v3794 = vadd.f32 %v3613, %v3793
    %v3795 = vand.u32 %v435, 4294901760
    %v3796 = vsub.f32 %v435, %v3795
    %3797 = vmatmul.f32.gmra.mxu0 %v3796
    %v3798 = vpop.f32.mrf.mxu0
    %v3799 = vadd.f32 %v3617, %v3798
    %v3800 = vand.u32 %v439, 4294901760
    %v3801 = vsub.f32 %v439, %v3800
    %3802 = vmatmul.f32.gmra.mxu0 %v3801
    %v3803 = vpop.f32.mrf.mxu0
    %v3804 = vadd.f32 %v3621, %v3803
    %v3805 = vand.u32 %v443, 4294901760
    %v3806 = vsub.f32 %v443, %v3805
    %3807 = vmatmul.f32.gmra.mxu0 %v3806
    %v3808 = vpop.f32.mrf.mxu0
    %v3809 = vadd.f32 %v3625, %v3808
    %v3810 = vand.u32 %v447, 4294901760
    %v3811 = vsub.f32 %v447, %v3810
    %3812 = vmatmul.f32.gmra.mxu0 %v3811
    %v3813 = vpop.f32.mrf.mxu0
    %v3814 = vadd.f32 %v3629, %v3813
    %v3815 = vand.u32 %v451, 4294901760
    %v3816 = vsub.f32 %v451, %v3815
    %3817 = vmatmul.f32.gmra.mxu0 %v3816
    %v3818 = vpop.f32.mrf.mxu0
    %v3819 = vadd.f32 %v3633, %v3818
    %v3820 = vand.u32 %v455, 4294901760
    %v3821 = vsub.f32 %v455, %v3820
    %3822 = vmatmul.f32.gmra.mxu0 %v3821
    %v3823 = vpop.f32.mrf.mxu0
    %v3824 = vadd.f32 %v3637, %v3823
    %v3825 = vand.u32 %v459, 4294901760
    %v3826 = vsub.f32 %v459, %v3825
    %3827 = vmatmul.f32.gmra.mxu0 %v3826
    %v3828 = vpop.f32.mrf.mxu0
    %v3829 = vadd.f32 %v3641, %v3828
    %v3830 = vand.u32 %v463, 4294901760
    %v3831 = vsub.f32 %v463, %v3830
    %3832 = vmatmul.f32.gmra.mxu0 %v3831
    %v3833 = vpop.f32.mrf.mxu0
    %v3834 = vadd.f32 %v3645, %v3833
    %v3835 = vand.u32 %v467, 4294901760
    %v3836 = vsub.f32 %v467, %v3835
    %3837 = vmatmul.f32.gmra.mxu0 %v3836
    %v3838 = vpop.f32.mrf.mxu0
    %v3839 = vadd.f32 %v3649, %v3838
    %v3840 = vand.u32 %v471, 4294901760
    %v3841 = vsub.f32 %v471, %v3840
    %3842 = vmatmul.f32.gmra.mxu0 %v3841
    %v3843 = vpop.f32.mrf.mxu0
    %v3844 = vadd.f32 %v3653, %v3843
    %v3845 = vand.u32 %v475, 4294901760
    %v3846 = vsub.f32 %v475, %v3845
    %3847 = vmatmul.f32.gmra.mxu0 %v3846
    %v3848 = vpop.f32.mrf.mxu0
    %v3849 = vadd.f32 %v3657, %v3848
    %v3850 = vand.u32 %v479, 4294901760
    %v3851 = vsub.f32 %v479, %v3850
    %3852 = vmatmul.f32.gmra.mxu0 %v3851
    %v3853 = vpop.f32.mrf.mxu0
    %v3854 = vadd.f32 %v3661, %v3853
    %v3855 = vand.u32 %v483, 4294901760
    %v3856 = vsub.f32 %v483, %v3855
    %3857 = vmatmul.f32.gmra.mxu0 %v3856
    %v3858 = vpop.f32.mrf.mxu0
    %v3859 = vadd.f32 %v3665, %v3858
    %v3860 = vand.u32 %v487, 4294901760
    %v3861 = vsub.f32 %v487, %v3860
    %3862 = vmatmul.f32.gmra.mxu0 %v3861
    %v3863 = vpop.f32.mrf.mxu0
    %v3864 = vadd.f32 %v3669, %v3863
    %v3865 = vand.u32 %v491, 4294901760
    %v3866 = vsub.f32 %v491, %v3865
    %3867 = vmatmul.f32.gmra.mxu0 %v3866
    %v3868 = vpop.f32.mrf.mxu0
    %v3869 = vadd.f32 %v3673, %v3868
    %v3870 = vand.u32 %v495, 4294901760
    %v3871 = vsub.f32 %v495, %v3870
    %3872 = vmatmul.f32.gmra.mxu0 %v3871
    %v3873 = vpop.f32.mrf.mxu0
    %v3874 = vadd.f32 %v3677, %v3873
    %v3875 = vand.u32 %v499, 4294901760
    %v3876 = vsub.f32 %v499, %v3875
    %3877 = vmatmul.f32.gmra.mxu0 %v3876
    %v3878 = vpop.f32.mrf.mxu0
    %v3879 = vadd.f32 %v3681, %v3878
    %v3880 = vand.u32 %v503, 4294901760
    %v3881 = vsub.f32 %v503, %v3880
    %3882 = vmatmul.f32.gmra.mxu0 %v3881
    %v3883 = vpop.f32.mrf.mxu0
    %v3884 = vadd.f32 %v3685, %v3883
    %v3885 = vand.u32 %v507, 4294901760
    %v3886 = vsub.f32 %v507, %v3885
    %3887 = vmatmul.f32.gmra.mxu0 %v3886
    %v3888 = vpop.f32.mrf.mxu0
    %v3889 = vadd.f32 %v3689, %v3888
    %v3890 = vand.u32 %v511, 4294901760
    %v3891 = vsub.f32 %v511, %v3890
    %3892 = vmatmul.f32.gmra.mxu0 %v3891
    %v3893 = vpop.f32.mrf.mxu0
    %v3894 = vadd.f32 %v3693, %v3893
    %v3895 = vand.u32 %v515, 4294901760
    %v3896 = vsub.f32 %v515, %v3895
    %3897 = vmatmul.f32.gmra.mxu0 %v3896
    %v3898 = vpop.f32.mrf.mxu0
    %v3899 = vadd.f32 %v3697, %v3898
    %v3900 = vand.u32 %v519, 4294901760
    %v3901 = vsub.f32 %v519, %v3900
    %3902 = vmatmul.f32.gmra.mxu0 %v3901
    %v3903 = vpop.f32.mrf.mxu0
    %v3904 = vadd.f32 %v3701, %v3903
    %v3905 = vand.u32 %v523, 4294901760
    %v3906 = vsub.f32 %v523, %v3905
    %3907 = vmatmul.f32.gmra.mxu0 %v3906
    %v3908 = vpop.f32.mrf.mxu0
    %v3909 = vadd.f32 %v3705, %v3908
    %v3910 = vand.u32 %v527, 4294901760
    %v3911 = vsub.f32 %v527, %v3910
    %3912 = vmatmul.f32.gmra.mxu0 %v3911
    %v3913 = vpop.f32.mrf.mxu0
    %v3914 = vadd.f32 %v3709, %v3913
    %v3915 = vand.u32 %v531, 4294901760
    %v3916 = vsub.f32 %v531, %v3915
    %3917 = vmatmul.f32.gmra.mxu0 %v3916
    %v3918 = vpop.f32.mrf.mxu0
    %v3919 = vadd.f32 %v3713, %v3918
    %v3920 = vand.u32 %v535, 4294901760
    %v3921 = vsub.f32 %v535, %v3920
    %3922 = vmatmul.f32.gmra.mxu0 %v3921
    %v3923 = vpop.f32.mrf.mxu0
    %v3924 = vadd.f32 %v3717, %v3923
    %v3925 = vand.u32 %v539, 4294901760
    %v3926 = vsub.f32 %v539, %v3925
    %3927 = vmatmul.f32.gmra.mxu0 %v3926
    %v3928 = vpop.f32.mrf.mxu0
    %v3929 = vadd.f32 %v3721, %v3928
    %v3930 = vand.u32 %v543, 4294901760
    %v3931 = vsub.f32 %v543, %v3930
    %3932 = vmatmul.f32.gmra.mxu0 %v3931
    %v3933 = vpop.f32.mrf.mxu0
    %v3934 = vadd.f32 %v3725, %v3933
    %3935 = vdwg.mxu0
    %v3936 = vand.u32 %v592, 4294901760
    %3937 = vmatpush.msra.mxu0 %v3936
    %v3938 = vand.u32 %v591, 4294901760
    %3939 = vmatpush.msra.mxu0 %v3938
    %v3940 = vand.u32 %v590, 4294901760
    %3941 = vmatpush.msra.mxu0 %v3940
    %v3942 = vand.u32 %v589, 4294901760
    %3943 = vmatpush.msra.mxu0 %v3942
    %v3944 = vand.u32 %v588, 4294901760
    %3945 = vmatpush.msra.mxu0 %v3944
    %v3946 = vand.u32 %v587, 4294901760
    %3947 = vmatpush.msra.mxu0 %v3946
    %v3948 = vand.u32 %v586, 4294901760
    %3949 = vmatpush.msra.mxu0 %v3948
    %v3950 = vand.u32 %v585, 4294901760
    %3951 = vmatpush.msra.mxu0 %v3950
    %v3952 = vand.u32 %v584, 4294901760
    %3953 = vmatpush.msra.mxu0 %v3952
    %v3954 = vand.u32 %v583, 4294901760
    %3955 = vmatpush.msra.mxu0 %v3954
    %v3956 = vand.u32 %v582, 4294901760
    %3957 = vmatpush.msra.mxu0 %v3956
    %v3958 = vand.u32 %v581, 4294901760
    %3959 = vmatpush.msra.mxu0 %v3958
    %v3960 = vand.u32 %v580, 4294901760
    %3961 = vmatpush.msra.mxu0 %v3960
    %v3962 = vand.u32 %v579, 4294901760
    %3963 = vmatpush.msra.mxu0 %v3962
    %v3964 = vand.u32 %v578, 4294901760
    %3965 = vmatpush.msra.mxu0 %v3964
    %v3966 = vand.u32 %v577, 4294901760
    %3967 = vmatpush.msra.mxu0 %v3966
    %v3968 = vand.u32 %v419, 4294901760
    %v3969 = vsub.f32 %v419, %v3968
    %v3970 = vand.u32 %v3969, 4294901760
    %3971 = vmatmul.f32.gmra.mxu0 %v3970
    %v3972 = vpop.f32.mrf.mxu0
    %v3973 = vadd.f32 %v3779, %v3972
    %v3974 = vand.u32 %v423, 4294901760
    %v3975 = vsub.f32 %v423, %v3974
    %v3976 = vand.u32 %v3975, 4294901760
    %3977 = vmatmul.f32.gmra.mxu0 %v3976
    %v3978 = vpop.f32.mrf.mxu0
    %v3979 = vadd.f32 %v3784, %v3978
    %v3980 = vand.u32 %v427, 4294901760
    %v3981 = vsub.f32 %v427, %v3980
    %v3982 = vand.u32 %v3981, 4294901760
    %3983 = vmatmul.f32.gmra.mxu0 %v3982
    %v3984 = vpop.f32.mrf.mxu0
    %v3985 = vadd.f32 %v3789, %v3984
    %v3986 = vand.u32 %v431, 4294901760
    %v3987 = vsub.f32 %v431, %v3986
    %v3988 = vand.u32 %v3987, 4294901760
    %3989 = vmatmul.f32.gmra.mxu0 %v3988
    %v3990 = vpop.f32.mrf.mxu0
    %v3991 = vadd.f32 %v3794, %v3990
    %v3992 = vand.u32 %v435, 4294901760
    %v3993 = vsub.f32 %v435, %v3992
    %v3994 = vand.u32 %v3993, 4294901760
    %3995 = vmatmul.f32.gmra.mxu0 %v3994
    %v3996 = vpop.f32.mrf.mxu0
    %v3997 = vadd.f32 %v3799, %v3996
    %v3998 = vand.u32 %v439, 4294901760
    %v3999 = vsub.f32 %v439, %v3998
    %v4000 = vand.u32 %v3999, 4294901760
    %4001 = vmatmul.f32.gmra.mxu0 %v4000
    %v4002 = vpop.f32.mrf.mxu0
    %v4003 = vadd.f32 %v3804, %v4002
    %v4004 = vand.u32 %v443, 4294901760
    %v4005 = vsub.f32 %v443, %v4004
    %v4006 = vand.u32 %v4005, 4294901760
    %4007 = vmatmul.f32.gmra.mxu0 %v4006
    %v4008 = vpop.f32.mrf.mxu0
    %v4009 = vadd.f32 %v3809, %v4008
    %v4010 = vand.u32 %v447, 4294901760
    %v4011 = vsub.f32 %v447, %v4010
    %v4012 = vand.u32 %v4011, 4294901760
    %4013 = vmatmul.f32.gmra.mxu0 %v4012
    %v4014 = vpop.f32.mrf.mxu0
    %v4015 = vadd.f32 %v3814, %v4014
    %v4016 = vand.u32 %v451, 4294901760
    %v4017 = vsub.f32 %v451, %v4016
    %v4018 = vand.u32 %v4017, 4294901760
    %4019 = vmatmul.f32.gmra.mxu0 %v4018
    %v4020 = vpop.f32.mrf.mxu0
    %v4021 = vadd.f32 %v3819, %v4020
    %v4022 = vand.u32 %v455, 4294901760
    %v4023 = vsub.f32 %v455, %v4022
    %v4024 = vand.u32 %v4023, 4294901760
    %4025 = vmatmul.f32.gmra.mxu0 %v4024
    %v4026 = vpop.f32.mrf.mxu0
    %v4027 = vadd.f32 %v3824, %v4026
    %v4028 = vand.u32 %v459, 4294901760
    %v4029 = vsub.f32 %v459, %v4028
    %v4030 = vand.u32 %v4029, 4294901760
    %4031 = vmatmul.f32.gmra.mxu0 %v4030
    %v4032 = vpop.f32.mrf.mxu0
    %v4033 = vadd.f32 %v3829, %v4032
    %v4034 = vand.u32 %v463, 4294901760
    %v4035 = vsub.f32 %v463, %v4034
    %v4036 = vand.u32 %v4035, 4294901760
    %4037 = vmatmul.f32.gmra.mxu0 %v4036
    %v4038 = vpop.f32.mrf.mxu0
    %v4039 = vadd.f32 %v3834, %v4038
    %v4040 = vand.u32 %v467, 4294901760
    %v4041 = vsub.f32 %v467, %v4040
    %v4042 = vand.u32 %v4041, 4294901760
    %4043 = vmatmul.f32.gmra.mxu0 %v4042
    %v4044 = vpop.f32.mrf.mxu0
    %v4045 = vadd.f32 %v3839, %v4044
    %v4046 = vand.u32 %v471, 4294901760
    %v4047 = vsub.f32 %v471, %v4046
    %v4048 = vand.u32 %v4047, 4294901760
    %4049 = vmatmul.f32.gmra.mxu0 %v4048
    %v4050 = vpop.f32.mrf.mxu0
    %v4051 = vadd.f32 %v3844, %v4050
    %v4052 = vand.u32 %v475, 4294901760
    %v4053 = vsub.f32 %v475, %v4052
    %v4054 = vand.u32 %v4053, 4294901760
    %4055 = vmatmul.f32.gmra.mxu0 %v4054
    %v4056 = vpop.f32.mrf.mxu0
    %v4057 = vadd.f32 %v3849, %v4056
    %v4058 = vand.u32 %v479, 4294901760
    %v4059 = vsub.f32 %v479, %v4058
    %v4060 = vand.u32 %v4059, 4294901760
    %4061 = vmatmul.f32.gmra.mxu0 %v4060
    %v4062 = vpop.f32.mrf.mxu0
    %v4063 = vadd.f32 %v3854, %v4062
    %v4064 = vand.u32 %v483, 4294901760
    %v4065 = vsub.f32 %v483, %v4064
    %v4066 = vand.u32 %v4065, 4294901760
    %4067 = vmatmul.f32.gmra.mxu0 %v4066
    %v4068 = vpop.f32.mrf.mxu0
    %v4069 = vadd.f32 %v3859, %v4068
    %v4070 = vand.u32 %v487, 4294901760
    %v4071 = vsub.f32 %v487, %v4070
    %v4072 = vand.u32 %v4071, 4294901760
    %4073 = vmatmul.f32.gmra.mxu0 %v4072
    %v4074 = vpop.f32.mrf.mxu0
    %v4075 = vadd.f32 %v3864, %v4074
    %v4076 = vand.u32 %v491, 4294901760
    %v4077 = vsub.f32 %v491, %v4076
    %v4078 = vand.u32 %v4077, 4294901760
    %4079 = vmatmul.f32.gmra.mxu0 %v4078
    %v4080 = vpop.f32.mrf.mxu0
    %v4081 = vadd.f32 %v3869, %v4080
    %v4082 = vand.u32 %v495, 4294901760
    %v4083 = vsub.f32 %v495, %v4082
    %v4084 = vand.u32 %v4083, 4294901760
    %4085 = vmatmul.f32.gmra.mxu0 %v4084
    %v4086 = vpop.f32.mrf.mxu0
    %v4087 = vadd.f32 %v3874, %v4086
    %v4088 = vand.u32 %v499, 4294901760
    %v4089 = vsub.f32 %v499, %v4088
    %v4090 = vand.u32 %v4089, 4294901760
    %4091 = vmatmul.f32.gmra.mxu0 %v4090
    %v4092 = vpop.f32.mrf.mxu0
    %v4093 = vadd.f32 %v3879, %v4092
    %v4094 = vand.u32 %v503, 4294901760
    %v4095 = vsub.f32 %v503, %v4094
    %v4096 = vand.u32 %v4095, 4294901760
    %4097 = vmatmul.f32.gmra.mxu0 %v4096
    %v4098 = vpop.f32.mrf.mxu0
    %v4099 = vadd.f32 %v3884, %v4098
    %v4100 = vand.u32 %v507, 4294901760
    %v4101 = vsub.f32 %v507, %v4100
    %v4102 = vand.u32 %v4101, 4294901760
    %4103 = vmatmul.f32.gmra.mxu0 %v4102
    %v4104 = vpop.f32.mrf.mxu0
    %v4105 = vadd.f32 %v3889, %v4104
    %v4106 = vand.u32 %v511, 4294901760
    %v4107 = vsub.f32 %v511, %v4106
    %v4108 = vand.u32 %v4107, 4294901760
    %4109 = vmatmul.f32.gmra.mxu0 %v4108
    %v4110 = vpop.f32.mrf.mxu0
    %v4111 = vadd.f32 %v3894, %v4110
    %v4112 = vand.u32 %v515, 4294901760
    %v4113 = vsub.f32 %v515, %v4112
    %v4114 = vand.u32 %v4113, 4294901760
    %4115 = vmatmul.f32.gmra.mxu0 %v4114
    %v4116 = vpop.f32.mrf.mxu0
    %v4117 = vadd.f32 %v3899, %v4116
    %v4118 = vand.u32 %v519, 4294901760
    %v4119 = vsub.f32 %v519, %v4118
    %v4120 = vand.u32 %v4119, 4294901760
    %4121 = vmatmul.f32.gmra.mxu0 %v4120
    %v4122 = vpop.f32.mrf.mxu0
    %v4123 = vadd.f32 %v3904, %v4122
    %v4124 = vand.u32 %v523, 4294901760
    %v4125 = vsub.f32 %v523, %v4124
    %v4126 = vand.u32 %v4125, 4294901760
    %4127 = vmatmul.f32.gmra.mxu0 %v4126
    %v4128 = vpop.f32.mrf.mxu0
    %v4129 = vadd.f32 %v3909, %v4128
    %v4130 = vand.u32 %v527, 4294901760
    %v4131 = vsub.f32 %v527, %v4130
    %v4132 = vand.u32 %v4131, 4294901760
    %4133 = vmatmul.f32.gmra.mxu0 %v4132
    %v4134 = vpop.f32.mrf.mxu0
    %v4135 = vadd.f32 %v3914, %v4134
    %v4136 = vand.u32 %v531, 4294901760
    %v4137 = vsub.f32 %v531, %v4136
    %v4138 = vand.u32 %v4137, 4294901760
    %4139 = vmatmul.f32.gmra.mxu0 %v4138
    %v4140 = vpop.f32.mrf.mxu0
    %v4141 = vadd.f32 %v3919, %v4140
    %v4142 = vand.u32 %v535, 4294901760
    %v4143 = vsub.f32 %v535, %v4142
    %v4144 = vand.u32 %v4143, 4294901760
    %4145 = vmatmul.f32.gmra.mxu0 %v4144
    %v4146 = vpop.f32.mrf.mxu0
    %v4147 = vadd.f32 %v3924, %v4146
    %v4148 = vand.u32 %v539, 4294901760
    %v4149 = vsub.f32 %v539, %v4148
    %v4150 = vand.u32 %v4149, 4294901760
    %4151 = vmatmul.f32.gmra.mxu0 %v4150
    %v4152 = vpop.f32.mrf.mxu0
    %v4153 = vadd.f32 %v3929, %v4152
    %v4154 = vand.u32 %v543, 4294901760
    %v4155 = vsub.f32 %v543, %v4154
    %v4156 = vand.u32 %v4155, 4294901760
    %4157 = vmatmul.f32.gmra.mxu0 %v4156
    %v4158 = vpop.f32.mrf.mxu0
    %v4159 = vadd.f32 %v3934, %v4158
    %4160 = vdwg.mxu0
    %v4161 = vand.u32 %v592, 4294901760
    %v4162 = vsub.f32 %v592, %v4161
    %v4163 = vand.u32 %v4162, 4294901760
    %4164 = vmatpush.msra.mxu0 %v4163
    %v4165 = vand.u32 %v591, 4294901760
    %v4166 = vsub.f32 %v591, %v4165
    %v4167 = vand.u32 %v4166, 4294901760
    %4168 = vmatpush.msra.mxu0 %v4167
    %v4169 = vand.u32 %v590, 4294901760
    %v4170 = vsub.f32 %v590, %v4169
    %v4171 = vand.u32 %v4170, 4294901760
    %4172 = vmatpush.msra.mxu0 %v4171
    %v4173 = vand.u32 %v589, 4294901760
    %v4174 = vsub.f32 %v589, %v4173
    %v4175 = vand.u32 %v4174, 4294901760
    %4176 = vmatpush.msra.mxu0 %v4175
    %v4177 = vand.u32 %v588, 4294901760
    %v4178 = vsub.f32 %v588, %v4177
    %v4179 = vand.u32 %v4178, 4294901760
    %4180 = vmatpush.msra.mxu0 %v4179
    %v4181 = vand.u32 %v587, 4294901760
    %v4182 = vsub.f32 %v587, %v4181
    %v4183 = vand.u32 %v4182, 4294901760
    %4184 = vmatpush.msra.mxu0 %v4183
    %v4185 = vand.u32 %v586, 4294901760
    %v4186 = vsub.f32 %v586, %v4185
    %v4187 = vand.u32 %v4186, 4294901760
    %4188 = vmatpush.msra.mxu0 %v4187
    %v4189 = vand.u32 %v585, 4294901760
    %v4190 = vsub.f32 %v585, %v4189
    %v4191 = vand.u32 %v4190, 4294901760
    %4192 = vmatpush.msra.mxu0 %v4191
    %v4193 = vand.u32 %v584, 4294901760
    %v4194 = vsub.f32 %v584, %v4193
    %v4195 = vand.u32 %v4194, 4294901760
    %4196 = vmatpush.msra.mxu0 %v4195
    %v4197 = vand.u32 %v583, 4294901760
    %v4198 = vsub.f32 %v583, %v4197
    %v4199 = vand.u32 %v4198, 4294901760
    %4200 = vmatpush.msra.mxu0 %v4199
    %v4201 = vand.u32 %v582, 4294901760
    %v4202 = vsub.f32 %v582, %v4201
    %v4203 = vand.u32 %v4202, 4294901760
    %4204 = vmatpush.msra.mxu0 %v4203
    %v4205 = vand.u32 %v581, 4294901760
    %v4206 = vsub.f32 %v581, %v4205
    %v4207 = vand.u32 %v4206, 4294901760
    %4208 = vmatpush.msra.mxu0 %v4207
    %v4209 = vand.u32 %v580, 4294901760
    %v4210 = vsub.f32 %v580, %v4209
    %v4211 = vand.u32 %v4210, 4294901760
    %4212 = vmatpush.msra.mxu0 %v4211
    %v4213 = vand.u32 %v579, 4294901760
    %v4214 = vsub.f32 %v579, %v4213
    %v4215 = vand.u32 %v4214, 4294901760
    %4216 = vmatpush.msra.mxu0 %v4215
    %v4217 = vand.u32 %v578, 4294901760
    %v4218 = vsub.f32 %v578, %v4217
    %v4219 = vand.u32 %v4218, 4294901760
    %4220 = vmatpush.msra.mxu0 %v4219
    %v4221 = vand.u32 %v577, 4294901760
    %v4222 = vsub.f32 %v577, %v4221
    %v4223 = vand.u32 %v4222, 4294901760
    %4224 = vmatpush.msra.mxu0 %v4223
    %v4225 = vand.u32 %v419, 4294901760
    %4226 = vmatmul.f32.gmra.mxu0 %v4225
    %v4227 = vpop.f32.mrf.mxu0
    %v4228 = vadd.f32 %v3973, %v4227
    %v4229 = vand.u32 %v423, 4294901760
    %4230 = vmatmul.f32.gmra.mxu0 %v4229
    %v4231 = vpop.f32.mrf.mxu0
    %v4232 = vadd.f32 %v3979, %v4231
    %v4233 = vand.u32 %v427, 4294901760
    %4234 = vmatmul.f32.gmra.mxu0 %v4233
    %v4235 = vpop.f32.mrf.mxu0
    %v4236 = vadd.f32 %v3985, %v4235
    %v4237 = vand.u32 %v431, 4294901760
    %4238 = vmatmul.f32.gmra.mxu0 %v4237
    %v4239 = vpop.f32.mrf.mxu0
    %v4240 = vadd.f32 %v3991, %v4239
    %v4241 = vand.u32 %v435, 4294901760
    %4242 = vmatmul.f32.gmra.mxu0 %v4241
    %v4243 = vpop.f32.mrf.mxu0
    %v4244 = vadd.f32 %v3997, %v4243
    %v4245 = vand.u32 %v439, 4294901760
    %4246 = vmatmul.f32.gmra.mxu0 %v4245
    %v4247 = vpop.f32.mrf.mxu0
    %v4248 = vadd.f32 %v4003, %v4247
    %v4249 = vand.u32 %v443, 4294901760
    %4250 = vmatmul.f32.gmra.mxu0 %v4249
    %v4251 = vpop.f32.mrf.mxu0
    %v4252 = vadd.f32 %v4009, %v4251
    %v4253 = vand.u32 %v447, 4294901760
    %4254 = vmatmul.f32.gmra.mxu0 %v4253
    %v4255 = vpop.f32.mrf.mxu0
    %v4256 = vadd.f32 %v4015, %v4255
    %v4257 = vand.u32 %v451, 4294901760
    %4258 = vmatmul.f32.gmra.mxu0 %v4257
    %v4259 = vpop.f32.mrf.mxu0
    %v4260 = vadd.f32 %v4021, %v4259
    %v4261 = vand.u32 %v455, 4294901760
    %4262 = vmatmul.f32.gmra.mxu0 %v4261
    %v4263 = vpop.f32.mrf.mxu0
    %v4264 = vadd.f32 %v4027, %v4263
    %v4265 = vand.u32 %v459, 4294901760
    %4266 = vmatmul.f32.gmra.mxu0 %v4265
    %v4267 = vpop.f32.mrf.mxu0
    %v4268 = vadd.f32 %v4033, %v4267
    %v4269 = vand.u32 %v463, 4294901760
    %4270 = vmatmul.f32.gmra.mxu0 %v4269
    %v4271 = vpop.f32.mrf.mxu0
    %v4272 = vadd.f32 %v4039, %v4271
    %v4273 = vand.u32 %v467, 4294901760
    %4274 = vmatmul.f32.gmra.mxu0 %v4273
    %v4275 = vpop.f32.mrf.mxu0
    %v4276 = vadd.f32 %v4045, %v4275
    %v4277 = vand.u32 %v471, 4294901760
    %4278 = vmatmul.f32.gmra.mxu0 %v4277
    %v4279 = vpop.f32.mrf.mxu0
    %v4280 = vadd.f32 %v4051, %v4279
    %v4281 = vand.u32 %v475, 4294901760
    %4282 = vmatmul.f32.gmra.mxu0 %v4281
    %v4283 = vpop.f32.mrf.mxu0
    %v4284 = vadd.f32 %v4057, %v4283
    %v4285 = vand.u32 %v479, 4294901760
    %4286 = vmatmul.f32.gmra.mxu0 %v4285
    %v4287 = vpop.f32.mrf.mxu0
    %v4288 = vadd.f32 %v4063, %v4287
    %v4289 = vand.u32 %v483, 4294901760
    %4290 = vmatmul.f32.gmra.mxu0 %v4289
    %v4291 = vpop.f32.mrf.mxu0
    %v4292 = vadd.f32 %v4069, %v4291
    %v4293 = vand.u32 %v487, 4294901760
    %4294 = vmatmul.f32.gmra.mxu0 %v4293
    %v4295 = vpop.f32.mrf.mxu0
    %v4296 = vadd.f32 %v4075, %v4295
    %v4297 = vand.u32 %v491, 4294901760
    %4298 = vmatmul.f32.gmra.mxu0 %v4297
    %v4299 = vpop.f32.mrf.mxu0
    %v4300 = vadd.f32 %v4081, %v4299
    %v4301 = vand.u32 %v495, 4294901760
    %4302 = vmatmul.f32.gmra.mxu0 %v4301
    %v4303 = vpop.f32.mrf.mxu0
    %v4304 = vadd.f32 %v4087, %v4303
    %v4305 = vand.u32 %v499, 4294901760
    %4306 = vmatmul.f32.gmra.mxu0 %v4305
    %v4307 = vpop.f32.mrf.mxu0
    %v4308 = vadd.f32 %v4093, %v4307
    %v4309 = vand.u32 %v503, 4294901760
    %4310 = vmatmul.f32.gmra.mxu0 %v4309
    %v4311 = vpop.f32.mrf.mxu0
    %v4312 = vadd.f32 %v4099, %v4311
    %v4313 = vand.u32 %v507, 4294901760
    %4314 = vmatmul.f32.gmra.mxu0 %v4313
    %v4315 = vpop.f32.mrf.mxu0
    %v4316 = vadd.f32 %v4105, %v4315
    %v4317 = vand.u32 %v511, 4294901760
    %4318 = vmatmul.f32.gmra.mxu0 %v4317
    %v4319 = vpop.f32.mrf.mxu0
    %v4320 = vadd.f32 %v4111, %v4319
    %v4321 = vand.u32 %v515, 4294901760
    %4322 = vmatmul.f32.gmra.mxu0 %v4321
    %v4323 = vpop.f32.mrf.mxu0
    %v4324 = vadd.f32 %v4117, %v4323
    %v4325 = vand.u32 %v519, 4294901760
    %4326 = vmatmul.f32.gmra.mxu0 %v4325
    %v4327 = vpop.f32.mrf.mxu0
    %v4328 = vadd.f32 %v4123, %v4327
    %v4329 = vand.u32 %v523, 4294901760
    %4330 = vmatmul.f32.gmra.mxu0 %v4329
    %v4331 = vpop.f32.mrf.mxu0
    %v4332 = vadd.f32 %v4129, %v4331
    %v4333 = vand.u32 %v527, 4294901760
    %4334 = vmatmul.f32.gmra.mxu0 %v4333
    %v4335 = vpop.f32.mrf.mxu0
    %v4336 = vadd.f32 %v4135, %v4335
    %v4337 = vand.u32 %v531, 4294901760
    %4338 = vmatmul.f32.gmra.mxu0 %v4337
    %v4339 = vpop.f32.mrf.mxu0
    %v4340 = vadd.f32 %v4141, %v4339
    %v4341 = vand.u32 %v535, 4294901760
    %4342 = vmatmul.f32.gmra.mxu0 %v4341
    %v4343 = vpop.f32.mrf.mxu0
    %v4344 = vadd.f32 %v4147, %v4343
    %v4345 = vand.u32 %v539, 4294901760
    %4346 = vmatmul.f32.gmra.mxu0 %v4345
    %v4347 = vpop.f32.mrf.mxu0
    %v4348 = vadd.f32 %v4153, %v4347
    %v4349 = vand.u32 %v543, 4294901760
    %4350 = vmatmul.f32.gmra.mxu0 %v4349
    %v4351 = vpop.f32.mrf.mxu0
    %v4352 = vadd.f32 %v4159, %v4351
    %4353 = vdwg.mxu0
    %v4354 = vand.u32 %v592, 4294901760
    %4355 = vmatpush.msra.mxu0 %v4354
    %v4356 = vand.u32 %v591, 4294901760
    %4357 = vmatpush.msra.mxu0 %v4356
    %v4358 = vand.u32 %v590, 4294901760
    %4359 = vmatpush.msra.mxu0 %v4358
    %v4360 = vand.u32 %v589, 4294901760
    %4361 = vmatpush.msra.mxu0 %v4360
    %v4362 = vand.u32 %v588, 4294901760
    %4363 = vmatpush.msra.mxu0 %v4362
    %v4364 = vand.u32 %v587, 4294901760
    %4365 = vmatpush.msra.mxu0 %v4364
    %v4366 = vand.u32 %v586, 4294901760
    %4367 = vmatpush.msra.mxu0 %v4366
    %v4368 = vand.u32 %v585, 4294901760
    %4369 = vmatpush.msra.mxu0 %v4368
    %v4370 = vand.u32 %v584, 4294901760
    %4371 = vmatpush.msra.mxu0 %v4370
    %v4372 = vand.u32 %v583, 4294901760
    %4373 = vmatpush.msra.mxu0 %v4372
    %v4374 = vand.u32 %v582, 4294901760
    %4375 = vmatpush.msra.mxu0 %v4374
    %v4376 = vand.u32 %v581, 4294901760
    %4377 = vmatpush.msra.mxu0 %v4376
    %v4378 = vand.u32 %v580, 4294901760
    %4379 = vmatpush.msra.mxu0 %v4378
    %v4380 = vand.u32 %v579, 4294901760
    %4381 = vmatpush.msra.mxu0 %v4380
    %v4382 = vand.u32 %v578, 4294901760
    %4383 = vmatpush.msra.mxu0 %v4382
    %v4384 = vand.u32 %v577, 4294901760
    %4385 = vmatpush.msra.mxu0 %v4384
    %v4386 = vand.u32 %v419, 4294901760
    %4387 = vmatmul.f32.gmra.mxu0 %v4386
    %v4388 = vpop.f32.mrf.mxu0
    %v4389 = vadd.f32 %v4228, %v4388
    %v4390 = vand.u32 %v423, 4294901760
    %4391 = vmatmul.f32.gmra.mxu0 %v4390
    %v4392 = vpop.f32.mrf.mxu0
    %v4393 = vadd.f32 %v4232, %v4392
    %v4394 = vand.u32 %v427, 4294901760
    %4395 = vmatmul.f32.gmra.mxu0 %v4394
    %v4396 = vpop.f32.mrf.mxu0
    %v4397 = vadd.f32 %v4236, %v4396
    %v4398 = vand.u32 %v431, 4294901760
    %4399 = vmatmul.f32.gmra.mxu0 %v4398
    %v4400 = vpop.f32.mrf.mxu0
    %v4401 = vadd.f32 %v4240, %v4400
    %v4402 = vand.u32 %v435, 4294901760
    %4403 = vmatmul.f32.gmra.mxu0 %v4402
    %v4404 = vpop.f32.mrf.mxu0
    %v4405 = vadd.f32 %v4244, %v4404
    %v4406 = vand.u32 %v439, 4294901760
    %4407 = vmatmul.f32.gmra.mxu0 %v4406
    %v4408 = vpop.f32.mrf.mxu0
    %v4409 = vadd.f32 %v4248, %v4408
    %v4410 = vand.u32 %v443, 4294901760
    %4411 = vmatmul.f32.gmra.mxu0 %v4410
    %v4412 = vpop.f32.mrf.mxu0
    %v4413 = vadd.f32 %v4252, %v4412
    %v4414 = vand.u32 %v447, 4294901760
    %4415 = vmatmul.f32.gmra.mxu0 %v4414
    %v4416 = vpop.f32.mrf.mxu0
    %v4417 = vadd.f32 %v4256, %v4416
    %v4418 = vand.u32 %v451, 4294901760
    %4419 = vmatmul.f32.gmra.mxu0 %v4418
    %v4420 = vpop.f32.mrf.mxu0
    %v4421 = vadd.f32 %v4260, %v4420
    %v4422 = vand.u32 %v455, 4294901760
    %4423 = vmatmul.f32.gmra.mxu0 %v4422
    %v4424 = vpop.f32.mrf.mxu0
    %v4425 = vadd.f32 %v4264, %v4424
    %v4426 = vand.u32 %v459, 4294901760
    %4427 = vmatmul.f32.gmra.mxu0 %v4426
    %v4428 = vpop.f32.mrf.mxu0
    %v4429 = vadd.f32 %v4268, %v4428
    %v4430 = vand.u32 %v463, 4294901760
    %4431 = vmatmul.f32.gmra.mxu0 %v4430
    %v4432 = vpop.f32.mrf.mxu0
    %v4433 = vadd.f32 %v4272, %v4432
    %v4434 = vand.u32 %v467, 4294901760
    %4435 = vmatmul.f32.gmra.mxu0 %v4434
    %v4436 = vpop.f32.mrf.mxu0
    %v4437 = vadd.f32 %v4276, %v4436
    %v4438 = vand.u32 %v471, 4294901760
    %4439 = vmatmul.f32.gmra.mxu0 %v4438
    %v4440 = vpop.f32.mrf.mxu0
    %v4441 = vadd.f32 %v4280, %v4440
    %v4442 = vand.u32 %v475, 4294901760
    %4443 = vmatmul.f32.gmra.mxu0 %v4442
    %v4444 = vpop.f32.mrf.mxu0
    %v4445 = vadd.f32 %v4284, %v4444
    %v4446 = vand.u32 %v479, 4294901760
    %4447 = vmatmul.f32.gmra.mxu0 %v4446
    %v4448 = vpop.f32.mrf.mxu0
    %v4449 = vadd.f32 %v4288, %v4448
    %v4450 = vand.u32 %v483, 4294901760
    %4451 = vmatmul.f32.gmra.mxu0 %v4450
    %v4452 = vpop.f32.mrf.mxu0
    %v4453 = vadd.f32 %v4292, %v4452
    %v4454 = vand.u32 %v487, 4294901760
    %4455 = vmatmul.f32.gmra.mxu0 %v4454
    %v4456 = vpop.f32.mrf.mxu0
    %v4457 = vadd.f32 %v4296, %v4456
    %v4458 = vand.u32 %v491, 4294901760
    %4459 = vmatmul.f32.gmra.mxu0 %v4458
    %v4460 = vpop.f32.mrf.mxu0
    %v4461 = vadd.f32 %v4300, %v4460
    %v4462 = vand.u32 %v495, 4294901760
    %4463 = vmatmul.f32.gmra.mxu0 %v4462
    %v4464 = vpop.f32.mrf.mxu0
    %v4465 = vadd.f32 %v4304, %v4464
    %v4466 = vand.u32 %v499, 4294901760
    %4467 = vmatmul.f32.gmra.mxu0 %v4466
    %v4468 = vpop.f32.mrf.mxu0
    %v4469 = vadd.f32 %v4308, %v4468
    %v4470 = vand.u32 %v503, 4294901760
    %4471 = vmatmul.f32.gmra.mxu0 %v4470
    %v4472 = vpop.f32.mrf.mxu0
    %v4473 = vadd.f32 %v4312, %v4472
    %v4474 = vand.u32 %v507, 4294901760
    %4475 = vmatmul.f32.gmra.mxu0 %v4474
    %v4476 = vpop.f32.mrf.mxu0
    %v4477 = vadd.f32 %v4316, %v4476
    %v4478 = vand.u32 %v511, 4294901760
    %4479 = vmatmul.f32.gmra.mxu0 %v4478
    %v4480 = vpop.f32.mrf.mxu0
    %v4481 = vadd.f32 %v4320, %v4480
    %v4482 = vand.u32 %v515, 4294901760
    %4483 = vmatmul.f32.gmra.mxu0 %v4482
    %v4484 = vpop.f32.mrf.mxu0
    %v4485 = vadd.f32 %v4324, %v4484
    %v4486 = vand.u32 %v519, 4294901760
    %4487 = vmatmul.f32.gmra.mxu0 %v4486
    %v4488 = vpop.f32.mrf.mxu0
    %v4489 = vadd.f32 %v4328, %v4488
    %v4490 = vand.u32 %v523, 4294901760
    %4491 = vmatmul.f32.gmra.mxu0 %v4490
    %v4492 = vpop.f32.mrf.mxu0
    %v4493 = vadd.f32 %v4332, %v4492
    %v4494 = vand.u32 %v527, 4294901760
    %4495 = vmatmul.f32.gmra.mxu0 %v4494
    %v4496 = vpop.f32.mrf.mxu0
    %v4497 = vadd.f32 %v4336, %v4496
    %v4498 = vand.u32 %v531, 4294901760
    %4499 = vmatmul.f32.gmra.mxu0 %v4498
    %v4500 = vpop.f32.mrf.mxu0
    %v4501 = vadd.f32 %v4340, %v4500
    %v4502 = vand.u32 %v535, 4294901760
    %4503 = vmatmul.f32.gmra.mxu0 %v4502
    %v4504 = vpop.f32.mrf.mxu0
    %v4505 = vadd.f32 %v4344, %v4504
    %v4506 = vand.u32 %v539, 4294901760
    %4507 = vmatmul.f32.gmra.mxu0 %v4506
    %v4508 = vpop.f32.mrf.mxu0
    %v4509 = vadd.f32 %v4348, %v4508
    %v4510 = vand.u32 %v543, 4294901760
    %4511 = vmatmul.f32.gmra.mxu0 %v4510
    %v4512 = vpop.f32.mrf.mxu0
    %v4513 = vadd.f32 %v4352, %v4512
    %4514 = vdwg.mxu0
    %v4515 = vand.u32 %v608, 4294901760
    %4516 = vmatpush.msra.mxu0 %v4515
    %v4517 = vand.u32 %v607, 4294901760
    %4518 = vmatpush.msra.mxu0 %v4517
    %v4519 = vand.u32 %v606, 4294901760
    %4520 = vmatpush.msra.mxu0 %v4519
    %v4521 = vand.u32 %v605, 4294901760
    %4522 = vmatpush.msra.mxu0 %v4521
    %v4523 = vand.u32 %v604, 4294901760
    %4524 = vmatpush.msra.mxu0 %v4523
    %v4525 = vand.u32 %v603, 4294901760
    %4526 = vmatpush.msra.mxu0 %v4525
    %v4527 = vand.u32 %v602, 4294901760
    %4528 = vmatpush.msra.mxu0 %v4527
    %v4529 = vand.u32 %v601, 4294901760
    %4530 = vmatpush.msra.mxu0 %v4529
    %v4531 = vand.u32 %v600, 4294901760
    %4532 = vmatpush.msra.mxu0 %v4531
    %v4533 = vand.u32 %v599, 4294901760
    %4534 = vmatpush.msra.mxu0 %v4533
    %v4535 = vand.u32 %v598, 4294901760
    %4536 = vmatpush.msra.mxu0 %v4535
    %v4537 = vand.u32 %v597, 4294901760
    %4538 = vmatpush.msra.mxu0 %v4537
    %v4539 = vand.u32 %v596, 4294901760
    %4540 = vmatpush.msra.mxu0 %v4539
    %v4541 = vand.u32 %v595, 4294901760
    %4542 = vmatpush.msra.mxu0 %v4541
    %v4543 = vand.u32 %v594, 4294901760
    %4544 = vmatpush.msra.mxu0 %v4543
    %v4545 = vand.u32 %v593, 4294901760
    %4546 = vmatpush.msra.mxu0 %v4545
    %v4547 = vand.u32 %v420, 4294901760
    %v4548 = vsub.f32 %v420, %v4547
    %v4549 = vand.u32 %v4548, 4294901760
    %v4550 = vsub.f32 %v4548, %v4549
    %v4551 = vand.u32 %v4550, 4294901760
    %4552 = vmatmul.f32.gmra.mxu0 %v4551
    %v4553 = vpop.f32.mrf.mxu0
    %v4554 = vadd.f32 %v4389, %v4553
    %v4555 = vand.u32 %v424, 4294901760
    %v4556 = vsub.f32 %v424, %v4555
    %v4557 = vand.u32 %v4556, 4294901760
    %v4558 = vsub.f32 %v4556, %v4557
    %v4559 = vand.u32 %v4558, 4294901760
    %4560 = vmatmul.f32.gmra.mxu0 %v4559
    %v4561 = vpop.f32.mrf.mxu0
    %v4562 = vadd.f32 %v4393, %v4561
    %v4563 = vand.u32 %v428, 4294901760
    %v4564 = vsub.f32 %v428, %v4563
    %v4565 = vand.u32 %v4564, 4294901760
    %v4566 = vsub.f32 %v4564, %v4565
    %v4567 = vand.u32 %v4566, 4294901760
    %4568 = vmatmul.f32.gmra.mxu0 %v4567
    %v4569 = vpop.f32.mrf.mxu0
    %v4570 = vadd.f32 %v4397, %v4569
    %v4571 = vand.u32 %v432, 4294901760
    %v4572 = vsub.f32 %v432, %v4571
    %v4573 = vand.u32 %v4572, 4294901760
    %v4574 = vsub.f32 %v4572, %v4573
    %v4575 = vand.u32 %v4574, 4294901760
    %4576 = vmatmul.f32.gmra.mxu0 %v4575
    %v4577 = vpop.f32.mrf.mxu0
    %v4578 = vadd.f32 %v4401, %v4577
    %v4579 = vand.u32 %v436, 4294901760
    %v4580 = vsub.f32 %v436, %v4579
    %v4581 = vand.u32 %v4580, 4294901760
    %v4582 = vsub.f32 %v4580, %v4581
    %v4583 = vand.u32 %v4582, 4294901760
    %4584 = vmatmul.f32.gmra.mxu0 %v4583
    %v4585 = vpop.f32.mrf.mxu0
    %v4586 = vadd.f32 %v4405, %v4585
    %v4587 = vand.u32 %v440, 4294901760
    %v4588 = vsub.f32 %v440, %v4587
    %v4589 = vand.u32 %v4588, 4294901760
    %v4590 = vsub.f32 %v4588, %v4589
    %v4591 = vand.u32 %v4590, 4294901760
    %4592 = vmatmul.f32.gmra.mxu0 %v4591
    %v4593 = vpop.f32.mrf.mxu0
    %v4594 = vadd.f32 %v4409, %v4593
    %v4595 = vand.u32 %v444, 4294901760
    %v4596 = vsub.f32 %v444, %v4595
    %v4597 = vand.u32 %v4596, 4294901760
    %v4598 = vsub.f32 %v4596, %v4597
    %v4599 = vand.u32 %v4598, 4294901760
    %4600 = vmatmul.f32.gmra.mxu0 %v4599
    %v4601 = vpop.f32.mrf.mxu0
    %v4602 = vadd.f32 %v4413, %v4601
    %v4603 = vand.u32 %v448, 4294901760
    %v4604 = vsub.f32 %v448, %v4603
    %v4605 = vand.u32 %v4604, 4294901760
    %v4606 = vsub.f32 %v4604, %v4605
    %v4607 = vand.u32 %v4606, 4294901760
    %4608 = vmatmul.f32.gmra.mxu0 %v4607
    %v4609 = vpop.f32.mrf.mxu0
    %v4610 = vadd.f32 %v4417, %v4609
    %v4611 = vand.u32 %v452, 4294901760
    %v4612 = vsub.f32 %v452, %v4611
    %v4613 = vand.u32 %v4612, 4294901760
    %v4614 = vsub.f32 %v4612, %v4613
    %v4615 = vand.u32 %v4614, 4294901760
    %4616 = vmatmul.f32.gmra.mxu0 %v4615
    %v4617 = vpop.f32.mrf.mxu0
    %v4618 = vadd.f32 %v4421, %v4617
    %v4619 = vand.u32 %v456, 4294901760
    %v4620 = vsub.f32 %v456, %v4619
    %v4621 = vand.u32 %v4620, 4294901760
    %v4622 = vsub.f32 %v4620, %v4621
    %v4623 = vand.u32 %v4622, 4294901760
    %4624 = vmatmul.f32.gmra.mxu0 %v4623
    %v4625 = vpop.f32.mrf.mxu0
    %v4626 = vadd.f32 %v4425, %v4625
    %v4627 = vand.u32 %v460, 4294901760
    %v4628 = vsub.f32 %v460, %v4627
    %v4629 = vand.u32 %v4628, 4294901760
    %v4630 = vsub.f32 %v4628, %v4629
    %v4631 = vand.u32 %v4630, 4294901760
    %4632 = vmatmul.f32.gmra.mxu0 %v4631
    %v4633 = vpop.f32.mrf.mxu0
    %v4634 = vadd.f32 %v4429, %v4633
    %v4635 = vand.u32 %v464, 4294901760
    %v4636 = vsub.f32 %v464, %v4635
    %v4637 = vand.u32 %v4636, 4294901760
    %v4638 = vsub.f32 %v4636, %v4637
    %v4639 = vand.u32 %v4638, 4294901760
    %4640 = vmatmul.f32.gmra.mxu0 %v4639
    %v4641 = vpop.f32.mrf.mxu0
    %v4642 = vadd.f32 %v4433, %v4641
    %v4643 = vand.u32 %v468, 4294901760
    %v4644 = vsub.f32 %v468, %v4643
    %v4645 = vand.u32 %v4644, 4294901760
    %v4646 = vsub.f32 %v4644, %v4645
    %v4647 = vand.u32 %v4646, 4294901760
    %4648 = vmatmul.f32.gmra.mxu0 %v4647
    %v4649 = vpop.f32.mrf.mxu0
    %v4650 = vadd.f32 %v4437, %v4649
    %v4651 = vand.u32 %v472, 4294901760
    %v4652 = vsub.f32 %v472, %v4651
    %v4653 = vand.u32 %v4652, 4294901760
    %v4654 = vsub.f32 %v4652, %v4653
    %v4655 = vand.u32 %v4654, 4294901760
    %4656 = vmatmul.f32.gmra.mxu0 %v4655
    %v4657 = vpop.f32.mrf.mxu0
    %v4658 = vadd.f32 %v4441, %v4657
    %v4659 = vand.u32 %v476, 4294901760
    %v4660 = vsub.f32 %v476, %v4659
    %v4661 = vand.u32 %v4660, 4294901760
    %v4662 = vsub.f32 %v4660, %v4661
    %v4663 = vand.u32 %v4662, 4294901760
    %4664 = vmatmul.f32.gmra.mxu0 %v4663
    %v4665 = vpop.f32.mrf.mxu0
    %v4666 = vadd.f32 %v4445, %v4665
    %v4667 = vand.u32 %v480, 4294901760
    %v4668 = vsub.f32 %v480, %v4667
    %v4669 = vand.u32 %v4668, 4294901760
    %v4670 = vsub.f32 %v4668, %v4669
    %v4671 = vand.u32 %v4670, 4294901760
    %4672 = vmatmul.f32.gmra.mxu0 %v4671
    %v4673 = vpop.f32.mrf.mxu0
    %v4674 = vadd.f32 %v4449, %v4673
    %v4675 = vand.u32 %v484, 4294901760
    %v4676 = vsub.f32 %v484, %v4675
    %v4677 = vand.u32 %v4676, 4294901760
    %v4678 = vsub.f32 %v4676, %v4677
    %v4679 = vand.u32 %v4678, 4294901760
    %4680 = vmatmul.f32.gmra.mxu0 %v4679
    %v4681 = vpop.f32.mrf.mxu0
    %v4682 = vadd.f32 %v4453, %v4681
    %v4683 = vand.u32 %v488, 4294901760
    %v4684 = vsub.f32 %v488, %v4683
    %v4685 = vand.u32 %v4684, 4294901760
    %v4686 = vsub.f32 %v4684, %v4685
    %v4687 = vand.u32 %v4686, 4294901760
    %4688 = vmatmul.f32.gmra.mxu0 %v4687
    %v4689 = vpop.f32.mrf.mxu0
    %v4690 = vadd.f32 %v4457, %v4689
    %v4691 = vand.u32 %v492, 4294901760
    %v4692 = vsub.f32 %v492, %v4691
    %v4693 = vand.u32 %v4692, 4294901760
    %v4694 = vsub.f32 %v4692, %v4693
    %v4695 = vand.u32 %v4694, 4294901760
    %4696 = vmatmul.f32.gmra.mxu0 %v4695
    %v4697 = vpop.f32.mrf.mxu0
    %v4698 = vadd.f32 %v4461, %v4697
    %v4699 = vand.u32 %v496, 4294901760
    %v4700 = vsub.f32 %v496, %v4699
    %v4701 = vand.u32 %v4700, 4294901760
    %v4702 = vsub.f32 %v4700, %v4701
    %v4703 = vand.u32 %v4702, 4294901760
    %4704 = vmatmul.f32.gmra.mxu0 %v4703
    %v4705 = vpop.f32.mrf.mxu0
    %v4706 = vadd.f32 %v4465, %v4705
    %v4707 = vand.u32 %v500, 4294901760
    %v4708 = vsub.f32 %v500, %v4707
    %v4709 = vand.u32 %v4708, 4294901760
    %v4710 = vsub.f32 %v4708, %v4709
    %v4711 = vand.u32 %v4710, 4294901760
    %4712 = vmatmul.f32.gmra.mxu0 %v4711
    %v4713 = vpop.f32.mrf.mxu0
    %v4714 = vadd.f32 %v4469, %v4713
    %v4715 = vand.u32 %v504, 4294901760
    %v4716 = vsub.f32 %v504, %v4715
    %v4717 = vand.u32 %v4716, 4294901760
    %v4718 = vsub.f32 %v4716, %v4717
    %v4719 = vand.u32 %v4718, 4294901760
    %4720 = vmatmul.f32.gmra.mxu0 %v4719
    %v4721 = vpop.f32.mrf.mxu0
    %v4722 = vadd.f32 %v4473, %v4721
    %v4723 = vand.u32 %v508, 4294901760
    %v4724 = vsub.f32 %v508, %v4723
    %v4725 = vand.u32 %v4724, 4294901760
    %v4726 = vsub.f32 %v4724, %v4725
    %v4727 = vand.u32 %v4726, 4294901760
    %4728 = vmatmul.f32.gmra.mxu0 %v4727
    %v4729 = vpop.f32.mrf.mxu0
    %v4730 = vadd.f32 %v4477, %v4729
    %v4731 = vand.u32 %v512, 4294901760
    %v4732 = vsub.f32 %v512, %v4731
    %v4733 = vand.u32 %v4732, 4294901760
    %v4734 = vsub.f32 %v4732, %v4733
    %v4735 = vand.u32 %v4734, 4294901760
    %4736 = vmatmul.f32.gmra.mxu0 %v4735
    %v4737 = vpop.f32.mrf.mxu0
    %v4738 = vadd.f32 %v4481, %v4737
    %v4739 = vand.u32 %v516, 4294901760
    %v4740 = vsub.f32 %v516, %v4739
    %v4741 = vand.u32 %v4740, 4294901760
    %v4742 = vsub.f32 %v4740, %v4741
    %v4743 = vand.u32 %v4742, 4294901760
    %4744 = vmatmul.f32.gmra.mxu0 %v4743
    %v4745 = vpop.f32.mrf.mxu0
    %v4746 = vadd.f32 %v4485, %v4745
    %v4747 = vand.u32 %v520, 4294901760
    %v4748 = vsub.f32 %v520, %v4747
    %v4749 = vand.u32 %v4748, 4294901760
    %v4750 = vsub.f32 %v4748, %v4749
    %v4751 = vand.u32 %v4750, 4294901760
    %4752 = vmatmul.f32.gmra.mxu0 %v4751
    %v4753 = vpop.f32.mrf.mxu0
    %v4754 = vadd.f32 %v4489, %v4753
    %v4755 = vand.u32 %v524, 4294901760
    %v4756 = vsub.f32 %v524, %v4755
    %v4757 = vand.u32 %v4756, 4294901760
    %v4758 = vsub.f32 %v4756, %v4757
    %v4759 = vand.u32 %v4758, 4294901760
    %4760 = vmatmul.f32.gmra.mxu0 %v4759
    %v4761 = vpop.f32.mrf.mxu0
    %v4762 = vadd.f32 %v4493, %v4761
    %v4763 = vand.u32 %v528, 4294901760
    %v4764 = vsub.f32 %v528, %v4763
    %v4765 = vand.u32 %v4764, 4294901760
    %v4766 = vsub.f32 %v4764, %v4765
    %v4767 = vand.u32 %v4766, 4294901760
    %4768 = vmatmul.f32.gmra.mxu0 %v4767
    %v4769 = vpop.f32.mrf.mxu0
    %v4770 = vadd.f32 %v4497, %v4769
    %v4771 = vand.u32 %v532, 4294901760
    %v4772 = vsub.f32 %v532, %v4771
    %v4773 = vand.u32 %v4772, 4294901760
    %v4774 = vsub.f32 %v4772, %v4773
    %v4775 = vand.u32 %v4774, 4294901760
    %4776 = vmatmul.f32.gmra.mxu0 %v4775
    %v4777 = vpop.f32.mrf.mxu0
    %v4778 = vadd.f32 %v4501, %v4777
    %v4779 = vand.u32 %v536, 4294901760
    %v4780 = vsub.f32 %v536, %v4779
    %v4781 = vand.u32 %v4780, 4294901760
    %v4782 = vsub.f32 %v4780, %v4781
    %v4783 = vand.u32 %v4782, 4294901760
    %4784 = vmatmul.f32.gmra.mxu0 %v4783
    %v4785 = vpop.f32.mrf.mxu0
    %v4786 = vadd.f32 %v4505, %v4785
    %v4787 = vand.u32 %v540, 4294901760
    %v4788 = vsub.f32 %v540, %v4787
    %v4789 = vand.u32 %v4788, 4294901760
    %v4790 = vsub.f32 %v4788, %v4789
    %v4791 = vand.u32 %v4790, 4294901760
    %4792 = vmatmul.f32.gmra.mxu0 %v4791
    %v4793 = vpop.f32.mrf.mxu0
    %v4794 = vadd.f32 %v4509, %v4793
    %v4795 = vand.u32 %v544, 4294901760
    %v4796 = vsub.f32 %v544, %v4795
    %v4797 = vand.u32 %v4796, 4294901760
    %v4798 = vsub.f32 %v4796, %v4797
    %v4799 = vand.u32 %v4798, 4294901760
    %4800 = vmatmul.f32.gmra.mxu0 %v4799
    %v4801 = vpop.f32.mrf.mxu0
    %v4802 = vadd.f32 %v4513, %v4801
    %4803 = vdwg.mxu0
    %v4804 = vand.u32 %v608, 4294901760
    %v4805 = vsub.f32 %v608, %v4804
    %v4806 = vand.u32 %v4805, 4294901760
    %v4807 = vsub.f32 %v4805, %v4806
    %v4808 = vand.u32 %v4807, 4294901760
    %4809 = vmatpush.msra.mxu0 %v4808
    %v4810 = vand.u32 %v607, 4294901760
    %v4811 = vsub.f32 %v607, %v4810
    %v4812 = vand.u32 %v4811, 4294901760
    %v4813 = vsub.f32 %v4811, %v4812
    %v4814 = vand.u32 %v4813, 4294901760
    %4815 = vmatpush.msra.mxu0 %v4814
    %v4816 = vand.u32 %v606, 4294901760
    %v4817 = vsub.f32 %v606, %v4816
    %v4818 = vand.u32 %v4817, 4294901760
    %v4819 = vsub.f32 %v4817, %v4818
    %v4820 = vand.u32 %v4819, 4294901760
    %4821 = vmatpush.msra.mxu0 %v4820
    %v4822 = vand.u32 %v605, 4294901760
    %v4823 = vsub.f32 %v605, %v4822
    %v4824 = vand.u32 %v4823, 4294901760
    %v4825 = vsub.f32 %v4823, %v4824
    %v4826 = vand.u32 %v4825, 4294901760
    %4827 = vmatpush.msra.mxu0 %v4826
    %v4828 = vand.u32 %v604, 4294901760
    %v4829 = vsub.f32 %v604, %v4828
    %v4830 = vand.u32 %v4829, 4294901760
    %v4831 = vsub.f32 %v4829, %v4830
    %v4832 = vand.u32 %v4831, 4294901760
    %4833 = vmatpush.msra.mxu0 %v4832
    %v4834 = vand.u32 %v603, 4294901760
    %v4835 = vsub.f32 %v603, %v4834
    %v4836 = vand.u32 %v4835, 4294901760
    %v4837 = vsub.f32 %v4835, %v4836
    %v4838 = vand.u32 %v4837, 4294901760
    %4839 = vmatpush.msra.mxu0 %v4838
    %v4840 = vand.u32 %v602, 4294901760
    %v4841 = vsub.f32 %v602, %v4840
    %v4842 = vand.u32 %v4841, 4294901760
    %v4843 = vsub.f32 %v4841, %v4842
    %v4844 = vand.u32 %v4843, 4294901760
    %4845 = vmatpush.msra.mxu0 %v4844
    %v4846 = vand.u32 %v601, 4294901760
    %v4847 = vsub.f32 %v601, %v4846
    %v4848 = vand.u32 %v4847, 4294901760
    %v4849 = vsub.f32 %v4847, %v4848
    %v4850 = vand.u32 %v4849, 4294901760
    %4851 = vmatpush.msra.mxu0 %v4850
    %v4852 = vand.u32 %v600, 4294901760
    %v4853 = vsub.f32 %v600, %v4852
    %v4854 = vand.u32 %v4853, 4294901760
    %v4855 = vsub.f32 %v4853, %v4854
    %v4856 = vand.u32 %v4855, 4294901760
    %4857 = vmatpush.msra.mxu0 %v4856
    %v4858 = vand.u32 %v599, 4294901760
    %v4859 = vsub.f32 %v599, %v4858
    %v4860 = vand.u32 %v4859, 4294901760
    %v4861 = vsub.f32 %v4859, %v4860
    %v4862 = vand.u32 %v4861, 4294901760
    %4863 = vmatpush.msra.mxu0 %v4862
    %v4864 = vand.u32 %v598, 4294901760
    %v4865 = vsub.f32 %v598, %v4864
    %v4866 = vand.u32 %v4865, 4294901760
    %v4867 = vsub.f32 %v4865, %v4866
    %v4868 = vand.u32 %v4867, 4294901760
    %4869 = vmatpush.msra.mxu0 %v4868
    %v4870 = vand.u32 %v597, 4294901760
    %v4871 = vsub.f32 %v597, %v4870
    %v4872 = vand.u32 %v4871, 4294901760
    %v4873 = vsub.f32 %v4871, %v4872
    %v4874 = vand.u32 %v4873, 4294901760
    %4875 = vmatpush.msra.mxu0 %v4874
    %v4876 = vand.u32 %v596, 4294901760
    %v4877 = vsub.f32 %v596, %v4876
    %v4878 = vand.u32 %v4877, 4294901760
    %v4879 = vsub.f32 %v4877, %v4878
    %v4880 = vand.u32 %v4879, 4294901760
    %4881 = vmatpush.msra.mxu0 %v4880
    %v4882 = vand.u32 %v595, 4294901760
    %v4883 = vsub.f32 %v595, %v4882
    %v4884 = vand.u32 %v4883, 4294901760
    %v4885 = vsub.f32 %v4883, %v4884
    %v4886 = vand.u32 %v4885, 4294901760
    %4887 = vmatpush.msra.mxu0 %v4886
    %v4888 = vand.u32 %v594, 4294901760
    %v4889 = vsub.f32 %v594, %v4888
    %v4890 = vand.u32 %v4889, 4294901760
    %v4891 = vsub.f32 %v4889, %v4890
    %v4892 = vand.u32 %v4891, 4294901760
    %4893 = vmatpush.msra.mxu0 %v4892
    %v4894 = vand.u32 %v593, 4294901760
    %v4895 = vsub.f32 %v593, %v4894
    %v4896 = vand.u32 %v4895, 4294901760
    %v4897 = vsub.f32 %v4895, %v4896
    %v4898 = vand.u32 %v4897, 4294901760
    %4899 = vmatpush.msra.mxu0 %v4898
    %v4900 = vand.u32 %v420, 4294901760
    %4901 = vmatmul.f32.gmra.mxu0 %v4900
    %v4902 = vpop.f32.mrf.mxu0
    %v4903 = vadd.f32 %v4554, %v4902
    %v4904 = vand.u32 %v424, 4294901760
    %4905 = vmatmul.f32.gmra.mxu0 %v4904
    %v4906 = vpop.f32.mrf.mxu0
    %v4907 = vadd.f32 %v4562, %v4906
    %v4908 = vand.u32 %v428, 4294901760
    %4909 = vmatmul.f32.gmra.mxu0 %v4908
    %v4910 = vpop.f32.mrf.mxu0
    %v4911 = vadd.f32 %v4570, %v4910
    %v4912 = vand.u32 %v432, 4294901760
    %4913 = vmatmul.f32.gmra.mxu0 %v4912
    %v4914 = vpop.f32.mrf.mxu0
    %v4915 = vadd.f32 %v4578, %v4914
    %v4916 = vand.u32 %v436, 4294901760
    %4917 = vmatmul.f32.gmra.mxu0 %v4916
    %v4918 = vpop.f32.mrf.mxu0
    %v4919 = vadd.f32 %v4586, %v4918
    %v4920 = vand.u32 %v440, 4294901760
    %4921 = vmatmul.f32.gmra.mxu0 %v4920
    %v4922 = vpop.f32.mrf.mxu0
    %v4923 = vadd.f32 %v4594, %v4922
    %v4924 = vand.u32 %v444, 4294901760
    %4925 = vmatmul.f32.gmra.mxu0 %v4924
    %v4926 = vpop.f32.mrf.mxu0
    %v4927 = vadd.f32 %v4602, %v4926
    %v4928 = vand.u32 %v448, 4294901760
    %4929 = vmatmul.f32.gmra.mxu0 %v4928
    %v4930 = vpop.f32.mrf.mxu0
    %v4931 = vadd.f32 %v4610, %v4930
    %v4932 = vand.u32 %v452, 4294901760
    %4933 = vmatmul.f32.gmra.mxu0 %v4932
    %v4934 = vpop.f32.mrf.mxu0
    %v4935 = vadd.f32 %v4618, %v4934
    %v4936 = vand.u32 %v456, 4294901760
    %4937 = vmatmul.f32.gmra.mxu0 %v4936
    %v4938 = vpop.f32.mrf.mxu0
    %v4939 = vadd.f32 %v4626, %v4938
    %v4940 = vand.u32 %v460, 4294901760
    %4941 = vmatmul.f32.gmra.mxu0 %v4940
    %v4942 = vpop.f32.mrf.mxu0
    %v4943 = vadd.f32 %v4634, %v4942
    %v4944 = vand.u32 %v464, 4294901760
    %4945 = vmatmul.f32.gmra.mxu0 %v4944
    %v4946 = vpop.f32.mrf.mxu0
    %v4947 = vadd.f32 %v4642, %v4946
    %v4948 = vand.u32 %v468, 4294901760
    %4949 = vmatmul.f32.gmra.mxu0 %v4948
    %v4950 = vpop.f32.mrf.mxu0
    %v4951 = vadd.f32 %v4650, %v4950
    %v4952 = vand.u32 %v472, 4294901760
    %4953 = vmatmul.f32.gmra.mxu0 %v4952
    %v4954 = vpop.f32.mrf.mxu0
    %v4955 = vadd.f32 %v4658, %v4954
    %v4956 = vand.u32 %v476, 4294901760
    %4957 = vmatmul.f32.gmra.mxu0 %v4956
    %v4958 = vpop.f32.mrf.mxu0
    %v4959 = vadd.f32 %v4666, %v4958
    %v4960 = vand.u32 %v480, 4294901760
    %4961 = vmatmul.f32.gmra.mxu0 %v4960
    %v4962 = vpop.f32.mrf.mxu0
    %v4963 = vadd.f32 %v4674, %v4962
    %v4964 = vand.u32 %v484, 4294901760
    %4965 = vmatmul.f32.gmra.mxu0 %v4964
    %v4966 = vpop.f32.mrf.mxu0
    %v4967 = vadd.f32 %v4682, %v4966
    %v4968 = vand.u32 %v488, 4294901760
    %4969 = vmatmul.f32.gmra.mxu0 %v4968
    %v4970 = vpop.f32.mrf.mxu0
    %v4971 = vadd.f32 %v4690, %v4970
    %v4972 = vand.u32 %v492, 4294901760
    %4973 = vmatmul.f32.gmra.mxu0 %v4972
    %v4974 = vpop.f32.mrf.mxu0
    %v4975 = vadd.f32 %v4698, %v4974
    %v4976 = vand.u32 %v496, 4294901760
    %4977 = vmatmul.f32.gmra.mxu0 %v4976
    %v4978 = vpop.f32.mrf.mxu0
    %v4979 = vadd.f32 %v4706, %v4978
    %v4980 = vand.u32 %v500, 4294901760
    %4981 = vmatmul.f32.gmra.mxu0 %v4980
    %v4982 = vpop.f32.mrf.mxu0
    %v4983 = vadd.f32 %v4714, %v4982
    %v4984 = vand.u32 %v504, 4294901760
    %4985 = vmatmul.f32.gmra.mxu0 %v4984
    %v4986 = vpop.f32.mrf.mxu0
    %v4987 = vadd.f32 %v4722, %v4986
    %v4988 = vand.u32 %v508, 4294901760
    %4989 = vmatmul.f32.gmra.mxu0 %v4988
    %v4990 = vpop.f32.mrf.mxu0
    %v4991 = vadd.f32 %v4730, %v4990
    %v4992 = vand.u32 %v512, 4294901760
    %4993 = vmatmul.f32.gmra.mxu0 %v4992
    %v4994 = vpop.f32.mrf.mxu0
    %v4995 = vadd.f32 %v4738, %v4994
    %v4996 = vand.u32 %v516, 4294901760
    %4997 = vmatmul.f32.gmra.mxu0 %v4996
    %v4998 = vpop.f32.mrf.mxu0
    %v4999 = vadd.f32 %v4746, %v4998
    %v5000 = vand.u32 %v520, 4294901760
    %5001 = vmatmul.f32.gmra.mxu0 %v5000
    %v5002 = vpop.f32.mrf.mxu0
    %v5003 = vadd.f32 %v4754, %v5002
    %v5004 = vand.u32 %v524, 4294901760
    %5005 = vmatmul.f32.gmra.mxu0 %v5004
    %v5006 = vpop.f32.mrf.mxu0
    %v5007 = vadd.f32 %v4762, %v5006
    %v5008 = vand.u32 %v528, 4294901760
    %5009 = vmatmul.f32.gmra.mxu0 %v5008
    %v5010 = vpop.f32.mrf.mxu0
    %v5011 = vadd.f32 %v4770, %v5010
    %v5012 = vand.u32 %v532, 4294901760
    %5013 = vmatmul.f32.gmra.mxu0 %v5012
    %v5014 = vpop.f32.mrf.mxu0
    %v5015 = vadd.f32 %v4778, %v5014
    %v5016 = vand.u32 %v536, 4294901760
    %5017 = vmatmul.f32.gmra.mxu0 %v5016
    %v5018 = vpop.f32.mrf.mxu0
    %v5019 = vadd.f32 %v4786, %v5018
    %v5020 = vand.u32 %v540, 4294901760
    %5021 = vmatmul.f32.gmra.mxu0 %v5020
    %v5022 = vpop.f32.mrf.mxu0
    %v5023 = vadd.f32 %v4794, %v5022
    %v5024 = vand.u32 %v544, 4294901760
    %5025 = vmatmul.f32.gmra.mxu0 %v5024
    %v5026 = vpop.f32.mrf.mxu0
    %v5027 = vadd.f32 %v4802, %v5026
    %5028 = vdwg.mxu0
    %v5029 = vand.u32 %v608, 4294901760
    %v5030 = vsub.f32 %v608, %v5029
    %5031 = vmatpush.msra.mxu0 %v5030
    %v5032 = vand.u32 %v607, 4294901760
    %v5033 = vsub.f32 %v607, %v5032
    %5034 = vmatpush.msra.mxu0 %v5033
    %v5035 = vand.u32 %v606, 4294901760
    %v5036 = vsub.f32 %v606, %v5035
    %5037 = vmatpush.msra.mxu0 %v5036
    %v5038 = vand.u32 %v605, 4294901760
    %v5039 = vsub.f32 %v605, %v5038
    %5040 = vmatpush.msra.mxu0 %v5039
    %v5041 = vand.u32 %v604, 4294901760
    %v5042 = vsub.f32 %v604, %v5041
    %5043 = vmatpush.msra.mxu0 %v5042
    %v5044 = vand.u32 %v603, 4294901760
    %v5045 = vsub.f32 %v603, %v5044
    %5046 = vmatpush.msra.mxu0 %v5045
    %v5047 = vand.u32 %v602, 4294901760
    %v5048 = vsub.f32 %v602, %v5047
    %5049 = vmatpush.msra.mxu0 %v5048
    %v5050 = vand.u32 %v601, 4294901760
    %v5051 = vsub.f32 %v601, %v5050
    %5052 = vmatpush.msra.mxu0 %v5051
    %v5053 = vand.u32 %v600, 4294901760
    %v5054 = vsub.f32 %v600, %v5053
    %5055 = vmatpush.msra.mxu0 %v5054
    %v5056 = vand.u32 %v599, 4294901760
    %v5057 = vsub.f32 %v599, %v5056
    %5058 = vmatpush.msra.mxu0 %v5057
    %v5059 = vand.u32 %v598, 4294901760
    %v5060 = vsub.f32 %v598, %v5059
    %5061 = vmatpush.msra.mxu0 %v5060
    %v5062 = vand.u32 %v597, 4294901760
    %v5063 = vsub.f32 %v597, %v5062
    %5064 = vmatpush.msra.mxu0 %v5063
    %v5065 = vand.u32 %v596, 4294901760
    %v5066 = vsub.f32 %v596, %v5065
    %5067 = vmatpush.msra.mxu0 %v5066
    %v5068 = vand.u32 %v595, 4294901760
    %v5069 = vsub.f32 %v595, %v5068
    %5070 = vmatpush.msra.mxu0 %v5069
    %v5071 = vand.u32 %v594, 4294901760
    %v5072 = vsub.f32 %v594, %v5071
    %5073 = vmatpush.msra.mxu0 %v5072
    %v5074 = vand.u32 %v593, 4294901760
    %v5075 = vsub.f32 %v593, %v5074
    %5076 = vmatpush.msra.mxu0 %v5075
    %v5077 = vand.u32 %v420, 4294901760
    %v5078 = vsub.f32 %v420, %v5077
    %5079 = vmatmul.f32.gmra.mxu0 %v5078
    %v5080 = vpop.f32.mrf.mxu0
    %v5081 = vadd.f32 %v4903, %v5080
    %v5082 = vand.u32 %v424, 4294901760
    %v5083 = vsub.f32 %v424, %v5082
    %5084 = vmatmul.f32.gmra.mxu0 %v5083
    %v5085 = vpop.f32.mrf.mxu0
    %v5086 = vadd.f32 %v4907, %v5085
    %v5087 = vand.u32 %v428, 4294901760
    %v5088 = vsub.f32 %v428, %v5087
    %5089 = vmatmul.f32.gmra.mxu0 %v5088
    %v5090 = vpop.f32.mrf.mxu0
    %v5091 = vadd.f32 %v4911, %v5090
    %v5092 = vand.u32 %v432, 4294901760
    %v5093 = vsub.f32 %v432, %v5092
    %5094 = vmatmul.f32.gmra.mxu0 %v5093
    %v5095 = vpop.f32.mrf.mxu0
    %v5096 = vadd.f32 %v4915, %v5095
    %v5097 = vand.u32 %v436, 4294901760
    %v5098 = vsub.f32 %v436, %v5097
    %5099 = vmatmul.f32.gmra.mxu0 %v5098
    %v5100 = vpop.f32.mrf.mxu0
    %v5101 = vadd.f32 %v4919, %v5100
    %v5102 = vand.u32 %v440, 4294901760
    %v5103 = vsub.f32 %v440, %v5102
    %5104 = vmatmul.f32.gmra.mxu0 %v5103
    %v5105 = vpop.f32.mrf.mxu0
    %v5106 = vadd.f32 %v4923, %v5105
    %v5107 = vand.u32 %v444, 4294901760
    %v5108 = vsub.f32 %v444, %v5107
    %5109 = vmatmul.f32.gmra.mxu0 %v5108
    %v5110 = vpop.f32.mrf.mxu0
    %v5111 = vadd.f32 %v4927, %v5110
    %v5112 = vand.u32 %v448, 4294901760
    %v5113 = vsub.f32 %v448, %v5112
    %5114 = vmatmul.f32.gmra.mxu0 %v5113
    %v5115 = vpop.f32.mrf.mxu0
    %v5116 = vadd.f32 %v4931, %v5115
    %v5117 = vand.u32 %v452, 4294901760
    %v5118 = vsub.f32 %v452, %v5117
    %5119 = vmatmul.f32.gmra.mxu0 %v5118
    %v5120 = vpop.f32.mrf.mxu0
    %v5121 = vadd.f32 %v4935, %v5120
    %v5122 = vand.u32 %v456, 4294901760
    %v5123 = vsub.f32 %v456, %v5122
    %5124 = vmatmul.f32.gmra.mxu0 %v5123
    %v5125 = vpop.f32.mrf.mxu0
    %v5126 = vadd.f32 %v4939, %v5125
    %v5127 = vand.u32 %v460, 4294901760
    %v5128 = vsub.f32 %v460, %v5127
    %5129 = vmatmul.f32.gmra.mxu0 %v5128
    %v5130 = vpop.f32.mrf.mxu0
    %v5131 = vadd.f32 %v4943, %v5130
    %v5132 = vand.u32 %v464, 4294901760
    %v5133 = vsub.f32 %v464, %v5132
    %5134 = vmatmul.f32.gmra.mxu0 %v5133
    %v5135 = vpop.f32.mrf.mxu0
    %v5136 = vadd.f32 %v4947, %v5135
    %v5137 = vand.u32 %v468, 4294901760
    %v5138 = vsub.f32 %v468, %v5137
    %5139 = vmatmul.f32.gmra.mxu0 %v5138
    %v5140 = vpop.f32.mrf.mxu0
    %v5141 = vadd.f32 %v4951, %v5140
    %v5142 = vand.u32 %v472, 4294901760
    %v5143 = vsub.f32 %v472, %v5142
    %5144 = vmatmul.f32.gmra.mxu0 %v5143
    %v5145 = vpop.f32.mrf.mxu0
    %v5146 = vadd.f32 %v4955, %v5145
    %v5147 = vand.u32 %v476, 4294901760
    %v5148 = vsub.f32 %v476, %v5147
    %5149 = vmatmul.f32.gmra.mxu0 %v5148
    %v5150 = vpop.f32.mrf.mxu0
    %v5151 = vadd.f32 %v4959, %v5150
    %v5152 = vand.u32 %v480, 4294901760
    %v5153 = vsub.f32 %v480, %v5152
    %5154 = vmatmul.f32.gmra.mxu0 %v5153
    %v5155 = vpop.f32.mrf.mxu0
    %v5156 = vadd.f32 %v4963, %v5155
    %v5157 = vand.u32 %v484, 4294901760
    %v5158 = vsub.f32 %v484, %v5157
    %5159 = vmatmul.f32.gmra.mxu0 %v5158
    %v5160 = vpop.f32.mrf.mxu0
    %v5161 = vadd.f32 %v4967, %v5160
    %v5162 = vand.u32 %v488, 4294901760
    %v5163 = vsub.f32 %v488, %v5162
    %5164 = vmatmul.f32.gmra.mxu0 %v5163
    %v5165 = vpop.f32.mrf.mxu0
    %v5166 = vadd.f32 %v4971, %v5165
    %v5167 = vand.u32 %v492, 4294901760
    %v5168 = vsub.f32 %v492, %v5167
    %5169 = vmatmul.f32.gmra.mxu0 %v5168
    %v5170 = vpop.f32.mrf.mxu0
    %v5171 = vadd.f32 %v4975, %v5170
    %v5172 = vand.u32 %v496, 4294901760
    %v5173 = vsub.f32 %v496, %v5172
    %5174 = vmatmul.f32.gmra.mxu0 %v5173
    %v5175 = vpop.f32.mrf.mxu0
    %v5176 = vadd.f32 %v4979, %v5175
    %v5177 = vand.u32 %v500, 4294901760
    %v5178 = vsub.f32 %v500, %v5177
    %5179 = vmatmul.f32.gmra.mxu0 %v5178
    %v5180 = vpop.f32.mrf.mxu0
    %v5181 = vadd.f32 %v4983, %v5180
    %v5182 = vand.u32 %v504, 4294901760
    %v5183 = vsub.f32 %v504, %v5182
    %5184 = vmatmul.f32.gmra.mxu0 %v5183
    %v5185 = vpop.f32.mrf.mxu0
    %v5186 = vadd.f32 %v4987, %v5185
    %v5187 = vand.u32 %v508, 4294901760
    %v5188 = vsub.f32 %v508, %v5187
    %5189 = vmatmul.f32.gmra.mxu0 %v5188
    %v5190 = vpop.f32.mrf.mxu0
    %v5191 = vadd.f32 %v4991, %v5190
    %v5192 = vand.u32 %v512, 4294901760
    %v5193 = vsub.f32 %v512, %v5192
    %5194 = vmatmul.f32.gmra.mxu0 %v5193
    %v5195 = vpop.f32.mrf.mxu0
    %v5196 = vadd.f32 %v4995, %v5195
    %v5197 = vand.u32 %v516, 4294901760
    %v5198 = vsub.f32 %v516, %v5197
    %5199 = vmatmul.f32.gmra.mxu0 %v5198
    %v5200 = vpop.f32.mrf.mxu0
    %v5201 = vadd.f32 %v4999, %v5200
    %v5202 = vand.u32 %v520, 4294901760
    %v5203 = vsub.f32 %v520, %v5202
    %5204 = vmatmul.f32.gmra.mxu0 %v5203
    %v5205 = vpop.f32.mrf.mxu0
    %v5206 = vadd.f32 %v5003, %v5205
    %v5207 = vand.u32 %v524, 4294901760
    %v5208 = vsub.f32 %v524, %v5207
    %5209 = vmatmul.f32.gmra.mxu0 %v5208
    %v5210 = vpop.f32.mrf.mxu0
    %v5211 = vadd.f32 %v5007, %v5210
    %v5212 = vand.u32 %v528, 4294901760
    %v5213 = vsub.f32 %v528, %v5212
    %5214 = vmatmul.f32.gmra.mxu0 %v5213
    %v5215 = vpop.f32.mrf.mxu0
    %v5216 = vadd.f32 %v5011, %v5215
    %v5217 = vand.u32 %v532, 4294901760
    %v5218 = vsub.f32 %v532, %v5217
    %5219 = vmatmul.f32.gmra.mxu0 %v5218
    %v5220 = vpop.f32.mrf.mxu0
    %v5221 = vadd.f32 %v5015, %v5220
    %v5222 = vand.u32 %v536, 4294901760
    %v5223 = vsub.f32 %v536, %v5222
    %5224 = vmatmul.f32.gmra.mxu0 %v5223
    %v5225 = vpop.f32.mrf.mxu0
    %v5226 = vadd.f32 %v5019, %v5225
    %v5227 = vand.u32 %v540, 4294901760
    %v5228 = vsub.f32 %v540, %v5227
    %5229 = vmatmul.f32.gmra.mxu0 %v5228
    %v5230 = vpop.f32.mrf.mxu0
    %v5231 = vadd.f32 %v5023, %v5230
    %v5232 = vand.u32 %v544, 4294901760
    %v5233 = vsub.f32 %v544, %v5232
    %5234 = vmatmul.f32.gmra.mxu0 %v5233
    %v5235 = vpop.f32.mrf.mxu0
    %v5236 = vadd.f32 %v5027, %v5235
    %5237 = vdwg.mxu0
    %v5238 = vand.u32 %v608, 4294901760
    %5239 = vmatpush.msra.mxu0 %v5238
    %v5240 = vand.u32 %v607, 4294901760
    %5241 = vmatpush.msra.mxu0 %v5240
    %v5242 = vand.u32 %v606, 4294901760
    %5243 = vmatpush.msra.mxu0 %v5242
    %v5244 = vand.u32 %v605, 4294901760
    %5245 = vmatpush.msra.mxu0 %v5244
    %v5246 = vand.u32 %v604, 4294901760
    %5247 = vmatpush.msra.mxu0 %v5246
    %v5248 = vand.u32 %v603, 4294901760
    %5249 = vmatpush.msra.mxu0 %v5248
    %v5250 = vand.u32 %v602, 4294901760
    %5251 = vmatpush.msra.mxu0 %v5250
    %v5252 = vand.u32 %v601, 4294901760
    %5253 = vmatpush.msra.mxu0 %v5252
    %v5254 = vand.u32 %v600, 4294901760
    %5255 = vmatpush.msra.mxu0 %v5254
    %v5256 = vand.u32 %v599, 4294901760
    %5257 = vmatpush.msra.mxu0 %v5256
    %v5258 = vand.u32 %v598, 4294901760
    %5259 = vmatpush.msra.mxu0 %v5258
    %v5260 = vand.u32 %v597, 4294901760
    %5261 = vmatpush.msra.mxu0 %v5260
    %v5262 = vand.u32 %v596, 4294901760
    %5263 = vmatpush.msra.mxu0 %v5262
    %v5264 = vand.u32 %v595, 4294901760
    %5265 = vmatpush.msra.mxu0 %v5264
    %v5266 = vand.u32 %v594, 4294901760
    %5267 = vmatpush.msra.mxu0 %v5266
    %v5268 = vand.u32 %v593, 4294901760
    %5269 = vmatpush.msra.mxu0 %v5268
    %v5270 = vand.u32 %v420, 4294901760
    %v5271 = vsub.f32 %v420, %v5270
    %v5272 = vand.u32 %v5271, 4294901760
    %5273 = vmatmul.f32.gmra.mxu0 %v5272
    %v5274 = vpop.f32.mrf.mxu0
    %v5275 = vadd.f32 %v5081, %v5274
    %v5276 = vand.u32 %v424, 4294901760
    %v5277 = vsub.f32 %v424, %v5276
    %v5278 = vand.u32 %v5277, 4294901760
    %5279 = vmatmul.f32.gmra.mxu0 %v5278
    %v5280 = vpop.f32.mrf.mxu0
    %v5281 = vadd.f32 %v5086, %v5280
    %v5282 = vand.u32 %v428, 4294901760
    %v5283 = vsub.f32 %v428, %v5282
    %v5284 = vand.u32 %v5283, 4294901760
    %5285 = vmatmul.f32.gmra.mxu0 %v5284
    %v5286 = vpop.f32.mrf.mxu0
    %v5287 = vadd.f32 %v5091, %v5286
    %v5288 = vand.u32 %v432, 4294901760
    %v5289 = vsub.f32 %v432, %v5288
    %v5290 = vand.u32 %v5289, 4294901760
    %5291 = vmatmul.f32.gmra.mxu0 %v5290
    %v5292 = vpop.f32.mrf.mxu0
    %v5293 = vadd.f32 %v5096, %v5292
    %v5294 = vand.u32 %v436, 4294901760
    %v5295 = vsub.f32 %v436, %v5294
    %v5296 = vand.u32 %v5295, 4294901760
    %5297 = vmatmul.f32.gmra.mxu0 %v5296
    %v5298 = vpop.f32.mrf.mxu0
    %v5299 = vadd.f32 %v5101, %v5298
    %v5300 = vand.u32 %v440, 4294901760
    %v5301 = vsub.f32 %v440, %v5300
    %v5302 = vand.u32 %v5301, 4294901760
    %5303 = vmatmul.f32.gmra.mxu0 %v5302
    %v5304 = vpop.f32.mrf.mxu0
    %v5305 = vadd.f32 %v5106, %v5304
    %v5306 = vand.u32 %v444, 4294901760
    %v5307 = vsub.f32 %v444, %v5306
    %v5308 = vand.u32 %v5307, 4294901760
    %5309 = vmatmul.f32.gmra.mxu0 %v5308
    %v5310 = vpop.f32.mrf.mxu0
    %v5311 = vadd.f32 %v5111, %v5310
    %v5312 = vand.u32 %v448, 4294901760
    %v5313 = vsub.f32 %v448, %v5312
    %v5314 = vand.u32 %v5313, 4294901760
    %5315 = vmatmul.f32.gmra.mxu0 %v5314
    %v5316 = vpop.f32.mrf.mxu0
    %v5317 = vadd.f32 %v5116, %v5316
    %v5318 = vand.u32 %v452, 4294901760
    %v5319 = vsub.f32 %v452, %v5318
    %v5320 = vand.u32 %v5319, 4294901760
    %5321 = vmatmul.f32.gmra.mxu0 %v5320
    %v5322 = vpop.f32.mrf.mxu0
    %v5323 = vadd.f32 %v5121, %v5322
    %v5324 = vand.u32 %v456, 4294901760
    %v5325 = vsub.f32 %v456, %v5324
    %v5326 = vand.u32 %v5325, 4294901760
    %5327 = vmatmul.f32.gmra.mxu0 %v5326
    %v5328 = vpop.f32.mrf.mxu0
    %v5329 = vadd.f32 %v5126, %v5328
    %v5330 = vand.u32 %v460, 4294901760
    %v5331 = vsub.f32 %v460, %v5330
    %v5332 = vand.u32 %v5331, 4294901760
    %5333 = vmatmul.f32.gmra.mxu0 %v5332
    %v5334 = vpop.f32.mrf.mxu0
    %v5335 = vadd.f32 %v5131, %v5334
    %v5336 = vand.u32 %v464, 4294901760
    %v5337 = vsub.f32 %v464, %v5336
    %v5338 = vand.u32 %v5337, 4294901760
    %5339 = vmatmul.f32.gmra.mxu0 %v5338
    %v5340 = vpop.f32.mrf.mxu0
    %v5341 = vadd.f32 %v5136, %v5340
    %v5342 = vand.u32 %v468, 4294901760
    %v5343 = vsub.f32 %v468, %v5342
    %v5344 = vand.u32 %v5343, 4294901760
    %5345 = vmatmul.f32.gmra.mxu0 %v5344
    %v5346 = vpop.f32.mrf.mxu0
    %v5347 = vadd.f32 %v5141, %v5346
    %v5348 = vand.u32 %v472, 4294901760
    %v5349 = vsub.f32 %v472, %v5348
    %v5350 = vand.u32 %v5349, 4294901760
    %5351 = vmatmul.f32.gmra.mxu0 %v5350
    %v5352 = vpop.f32.mrf.mxu0
    %v5353 = vadd.f32 %v5146, %v5352
    %v5354 = vand.u32 %v476, 4294901760
    %v5355 = vsub.f32 %v476, %v5354
    %v5356 = vand.u32 %v5355, 4294901760
    %5357 = vmatmul.f32.gmra.mxu0 %v5356
    %v5358 = vpop.f32.mrf.mxu0
    %v5359 = vadd.f32 %v5151, %v5358
    %v5360 = vand.u32 %v480, 4294901760
    %v5361 = vsub.f32 %v480, %v5360
    %v5362 = vand.u32 %v5361, 4294901760
    %5363 = vmatmul.f32.gmra.mxu0 %v5362
    %v5364 = vpop.f32.mrf.mxu0
    %v5365 = vadd.f32 %v5156, %v5364
    %v5366 = vand.u32 %v484, 4294901760
    %v5367 = vsub.f32 %v484, %v5366
    %v5368 = vand.u32 %v5367, 4294901760
    %5369 = vmatmul.f32.gmra.mxu0 %v5368
    %v5370 = vpop.f32.mrf.mxu0
    %v5371 = vadd.f32 %v5161, %v5370
    %v5372 = vand.u32 %v488, 4294901760
    %v5373 = vsub.f32 %v488, %v5372
    %v5374 = vand.u32 %v5373, 4294901760
    %5375 = vmatmul.f32.gmra.mxu0 %v5374
    %v5376 = vpop.f32.mrf.mxu0
    %v5377 = vadd.f32 %v5166, %v5376
    %v5378 = vand.u32 %v492, 4294901760
    %v5379 = vsub.f32 %v492, %v5378
    %v5380 = vand.u32 %v5379, 4294901760
    %5381 = vmatmul.f32.gmra.mxu0 %v5380
    %v5382 = vpop.f32.mrf.mxu0
    %v5383 = vadd.f32 %v5171, %v5382
    %v5384 = vand.u32 %v496, 4294901760
    %v5385 = vsub.f32 %v496, %v5384
    %v5386 = vand.u32 %v5385, 4294901760
    %5387 = vmatmul.f32.gmra.mxu0 %v5386
    %v5388 = vpop.f32.mrf.mxu0
    %v5389 = vadd.f32 %v5176, %v5388
    %v5390 = vand.u32 %v500, 4294901760
    %v5391 = vsub.f32 %v500, %v5390
    %v5392 = vand.u32 %v5391, 4294901760
    %5393 = vmatmul.f32.gmra.mxu0 %v5392
    %v5394 = vpop.f32.mrf.mxu0
    %v5395 = vadd.f32 %v5181, %v5394
    %v5396 = vand.u32 %v504, 4294901760
    %v5397 = vsub.f32 %v504, %v5396
    %v5398 = vand.u32 %v5397, 4294901760
    %5399 = vmatmul.f32.gmra.mxu0 %v5398
    %v5400 = vpop.f32.mrf.mxu0
    %v5401 = vadd.f32 %v5186, %v5400
    %v5402 = vand.u32 %v508, 4294901760
    %v5403 = vsub.f32 %v508, %v5402
    %v5404 = vand.u32 %v5403, 4294901760
    %5405 = vmatmul.f32.gmra.mxu0 %v5404
    %v5406 = vpop.f32.mrf.mxu0
    %v5407 = vadd.f32 %v5191, %v5406
    %v5408 = vand.u32 %v512, 4294901760
    %v5409 = vsub.f32 %v512, %v5408
    %v5410 = vand.u32 %v5409, 4294901760
    %5411 = vmatmul.f32.gmra.mxu0 %v5410
    %v5412 = vpop.f32.mrf.mxu0
    %v5413 = vadd.f32 %v5196, %v5412
    %v5414 = vand.u32 %v516, 4294901760
    %v5415 = vsub.f32 %v516, %v5414
    %v5416 = vand.u32 %v5415, 4294901760
    %5417 = vmatmul.f32.gmra.mxu0 %v5416
    %v5418 = vpop.f32.mrf.mxu0
    %v5419 = vadd.f32 %v5201, %v5418
    %v5420 = vand.u32 %v520, 4294901760
    %v5421 = vsub.f32 %v520, %v5420
    %v5422 = vand.u32 %v5421, 4294901760
    %5423 = vmatmul.f32.gmra.mxu0 %v5422
    %v5424 = vpop.f32.mrf.mxu0
    %v5425 = vadd.f32 %v5206, %v5424
    %v5426 = vand.u32 %v524, 4294901760
    %v5427 = vsub.f32 %v524, %v5426
    %v5428 = vand.u32 %v5427, 4294901760
    %5429 = vmatmul.f32.gmra.mxu0 %v5428
    %v5430 = vpop.f32.mrf.mxu0
    %v5431 = vadd.f32 %v5211, %v5430
    %v5432 = vand.u32 %v528, 4294901760
    %v5433 = vsub.f32 %v528, %v5432
    %v5434 = vand.u32 %v5433, 4294901760
    %5435 = vmatmul.f32.gmra.mxu0 %v5434
    %v5436 = vpop.f32.mrf.mxu0
    %v5437 = vadd.f32 %v5216, %v5436
    %v5438 = vand.u32 %v532, 4294901760
    %v5439 = vsub.f32 %v532, %v5438
    %v5440 = vand.u32 %v5439, 4294901760
    %5441 = vmatmul.f32.gmra.mxu0 %v5440
    %v5442 = vpop.f32.mrf.mxu0
    %v5443 = vadd.f32 %v5221, %v5442
    %v5444 = vand.u32 %v536, 4294901760
    %v5445 = vsub.f32 %v536, %v5444
    %v5446 = vand.u32 %v5445, 4294901760
    %5447 = vmatmul.f32.gmra.mxu0 %v5446
    %v5448 = vpop.f32.mrf.mxu0
    %v5449 = vadd.f32 %v5226, %v5448
    %v5450 = vand.u32 %v540, 4294901760
    %v5451 = vsub.f32 %v540, %v5450
    %v5452 = vand.u32 %v5451, 4294901760
    %5453 = vmatmul.f32.gmra.mxu0 %v5452
    %v5454 = vpop.f32.mrf.mxu0
    %v5455 = vadd.f32 %v5231, %v5454
    %v5456 = vand.u32 %v544, 4294901760
    %v5457 = vsub.f32 %v544, %v5456
    %v5458 = vand.u32 %v5457, 4294901760
    %5459 = vmatmul.f32.gmra.mxu0 %v5458
    %v5460 = vpop.f32.mrf.mxu0
    %v5461 = vadd.f32 %v5236, %v5460
    %5462 = vdwg.mxu0
    %v5463 = vand.u32 %v608, 4294901760
    %v5464 = vsub.f32 %v608, %v5463
    %v5465 = vand.u32 %v5464, 4294901760
    %5466 = vmatpush.msra.mxu0 %v5465
    %v5467 = vand.u32 %v607, 4294901760
    %v5468 = vsub.f32 %v607, %v5467
    %v5469 = vand.u32 %v5468, 4294901760
    %5470 = vmatpush.msra.mxu0 %v5469
    %v5471 = vand.u32 %v606, 4294901760
    %v5472 = vsub.f32 %v606, %v5471
    %v5473 = vand.u32 %v5472, 4294901760
    %5474 = vmatpush.msra.mxu0 %v5473
    %v5475 = vand.u32 %v605, 4294901760
    %v5476 = vsub.f32 %v605, %v5475
    %v5477 = vand.u32 %v5476, 4294901760
    %5478 = vmatpush.msra.mxu0 %v5477
    %v5479 = vand.u32 %v604, 4294901760
    %v5480 = vsub.f32 %v604, %v5479
    %v5481 = vand.u32 %v5480, 4294901760
    %5482 = vmatpush.msra.mxu0 %v5481
    %v5483 = vand.u32 %v603, 4294901760
    %v5484 = vsub.f32 %v603, %v5483
    %v5485 = vand.u32 %v5484, 4294901760
    %5486 = vmatpush.msra.mxu0 %v5485
    %v5487 = vand.u32 %v602, 4294901760
    %v5488 = vsub.f32 %v602, %v5487
    %v5489 = vand.u32 %v5488, 4294901760
    %5490 = vmatpush.msra.mxu0 %v5489
    %v5491 = vand.u32 %v601, 4294901760
    %v5492 = vsub.f32 %v601, %v5491
    %v5493 = vand.u32 %v5492, 4294901760
    %5494 = vmatpush.msra.mxu0 %v5493
    %v5495 = vand.u32 %v600, 4294901760
    %v5496 = vsub.f32 %v600, %v5495
    %v5497 = vand.u32 %v5496, 4294901760
    %5498 = vmatpush.msra.mxu0 %v5497
    %v5499 = vand.u32 %v599, 4294901760
    %v5500 = vsub.f32 %v599, %v5499
    %v5501 = vand.u32 %v5500, 4294901760
    %5502 = vmatpush.msra.mxu0 %v5501
    %v5503 = vand.u32 %v598, 4294901760
    %v5504 = vsub.f32 %v598, %v5503
    %v5505 = vand.u32 %v5504, 4294901760
    %5506 = vmatpush.msra.mxu0 %v5505
    %v5507 = vand.u32 %v597, 4294901760
    %v5508 = vsub.f32 %v597, %v5507
    %v5509 = vand.u32 %v5508, 4294901760
    %5510 = vmatpush.msra.mxu0 %v5509
    %v5511 = vand.u32 %v596, 4294901760
    %v5512 = vsub.f32 %v596, %v5511
    %v5513 = vand.u32 %v5512, 4294901760
    %5514 = vmatpush.msra.mxu0 %v5513
    %v5515 = vand.u32 %v595, 4294901760
    %v5516 = vsub.f32 %v595, %v5515
    %v5517 = vand.u32 %v5516, 4294901760
    %5518 = vmatpush.msra.mxu0 %v5517
    %v5519 = vand.u32 %v594, 4294901760
    %v5520 = vsub.f32 %v594, %v5519
    %v5521 = vand.u32 %v5520, 4294901760
    %5522 = vmatpush.msra.mxu0 %v5521
    %v5523 = vand.u32 %v593, 4294901760
    %v5524 = vsub.f32 %v593, %v5523
    %v5525 = vand.u32 %v5524, 4294901760
    %5526 = vmatpush.msra.mxu0 %v5525
    %v5527 = vand.u32 %v420, 4294901760
    %5528 = vmatmul.f32.gmra.mxu0 %v5527
    %v5529 = vpop.f32.mrf.mxu0
    %v5530 = vadd.f32 %v5275, %v5529
    %v5531 = vand.u32 %v424, 4294901760
    %5532 = vmatmul.f32.gmra.mxu0 %v5531
    %v5533 = vpop.f32.mrf.mxu0
    %v5534 = vadd.f32 %v5281, %v5533
    %v5535 = vand.u32 %v428, 4294901760
    %5536 = vmatmul.f32.gmra.mxu0 %v5535
    %v5537 = vpop.f32.mrf.mxu0
    %v5538 = vadd.f32 %v5287, %v5537
    %v5539 = vand.u32 %v432, 4294901760
    %5540 = vmatmul.f32.gmra.mxu0 %v5539
    %v5541 = vpop.f32.mrf.mxu0
    %v5542 = vadd.f32 %v5293, %v5541
    %v5543 = vand.u32 %v436, 4294901760
    %5544 = vmatmul.f32.gmra.mxu0 %v5543
    %v5545 = vpop.f32.mrf.mxu0
    %v5546 = vadd.f32 %v5299, %v5545
    %v5547 = vand.u32 %v440, 4294901760
    %5548 = vmatmul.f32.gmra.mxu0 %v5547
    %v5549 = vpop.f32.mrf.mxu0
    %v5550 = vadd.f32 %v5305, %v5549
    %v5551 = vand.u32 %v444, 4294901760
    %5552 = vmatmul.f32.gmra.mxu0 %v5551
    %v5553 = vpop.f32.mrf.mxu0
    %v5554 = vadd.f32 %v5311, %v5553
    %v5555 = vand.u32 %v448, 4294901760
    %5556 = vmatmul.f32.gmra.mxu0 %v5555
    %v5557 = vpop.f32.mrf.mxu0
    %v5558 = vadd.f32 %v5317, %v5557
    %v5559 = vand.u32 %v452, 4294901760
    %5560 = vmatmul.f32.gmra.mxu0 %v5559
    %v5561 = vpop.f32.mrf.mxu0
    %v5562 = vadd.f32 %v5323, %v5561
    %v5563 = vand.u32 %v456, 4294901760
    %5564 = vmatmul.f32.gmra.mxu0 %v5563
    %v5565 = vpop.f32.mrf.mxu0
    %v5566 = vadd.f32 %v5329, %v5565
    %v5567 = vand.u32 %v460, 4294901760
    %5568 = vmatmul.f32.gmra.mxu0 %v5567
    %v5569 = vpop.f32.mrf.mxu0
    %v5570 = vadd.f32 %v5335, %v5569
    %v5571 = vand.u32 %v464, 4294901760
    %5572 = vmatmul.f32.gmra.mxu0 %v5571
    %v5573 = vpop.f32.mrf.mxu0
    %v5574 = vadd.f32 %v5341, %v5573
    %v5575 = vand.u32 %v468, 4294901760
    %5576 = vmatmul.f32.gmra.mxu0 %v5575
    %v5577 = vpop.f32.mrf.mxu0
    %v5578 = vadd.f32 %v5347, %v5577
    %v5579 = vand.u32 %v472, 4294901760
    %5580 = vmatmul.f32.gmra.mxu0 %v5579
    %v5581 = vpop.f32.mrf.mxu0
    %v5582 = vadd.f32 %v5353, %v5581
    %v5583 = vand.u32 %v476, 4294901760
    %5584 = vmatmul.f32.gmra.mxu0 %v5583
    %v5585 = vpop.f32.mrf.mxu0
    %v5586 = vadd.f32 %v5359, %v5585
    %v5587 = vand.u32 %v480, 4294901760
    %5588 = vmatmul.f32.gmra.mxu0 %v5587
    %v5589 = vpop.f32.mrf.mxu0
    %v5590 = vadd.f32 %v5365, %v5589
    %v5591 = vand.u32 %v484, 4294901760
    %5592 = vmatmul.f32.gmra.mxu0 %v5591
    %v5593 = vpop.f32.mrf.mxu0
    %v5594 = vadd.f32 %v5371, %v5593
    %v5595 = vand.u32 %v488, 4294901760
    %5596 = vmatmul.f32.gmra.mxu0 %v5595
    %v5597 = vpop.f32.mrf.mxu0
    %v5598 = vadd.f32 %v5377, %v5597
    %v5599 = vand.u32 %v492, 4294901760
    %5600 = vmatmul.f32.gmra.mxu0 %v5599
    %v5601 = vpop.f32.mrf.mxu0
    %v5602 = vadd.f32 %v5383, %v5601
    %v5603 = vand.u32 %v496, 4294901760
    %5604 = vmatmul.f32.gmra.mxu0 %v5603
    %v5605 = vpop.f32.mrf.mxu0
    %v5606 = vadd.f32 %v5389, %v5605
    %v5607 = vand.u32 %v500, 4294901760
    %5608 = vmatmul.f32.gmra.mxu0 %v5607
    %v5609 = vpop.f32.mrf.mxu0
    %v5610 = vadd.f32 %v5395, %v5609
    %v5611 = vand.u32 %v504, 4294901760
    %5612 = vmatmul.f32.gmra.mxu0 %v5611
    %v5613 = vpop.f32.mrf.mxu0
    %v5614 = vadd.f32 %v5401, %v5613
    %v5615 = vand.u32 %v508, 4294901760
    %5616 = vmatmul.f32.gmra.mxu0 %v5615
    %v5617 = vpop.f32.mrf.mxu0
    %v5618 = vadd.f32 %v5407, %v5617
    %v5619 = vand.u32 %v512, 4294901760
    %5620 = vmatmul.f32.gmra.mxu0 %v5619
    %v5621 = vpop.f32.mrf.mxu0
    %v5622 = vadd.f32 %v5413, %v5621
    %v5623 = vand.u32 %v516, 4294901760
    %5624 = vmatmul.f32.gmra.mxu0 %v5623
    %v5625 = vpop.f32.mrf.mxu0
    %v5626 = vadd.f32 %v5419, %v5625
    %v5627 = vand.u32 %v520, 4294901760
    %5628 = vmatmul.f32.gmra.mxu0 %v5627
    %v5629 = vpop.f32.mrf.mxu0
    %v5630 = vadd.f32 %v5425, %v5629
    %v5631 = vand.u32 %v524, 4294901760
    %5632 = vmatmul.f32.gmra.mxu0 %v5631
    %v5633 = vpop.f32.mrf.mxu0
    %v5634 = vadd.f32 %v5431, %v5633
    %v5635 = vand.u32 %v528, 4294901760
    %5636 = vmatmul.f32.gmra.mxu0 %v5635
    %v5637 = vpop.f32.mrf.mxu0
    %v5638 = vadd.f32 %v5437, %v5637
    %v5639 = vand.u32 %v532, 4294901760
    %5640 = vmatmul.f32.gmra.mxu0 %v5639
    %v5641 = vpop.f32.mrf.mxu0
    %v5642 = vadd.f32 %v5443, %v5641
    %v5643 = vand.u32 %v536, 4294901760
    %5644 = vmatmul.f32.gmra.mxu0 %v5643
    %v5645 = vpop.f32.mrf.mxu0
    %v5646 = vadd.f32 %v5449, %v5645
    %v5647 = vand.u32 %v540, 4294901760
    %5648 = vmatmul.f32.gmra.mxu0 %v5647
    %v5649 = vpop.f32.mrf.mxu0
    %v5650 = vadd.f32 %v5455, %v5649
    %v5651 = vand.u32 %v544, 4294901760
    %5652 = vmatmul.f32.gmra.mxu0 %v5651
    %v5653 = vpop.f32.mrf.mxu0
    %v5654 = vadd.f32 %v5461, %v5653
    %5655 = vdwg.mxu0
    %v5656 = vand.u32 %v608, 4294901760
    %5657 = vmatpush.msra.mxu0 %v5656
    %v5658 = vand.u32 %v607, 4294901760
    %5659 = vmatpush.msra.mxu0 %v5658
    %v5660 = vand.u32 %v606, 4294901760
    %5661 = vmatpush.msra.mxu0 %v5660
    %v5662 = vand.u32 %v605, 4294901760
    %5663 = vmatpush.msra.mxu0 %v5662
    %v5664 = vand.u32 %v604, 4294901760
    %5665 = vmatpush.msra.mxu0 %v5664
    %v5666 = vand.u32 %v603, 4294901760
    %5667 = vmatpush.msra.mxu0 %v5666
    %v5668 = vand.u32 %v602, 4294901760
    %5669 = vmatpush.msra.mxu0 %v5668
    %v5670 = vand.u32 %v601, 4294901760
    %5671 = vmatpush.msra.mxu0 %v5670
    %v5672 = vand.u32 %v600, 4294901760
    %5673 = vmatpush.msra.mxu0 %v5672
    %v5674 = vand.u32 %v599, 4294901760
    %5675 = vmatpush.msra.mxu0 %v5674
    %v5676 = vand.u32 %v598, 4294901760
    %5677 = vmatpush.msra.mxu0 %v5676
    %v5678 = vand.u32 %v597, 4294901760
    %5679 = vmatpush.msra.mxu0 %v5678
    %v5680 = vand.u32 %v596, 4294901760
    %5681 = vmatpush.msra.mxu0 %v5680
    %v5682 = vand.u32 %v595, 4294901760
    %5683 = vmatpush.msra.mxu0 %v5682
    %v5684 = vand.u32 %v594, 4294901760
    %5685 = vmatpush.msra.mxu0 %v5684
    %v5686 = vand.u32 %v593, 4294901760
    %5687 = vmatpush.msra.mxu0 %v5686
    %v5688 = vand.u32 %v420, 4294901760
    %5689 = vmatmul.f32.gmra.mxu0 %v5688
    %v5690 = vpop.f32.mrf.mxu0
    %v5691 = vadd.f32 %v5530, %v5690
    %v5692 = vand.u32 %v424, 4294901760
    %5693 = vmatmul.f32.gmra.mxu0 %v5692
    %v5694 = vpop.f32.mrf.mxu0
    %v5695 = vadd.f32 %v5534, %v5694
    %v5696 = vand.u32 %v428, 4294901760
    %5697 = vmatmul.f32.gmra.mxu0 %v5696
    %v5698 = vpop.f32.mrf.mxu0
    %v5699 = vadd.f32 %v5538, %v5698
    %v5700 = vand.u32 %v432, 4294901760
    %5701 = vmatmul.f32.gmra.mxu0 %v5700
    %v5702 = vpop.f32.mrf.mxu0
    %v5703 = vadd.f32 %v5542, %v5702
    %v5704 = vand.u32 %v436, 4294901760
    %5705 = vmatmul.f32.gmra.mxu0 %v5704
    %v5706 = vpop.f32.mrf.mxu0
    %v5707 = vadd.f32 %v5546, %v5706
    %v5708 = vand.u32 %v440, 4294901760
    %5709 = vmatmul.f32.gmra.mxu0 %v5708
    %v5710 = vpop.f32.mrf.mxu0
    %v5711 = vadd.f32 %v5550, %v5710
    %v5712 = vand.u32 %v444, 4294901760
    %5713 = vmatmul.f32.gmra.mxu0 %v5712
    %v5714 = vpop.f32.mrf.mxu0
    %v5715 = vadd.f32 %v5554, %v5714
    %v5716 = vand.u32 %v448, 4294901760
    %5717 = vmatmul.f32.gmra.mxu0 %v5716
    %v5718 = vpop.f32.mrf.mxu0
    %v5719 = vadd.f32 %v5558, %v5718
    %v5720 = vand.u32 %v452, 4294901760
    %5721 = vmatmul.f32.gmra.mxu0 %v5720
    %v5722 = vpop.f32.mrf.mxu0
    %v5723 = vadd.f32 %v5562, %v5722
    %v5724 = vand.u32 %v456, 4294901760
    %5725 = vmatmul.f32.gmra.mxu0 %v5724
    %v5726 = vpop.f32.mrf.mxu0
    %v5727 = vadd.f32 %v5566, %v5726
    %v5728 = vand.u32 %v460, 4294901760
    %5729 = vmatmul.f32.gmra.mxu0 %v5728
    %v5730 = vpop.f32.mrf.mxu0
    %v5731 = vadd.f32 %v5570, %v5730
    %v5732 = vand.u32 %v464, 4294901760
    %5733 = vmatmul.f32.gmra.mxu0 %v5732
    %v5734 = vpop.f32.mrf.mxu0
    %v5735 = vadd.f32 %v5574, %v5734
    %v5736 = vand.u32 %v468, 4294901760
    %5737 = vmatmul.f32.gmra.mxu0 %v5736
    %v5738 = vpop.f32.mrf.mxu0
    %v5739 = vadd.f32 %v5578, %v5738
    %v5740 = vand.u32 %v472, 4294901760
    %5741 = vmatmul.f32.gmra.mxu0 %v5740
    %v5742 = vpop.f32.mrf.mxu0
    %v5743 = vadd.f32 %v5582, %v5742
    %v5744 = vand.u32 %v476, 4294901760
    %5745 = vmatmul.f32.gmra.mxu0 %v5744
    %v5746 = vpop.f32.mrf.mxu0
    %v5747 = vadd.f32 %v5586, %v5746
    %v5748 = vand.u32 %v480, 4294901760
    %5749 = vmatmul.f32.gmra.mxu0 %v5748
    %v5750 = vpop.f32.mrf.mxu0
    %v5751 = vadd.f32 %v5590, %v5750
    %v5752 = vand.u32 %v484, 4294901760
    %5753 = vmatmul.f32.gmra.mxu0 %v5752
    %v5754 = vpop.f32.mrf.mxu0
    %v5755 = vadd.f32 %v5594, %v5754
    %v5756 = vand.u32 %v488, 4294901760
    %5757 = vmatmul.f32.gmra.mxu0 %v5756
    %v5758 = vpop.f32.mrf.mxu0
    %v5759 = vadd.f32 %v5598, %v5758
    %v5760 = vand.u32 %v492, 4294901760
    %5761 = vmatmul.f32.gmra.mxu0 %v5760
    %v5762 = vpop.f32.mrf.mxu0
    %v5763 = vadd.f32 %v5602, %v5762
    %v5764 = vand.u32 %v496, 4294901760
    %5765 = vmatmul.f32.gmra.mxu0 %v5764
    %v5766 = vpop.f32.mrf.mxu0
    %v5767 = vadd.f32 %v5606, %v5766
    %v5768 = vand.u32 %v500, 4294901760
    %5769 = vmatmul.f32.gmra.mxu0 %v5768
    %v5770 = vpop.f32.mrf.mxu0
    %v5771 = vadd.f32 %v5610, %v5770
    %v5772 = vand.u32 %v504, 4294901760
    %5773 = vmatmul.f32.gmra.mxu0 %v5772
    %v5774 = vpop.f32.mrf.mxu0
    %v5775 = vadd.f32 %v5614, %v5774
    %v5776 = vand.u32 %v508, 4294901760
    %5777 = vmatmul.f32.gmra.mxu0 %v5776
    %v5778 = vpop.f32.mrf.mxu0
    %v5779 = vadd.f32 %v5618, %v5778
    %v5780 = vand.u32 %v512, 4294901760
    %5781 = vmatmul.f32.gmra.mxu0 %v5780
    %v5782 = vpop.f32.mrf.mxu0
    %v5783 = vadd.f32 %v5622, %v5782
    %v5784 = vand.u32 %v516, 4294901760
    %5785 = vmatmul.f32.gmra.mxu0 %v5784
    %v5786 = vpop.f32.mrf.mxu0
    %v5787 = vadd.f32 %v5626, %v5786
    %v5788 = vand.u32 %v520, 4294901760
    %5789 = vmatmul.f32.gmra.mxu0 %v5788
    %v5790 = vpop.f32.mrf.mxu0
    %v5791 = vadd.f32 %v5630, %v5790
    %v5792 = vand.u32 %v524, 4294901760
    %5793 = vmatmul.f32.gmra.mxu0 %v5792
    %v5794 = vpop.f32.mrf.mxu0
    %v5795 = vadd.f32 %v5634, %v5794
    %v5796 = vand.u32 %v528, 4294901760
    %5797 = vmatmul.f32.gmra.mxu0 %v5796
    %v5798 = vpop.f32.mrf.mxu0
    %v5799 = vadd.f32 %v5638, %v5798
    %v5800 = vand.u32 %v532, 4294901760
    %5801 = vmatmul.f32.gmra.mxu0 %v5800
    %v5802 = vpop.f32.mrf.mxu0
    %v5803 = vadd.f32 %v5642, %v5802
    %v5804 = vand.u32 %v536, 4294901760
    %5805 = vmatmul.f32.gmra.mxu0 %v5804
    %v5806 = vpop.f32.mrf.mxu0
    %v5807 = vadd.f32 %v5646, %v5806
    %v5808 = vand.u32 %v540, 4294901760
    %5809 = vmatmul.f32.gmra.mxu0 %v5808
    %v5810 = vpop.f32.mrf.mxu0
    %v5811 = vadd.f32 %v5650, %v5810
    %v5812 = vand.u32 %v544, 4294901760
    %5813 = vmatmul.f32.gmra.mxu0 %v5812
    %v5814 = vpop.f32.mrf.mxu0
    %v5815 = vadd.f32 %v5654, %v5814
    %5816 = vdwg.mxu0
    %5817 = vst [vmem:[#allocation5] sm:$0xff] %v5691
    %5818 = vst [vmem:[#allocation5 + $0x8] sm:$0xff] %v5695
    %5819 = vst [vmem:[#allocation5 + $0x10] sm:$0xff] %v5699
    %5820 = vst [vmem:[#allocation5 + $0x18] sm:$0xff] %v5703
    %5821 = vst [vmem:[#allocation5 + $0x20] sm:$0xff] %v5707
    %5822 = vst [vmem:[#allocation5 + $0x28] sm:$0xff] %v5711
    %5823 = vst [vmem:[#allocation5 + $0x30] sm:$0xff] %v5715
    %5824 = vst [vmem:[#allocation5 + $0x38] sm:$0xff] %v5719
    %5825 = vst [vmem:[#allocation5 + $0x40] sm:$0xff] %v5723
    %5826 = vst [vmem:[#allocation5 + $0x48] sm:$0xff] %v5727
    %5827 = vst [vmem:[#allocation5 + $0x50] sm:$0xff] %v5731
    %5828 = vst [vmem:[#allocation5 + $0x58] sm:$0xff] %v5735
    %5829 = vst [vmem:[#allocation5 + $0x60] sm:$0xff] %v5739
    %5830 = vst [vmem:[#allocation5 + $0x68] sm:$0xff] %v5743
    %5831 = vst [vmem:[#allocation5 + $0x70] sm:$0xff] %v5747
    %5832 = vst [vmem:[#allocation5 + $0x78] sm:$0xff] %v5751
    %5833 = vst [vmem:[#allocation5 + $0x80] sm:$0xff] %v5755
    %5834 = vst [vmem:[#allocation5 + $0x88] sm:$0xff] %v5759
    %5835 = vst [vmem:[#allocation5 + $0x90] sm:$0xff] %v5763
    %5836 = vst [vmem:[#allocation5 + $0x98] sm:$0xff] %v5767
    %5837 = vst [vmem:[#allocation5 + $0xa0] sm:$0xff] %v5771
    %5838 = vst [vmem:[#allocation5 + $0xa8] sm:$0xff] %v5775
    %5839 = vst [vmem:[#allocation5 + $0xb0] sm:$0xff] %v5779
    %5840 = vst [vmem:[#allocation5 + $0xb8] sm:$0xff] %v5783
    %5841 = vst [vmem:[#allocation5 + $0xc0] sm:$0xff] %v5787
    %5842 = vst [vmem:[#allocation5 + $0xc8] sm:$0xff] %v5791
    %5843 = vst [vmem:[#allocation5 + $0xd0] sm:$0xff] %v5795
    %5844 = vst [vmem:[#allocation5 + $0xd8] sm:$0xff] %v5799
    %5845 = vst [vmem:[#allocation5 + $0xe0] sm:$0xff] %v5803
    %5846 = vst [vmem:[#allocation5 + $0xe8] sm:$0xff] %v5807
    %5847 = vst [vmem:[#allocation5 + $0xf0] sm:$0xff] %v5811
    %5848 = vst [vmem:[#allocation5 + $0xf8] sm:$0xff] %v5815
    // Predicated region
    $region14: #{tpu_custom_call.1} parent=1 // pred_check
      _
    $region15: #{tpu_custom_call.1} parent=1 // pred_check_branch
      %5850 = sbr.rel (0) target = $region17
    $region16: #{tpu_custom_call.1} parent=1 // pred_region
      %5852 = vsyncadd [#allocation4], 0
      %s5853 = sshll.u32 [#allocation5], 4
      %s5854 = int_to_ptr.vmem [resolvable:$true] %s5853
      %s5855 = sshll.u32 %s2, 4
      %s5856 = int_to_ptr.hbm [resolvable:$true] %s5855
      %5861 = dma.vmem_to_hbm [thread:$0]  %s5854, 4096, %s5856, [#allocation4], 128, 128, 8
    $region17: #{tpu_custom_call.1} parent=1 // pred_fallthru
      _
    // Predicated region
    $region18: #{tpu_custom_call.1} parent=1 // pred_check
      _
    $region19: #{tpu_custom_call.1} parent=1 // pred_check_branch
      %5863 = sbr.rel (0) target = $region21
    $region20: #{tpu_custom_call.1} parent=1 // pred_region
      %5865 = dma.done [#allocation4], 4096
    $region21: #{tpu_custom_call.1} parent=1 // pred_fallthru
      _
    %5866 = vsyncpa [#allocation3], 1
    %5867 = vsyncpa [#allocation4], 1

</llo_original>
